<compile_context>
chip_gen: v6e
topology: v6e:2x2x1
jax: 0.10.0
libtpu: 0.0.40
codegen_flags: <defaults>
</compile_context>

<pallas_src>
import functools
import numpy as np
import jax
import jax.numpy as jnp
from jax.experimental import pallas as pl
from jax.experimental.pallas import tpu as pltpu

EPS = 1e-5


# --------------------------------------------------------------------------- #
# Kernel A: polyphase transposed conv (pre-norm) + per-tile partial statistics #
# --------------------------------------------------------------------------- #
def _conv_phases_kernel(x_ref, w_ref, y_ref, stats_ref, *,
                        s, nth, row_tile, Wos, Cinp, Cout, Coutp, roffs, coffs):
    """One (batch, row-tile) grid step.

    x_ref    : (Hpad, Wpad, Cinp)          bf16  whole padded input image
    w_ref    : (s*s, nth*nth*Cinp, Coutp)  bf16  per-phase gathered/flipped taps
    y_ref    : (row_tile*Wos, s*s*Cout)    bf16  pre-norm conv out, phases on lanes
    stats_ref: (2, Coutp)                  f32   per-tile [sum ; sum of squares]
    """
    t = pl.program_id(1)
    rbase = pl.multiple_of(t * row_tile, row_tile)
    M = row_tile * Wos

    ssum = jnp.zeros((1, Coutp), jnp.float32)
    ssq = jnp.zeros((1, Coutp), jnp.float32)

    # De-duplicated tap windows: each unique (dr, dc) window is loaded from the
    # ref exactly once (static col offset, dynamic row offset) and reused by
    # every (phase, tap) pair that needs it.
    slabs = {}

    def tap(dr, dc):
        if (dr, dc) not in slabs:
            v = x_ref[pl.ds(rbase + dr, row_tile), pl.ds(dc, Wos), :]
            slabs[(dr, dc)] = v.reshape(M, Cinp)
        return slabs[(dr, dc)]

    for ph in range(s):
        for pw in range(s):
            phase = ph * s + pw
            cols = [tap(roffs[ph] + th, coffs[pw] + tw)
                    for th in range(nth) for tw in range(nth)]
            # Cinp is a multiple of 128 -> this concat is pure vreg placement.
            lhs = cols[0] if len(cols) == 1 else jnp.concatenate(cols, axis=-1)
            res = jnp.dot(lhs, w_ref[phase],
                          preferred_element_type=jnp.float32)   # (M, Coutp) f32
            # Stats from the exact f32 result, before the bf16 store.
            ssum = ssum + jnp.sum(res, axis=0, keepdims=True)
            ssq = ssq + jnp.sum(res * res, axis=0, keepdims=True)
            y_ref[:, phase * Cout:(phase + 1) * Cout] = (
                res[:, :Cout].astype(y_ref.dtype))

    stats_ref[0:1, :] = ssum
    stats_ref[1:2, :] = ssq


# --------------------------------------------------------------------------- #
# Kernel B: InstanceNorm (scale/shift precomputed) + ReLU                      #
# --------------------------------------------------------------------------- #
def _norm_relu_kernel(y_ref, sc_ref, sh_ref, o_ref):
    y = y_ref[...].astype(jnp.float32)
    o_ref[...] = jnp.maximum(y * sc_ref[...] + sh_ref[...], 0.0).astype(o_ref.dtype)


# --------------------------------------------------------------------------- #
# VMEM budget / tile selection                                                 #
# --------------------------------------------------------------------------- #
def _pick_row_tile(Hos, Wos, s, nth, Cinp, Cout, Coutp, Hpad, Wpad, n_slab,
                   budget, row_tile=None):
    def est(rt):
        M = rt * Wos
        b = 2 * Hpad * Wpad * Cinp * 2                       # input block (x2 buf)
        b += 2 * (s * s) * (nth * nth) * Cinp * Coutp * 2    # weight slab (x2 buf)
        b += 2 * M * (s * s) * Cout * 2                      # bf16 out block (x2)
        b += 2 * 2 * Coutp * 4                               # stats block
        b += n_slab * M * Cinp * 2                           # deduped tap slabs
        b += M * (nth * nth) * Cinp * 2                      # im2col LHS
        b += 2 * M * Coutp * 4                               # f32 dot result/temps
        return b + (2 << 20)                                 # compiler headroom

    def ok(rt):
        return Hos % rt == 0 and ((rt * Wos) % 8 == 0 or rt == Hos)

    if row_tile is not None:
        assert ok(row_tile), f"row_tile={row_tile} incompatible with Hos/Wos"
        e = est(row_tile)
        assert e <= budget, f"row_tile needs ~{e / 2**20:.1f} MiB > budget"
        return row_tile, e
    for rt in range(Hos, 0, -1):
        if ok(rt) and est(rt) <= budget:
            return rt, est(rt)
    raise ValueError("no row tile fits the VMEM budget; "
                     "TODO(synk): also tile W / input channels for extreme shapes")


# --------------------------------------------------------------------------- #
# Wrapper                                                                      #
# --------------------------------------------------------------------------- #
def conv_block_up(x_nchw, weight, bias=None, *, stride=2, padding=1,
                  compute_dtype=jnp.bfloat16, row_tile=None,
                  vmem_budget_bytes=40 * 1024 * 1024):
    """ConvTranspose2d(stride, padding) -> InstanceNorm2d -> ReLU.

    weight: (Cin, Cout, K, K), PyTorch ConvTranspose2d layout.
    bias:   accepted for API parity but unused — InstanceNorm2d(affine=False)
            subtracts the per-channel mean, cancelling a per-channel bias
            exactly (verified against a reference that keeps the bias).
    """
    del bias
    N, Cin, H, W = x_nchw.shape
    wCin, Cout, K, K2 = weight.shape
    assert K == K2 and wCin == Cin
    s, p = stride, padding
    Ho = (H - 1) * s - 2 * p + K
    Wo = (W - 1) * s - 2 * p + K
    assert K % s == 0 and Ho % s == 0 and Wo % s == 0, \
        "polyphase kernel requires K % stride == 0 and (2*padding) % stride == 0"
    Hos, Wos = Ho // s, Wo // s
    nth = K // s
    pad_full = K - 1 - p

    # --- per-phase tap geometry (static python ints, baked into the kernel) ---
    k0 = [(pad_full - ph) % s for ph in range(s)]             # first valid tap
    d0 = [(ph + k0[ph] - pad_full) // s for ph in range(s)]   # base input offset
    TP = max(0, -min(d0))                                     # top/left zero pad
    BP = max(0, (Hos - 1) + (nth - 1) + max(d0) - (H - 1))    # bottom pad
    RP = max(0, (Wos - 1) + (nth - 1) + max(d0) - (W - 1))    # right pad
    roffs = tuple(d + TP for d in d0)
    coffs = tuple(d + TP for d in d0)
    Hpad, Wpad = H + TP + BP, W + TP + RP

    # Lane-dense padding: used only inside VMEM (LHS/accumulator), never in HBM
    # writeback.
    Cinp = -(-Cin // 128) * 128
    Coutp = -(-Cout // 128) * 128

    n_slab = ((max(roffs) + nth - 1) - min(roffs) + 1) * \
             ((max(coffs) + nth - 1) - min(coffs) + 1)
    row_tile, _est = _pick_row_tile(Hos, Wos, s, nth, Cinp, Cout, Coutp,
                                    Hpad, Wpad, n_slab, vmem_budget_bytes,
                                    row_tile)
    T = Hos // row_tile

    # --- wrapper plumbing: layout, tiny spatial pad, polyphase weight gather --
    x = jnp.transpose(x_nchw, (0, 2, 3, 1)).astype(compute_dtype)   # NCHW->NHWC
    xpad = jnp.pad(x, ((0, 0), (TP, BP), (TP, RP), (0, Cinp - Cin)))

    wflip = weight[:, :, ::-1, ::-1]                                # spatial flip
    tap_idx = np.array([[k0[ph] + t_ * s for t_ in range(nth)] for ph in range(s)])
    wg = wflip[:, :, tap_idx, :][:, :, :, :, tap_idx]     # (Cin,Cout,s,nth,s,nth)
    w_poly = jnp.transpose(wg, (2, 4, 3, 5, 0, 1))        # (ph,pw,th,tw,ci,co)
    w_poly = jnp.pad(w_poly, ((0, 0),) * 4 + ((0, Cinp - Cin), (0, Coutp - Cout)))
    w_poly = w_poly.reshape(s * s, nth * nth * Cinp, Coutp).astype(compute_dtype)

    # ---------------- kernel A: polyphase conv + partial stats ---------------
    kernel_a = functools.partial(
        _conv_phases_kernel, s=s, nth=nth, row_tile=row_tile, Wos=Wos,
        Cinp=Cinp, Cout=Cout, Coutp=Coutp, roffs=roffs, coffs=coffs)
    flops_a = 2 * N * s * s * Hos * Wos * nth * nth * Cin * Cout
    bytes_a = (N * Hpad * Wpad * Cinp * 2
               + s * s * nth * nth * Cinp * Coutp * 2
               + N * Hos * Wos * s * s * Cout * 2
               + N * T * 2 * Coutp * 4)
    pre, stats = pl.pallas_call(
        kernel_a,
        out_shape=(
            jax.ShapeDtypeStruct((N, Hos * Wos, s * s * Cout), compute_dtype),
            jax.ShapeDtypeStruct((N, T, 2, Coutp), jnp.float32),
        ),
        grid_spec=pltpu.PrefetchScalarGridSpec(
            num_scalar_prefetch=0,
            grid=(N, T),
            in_specs=[
                pl.BlockSpec((None, Hpad, Wpad, Cinp), lambda n, t: (n, 0, 0, 0)),
                pl.BlockSpec((s * s, nth * nth * Cinp, Coutp),
                             lambda n, t: (0, 0, 0)),
            ],
            out_specs=[
                pl.BlockSpec((None, row_tile * Wos, s * s * Cout),
                             lambda n, t: (n, t, 0)),
                pl.BlockSpec((None, None, 2, Coutp), lambda n, t: (n, t, 0, 0)),
            ],
        ),
        compiler_params=pltpu.CompilerParams(
            dimension_semantics=("parallel", "parallel"),
            vmem_limit_bytes=int(vmem_budget_bytes)),
        cost_estimate=pl.CostEstimate(flops=int(flops_a), transcendentals=0,
                                      bytes_accessed=int(bytes_a)),
    )(xpad, w_poly)

    # ---------- InstanceNorm statistics (tiny (N, Cout) math in JAX) ---------
    st = jnp.sum(stats, axis=1)                       # (N, 2, Coutp) f32
    npix = float(Ho * Wo)
    mean = st[:, 0, :Cout] / npix
    var = jnp.maximum(st[:, 1, :Cout] / npix - mean * mean, 0.0)
    # TODO(synk): single-pass E[x^2]-mean^2 can cancel badly if activations ever
    # carry a large DC component; switch to a shifted two-pass if that matters.
    scale = jax.lax.rsqrt(var + EPS)                  # (N, Cout) f32
    shift = -mean * scale
    scale_p = jnp.tile(scale, (1, s * s)).reshape(N, 1, s * s * Cout)
    shift_p = jnp.tile(shift, (1, s * s)).reshape(N, 1, s * s * Cout)

    # ---------------- kernel B: normalize + ReLU (tiny follow-up) ------------
    flops_b = 2 * N * Hos * Wos * s * s * Cout
    bytes_b = 2 * N * Hos * Wos * s * s * Cout * 2 + 2 * N * s * s * Cout * 4
    out = pl.pallas_call(
        _norm_relu_kernel,
        out_shape=jax.ShapeDtypeStruct((N, Hos * Wos, s * s * Cout), compute_dtype),
        grid_spec=pltpu.PrefetchScalarGridSpec(
            num_scalar_prefetch=0,
            grid=(N, T),
            in_specs=[
                pl.BlockSpec((None, row_tile * Wos, s * s * Cout),
                             lambda n, t: (n, t, 0)),
                pl.BlockSpec((None, 1, s * s * Cout), lambda n, t: (n, 0, 0)),
                pl.BlockSpec((None, 1, s * s * Cout), lambda n, t: (n, 0, 0)),
            ],
            out_specs=pl.BlockSpec((None, row_tile * Wos, s * s * Cout),
                                   lambda n, t: (n, t, 0)),
        ),
        compiler_params=pltpu.CompilerParams(
            dimension_semantics=("parallel", "parallel"),
            vmem_limit_bytes=int(vmem_budget_bytes)),
        cost_estimate=pl.CostEstimate(flops=int(flops_b), transcendentals=0,
                                      bytes_accessed=int(bytes_b)),
    )(pre, scale_p, shift_p)

    # De-interleave the s*s phases and return NCHW.  Pure layout plumbing, done
    # in bf16 on un-padded channels (single fused transpose).
    out = out.reshape(N, Hos, Wos, s, s, Cout)
    out = out.transpose(0, 5, 1, 3, 2, 4).reshape(N, Cout, Ho, Wo)
    return out


# --------------------------------------------------------------------------- #
# Reference + test                                                             #
# --------------------------------------------------------------------------- #
def _reference(x, weight, bias, stride, padding):
    """Independent numpy/f64 reference of ConvTranspose2d + InstanceNorm2d + ReLU."""
    x = np.asarray(x, np.float64)
    weight = np.asarray(weight, np.float64)
    bias = np.asarray(bias, np.float64)
    N, Cin, H, W = x.shape
    _, Cout, K, _ = weight.shape
    s, p = stride, padding
    Ho = (H - 1) * s - 2 * p + K
    Wo = (W - 1) * s - 2 * p + K
    Hf, Wf = (H - 1) * s + K, (W - 1) * s + K
    yf = np.zeros((N, Cout, Hf, Wf), np.float64)
    for n in range(N):
        for i in range(H):
            for j in range(W):
                for c in range(Cin):
                    yf[n, :, i * s:i * s + K, j * s:j * s + K] += x[n, c, i, j] * weight[c]
    y = yf[:, :, p:p + Ho, p:p + Wo] + bias[None, :, None, None]
    mean = y.mean(axis=(2, 3), keepdims=True)
    var = y.var(axis=(2, 3), keepdims=True)          # biased, like InstanceNorm2d
    y = (y - mean) / np.sqrt(var + EPS)
    return np.maximum(y, 0.0)


if __name__ == "__main__":
    def run_case(key, N, Cin, Cout, H, W, K, S, P, row_tile):
        kx, kw, kb = jax.random.split(key, 3)
        x = jax.random.normal(kx, (N, Cin, H, W), jnp.float32)
        weight = 0.1 * jax.random.normal(kw, (Cin, Cout, K, K), jnp.float32)
        bias = 0.1 * jax.random.normal(kb, (Cout,), jnp.float32)

        out = conv_block_up(x, weight, bias, stride=S, padding=P, row_tile=row_tile)
        out = jax.block_until_ready(out)

        # The kernel computes in bf16 (f32 accumulation / f32 stats) and stores
        # bf16, so compare against an f64 reference fed the same bf16-rounded
        # operands, with a bf16-level tolerance.  The reference keeps the conv
        # bias — confirming that InstanceNorm cancels it exactly.
        x_r = np.asarray(x.astype(jnp.bfloat16).astype(jnp.float32))
        w_r = np.asarray(weight.astype(jnp.bfloat16).astype(jnp.float32))
        ref = _reference(x_r, w_r, np.asarray(bias), S, P)
        got = np.asarray(out.astype(jnp.float32))
        np.testing.assert_allclose(got, ref, atol=3e-2, rtol=3e-2)

    key = jax.random.PRNGKey(0)
    k1, k2 = jax.random.split(key)
    # Canonical 2x upsampler (kernel_size=4, stride=2, padding=1); row_tile=8
    # forces two spatial tiles so the tiled stats path is exercised.
    run_case(k1, N=2, Cin=4, Cout=8, H=16, W=16, K=4, S=2, P=1, row_tile=8)
    # Non-square, N=1, K=6/pad=2 (nth=3), odd channel counts, auto row tile.
    run_case(k2, N=1, Cin=3, Cout=6, H=8, W=12, K=6, S=2, P=2, row_tile=None)
    print("KERNEL_OK")
</pallas_src>

<mosaic_0001>
module attributes {stable_mosaic.version = 11 : i64} {
  func.func @_conv_phases_kernel(%arg0: i32, %arg1: i32, %arg2: memref<1x18x18x128xbf16, #tpu.memory_space<vmem>>, %arg3: memref<4x512x128xbf16, #tpu.memory_space<vmem>>, %arg4: memref<1x128x32xbf16, #tpu.memory_space<vmem>>, %arg5: memref<1x1x2x128xf32, #tpu.memory_space<vmem>>) attributes {dimension_semantics = [#tpu.dimension_semantics<parallel>, #tpu.dimension_semantics<parallel>], iteration_bounds = array<i64: 2, 2>, scalar_prefetch = 0 : i64, scratch_operands = 0 : i64, tpu.core_type = #tpu.core_type<tc>, window_params = [{transform_indices = @transform_0, window_bounds = array<i64: 1, 18, 18, 128>}, {pipeline_mode = #tpu.pipeline_mode<synchronous>, transform_indices = @transform_1, window_bounds = array<i64: 4, 512, 128>}, {transform_indices = @transform_2, window_bounds = array<i64: 1, 128, 32>}, {transform_indices = @transform_3, window_bounds = array<i64: 1, 1, 2, 128>}]} {
    %c8_i32 = arith.constant 8 : i32
    %0 = arith.muli %arg1, %c8_i32 : i32
    %1 = tpu.assume_multiple %0, 8 : i32
    %cst = arith.constant 0.000000e+00 : f32
    %2 = vector.broadcast %cst : f32 to vector<1x128xf32>
    %cst_0 = arith.constant 0.000000e+00 : f32
    %3 = vector.broadcast %cst_0 : f32 to vector<1x128xf32>
    %c0_i32 = arith.constant 0 : i32
    %4 = arith.addi %1, %c0_i32 : i32
    %c0 = arith.constant 0 : index
    %5 = arith.index_cast %4 : i32 to index
    %c0_1 = arith.constant 0 : index
    %c0_2 = arith.constant 0 : index
    %6 = vector.load %arg2[%c0, %5, %c0_1, %c0_2] : memref<1x18x18x128xbf16, #tpu.memory_space<vmem>>, vector<1x8x16x128xbf16>
    %7 = vector.shape_cast %6 : vector<1x8x16x128xbf16> to vector<8x16x128xbf16>
    %8 = vector.shape_cast %7 : vector<8x16x128xbf16> to vector<128x128xbf16>
    %c0_i32_3 = arith.constant 0 : i32
    %9 = arith.addi %1, %c0_i32_3 : i32
    %c0_4 = arith.constant 0 : index
    %10 = arith.index_cast %9 : i32 to index
    %c1 = arith.constant 1 : index
    %c0_5 = arith.constant 0 : index
    %11 = vector.load %arg2[%c0_4, %10, %c1, %c0_5] : memref<1x18x18x128xbf16, #tpu.memory_space<vmem>>, vector<1x8x16x128xbf16>
    %12 = vector.shape_cast %11 : vector<1x8x16x128xbf16> to vector<8x16x128xbf16>
    %13 = vector.shape_cast %12 : vector<8x16x128xbf16> to vector<128x128xbf16>
    %c1_i32 = arith.constant 1 : i32
    %14 = arith.addi %1, %c1_i32 : i32
    %c0_6 = arith.constant 0 : index
    %15 = arith.index_cast %14 : i32 to index
    %c0_7 = arith.constant 0 : index
    %c0_8 = arith.constant 0 : index
    %16 = vector.load %arg2[%c0_6, %15, %c0_7, %c0_8] : memref<1x18x18x128xbf16, #tpu.memory_space<vmem>>, vector<1x8x16x128xbf16>
    %17 = vector.shape_cast %16 : vector<1x8x16x128xbf16> to vector<8x16x128xbf16>
    %18 = vector.shape_cast %17 : vector<8x16x128xbf16> to vector<128x128xbf16>
    %c1_i32_9 = arith.constant 1 : i32
    %19 = arith.addi %1, %c1_i32_9 : i32
    %c0_10 = arith.constant 0 : index
    %20 = arith.index_cast %19 : i32 to index
    %c1_11 = arith.constant 1 : index
    %c0_12 = arith.constant 0 : index
    %21 = vector.load %arg2[%c0_10, %20, %c1_11, %c0_12] : memref<1x18x18x128xbf16, #tpu.memory_space<vmem>>, vector<1x8x16x128xbf16>
    %22 = vector.shape_cast %21 : vector<1x8x16x128xbf16> to vector<8x16x128xbf16>
    %23 = vector.shape_cast %22 : vector<8x16x128xbf16> to vector<128x128xbf16>
    %24 = tpu.concatenate %8, %13, %18, %23 in 1 : vector<128x128xbf16>, vector<128x128xbf16>, vector<128x128xbf16>, vector<128x128xbf16> -> vector<128x512xbf16>
    %c0_13 = arith.constant 0 : index
    %c0_14 = arith.constant 0 : index
    %c0_15 = arith.constant 0 : index
    %25 = vector.load %arg3[%c0_13, %c0_14, %c0_15] : memref<4x512x128xbf16, #tpu.memory_space<vmem>>, vector<1x512x128xbf16>
    %26 = vector.shape_cast %25 : vector<1x512x128xbf16> to vector<512x128xbf16>
    %cst_16 = arith.constant dense<0.000000e+00> : vector<128x128xf32>
    %27 = tpu.matmul %24, %26, %cst_16 {dimension_numbers = #tpu.dot_dimension_numbers<[1], [0], [0], [1], [0, 0, 1, 1], [], []>} : vector<128x512xbf16>, vector<512x128xbf16>, vector<128x128xf32> -> vector<128x128xf32>
    %cst_17 = arith.constant dense<0.000000e+00> : vector<128xf32>
    %28 = vector.multi_reduction <add>, %27, %cst_17 [0] : vector<128x128xf32> to vector<128xf32>
    %29 = vector.shape_cast %28 : vector<128xf32> to vector<1x128xf32>
    %30 = arith.addf %2, %29 : vector<1x128xf32>
    %31 = arith.mulf %27, %27 : vector<128x128xf32>
    %cst_18 = arith.constant dense<0.000000e+00> : vector<128xf32>
    %32 = vector.multi_reduction <add>, %31, %cst_18 [0] : vector<128x128xf32> to vector<128xf32>
    %33 = vector.shape_cast %32 : vector<128xf32> to vector<1x128xf32>
    %34 = arith.addf %3, %33 : vector<1x128xf32>
    %35 = vector.extract_strided_slice %27 {offsets = [0, 0], sizes = [128, 8], strides = [1, 1]} : vector<128x128xf32> to vector<128x8xf32>
    %36 = arith.truncf %35 : vector<128x8xf32> to vector<128x8xbf16>
    %c0_19 = arith.constant 0 : index
    %c0_20 = arith.constant 0 : index
    %c0_21 = arith.constant 0 : index
    %37 = vector.load %arg4[%c0_19, %c0_20, %c0_21] : memref<1x128x32xbf16, #tpu.memory_space<vmem>>, vector<1x128x8xbf16>
    %38 = vector.shape_cast %37 : vector<1x128x8xbf16> to vector<128x8xbf16>
    %39 = vector.shape_cast %36 : vector<128x8xbf16> to vector<1x128x8xbf16>
    tpu.vector_store %arg4[%c0_19, %c0_20, %c0_21], %39 {strides = array<i32>} : memref<1x128x32xbf16, #tpu.memory_space<vmem>>, vector<1x128x8xbf16>,
    %c0_i32_22 = arith.constant 0 : i32
    %40 = arith.addi %1, %c0_i32_22 : i32
    %c0_23 = arith.constant 0 : index
    %41 = arith.index_cast %40 : i32 to index
    %c2 = arith.constant 2 : index
    %c0_24 = arith.constant 0 : index
    %42 = vector.load %arg2[%c0_23, %41, %c2, %c0_24] : memref<1x18x18x128xbf16, #tpu.memory_space<vmem>>, vector<1x8x16x128xbf16>
    %43 = vector.shape_cast %42 : vector<1x8x16x128xbf16> to vector<8x16x128xbf16>
    %44 = vector.shape_cast %43 : vector<8x16x128xbf16> to vector<128x128xbf16>
    %c1_i32_25 = arith.constant 1 : i32
    %45 = arith.addi %1, %c1_i32_25 : i32
    %c0_26 = arith.constant 0 : index
    %46 = arith.index_cast %45 : i32 to index
    %c2_27 = arith.constant 2 : index
    %c0_28 = arith.constant 0 : index
    %47 = vector.load %arg2[%c0_26, %46, %c2_27, %c0_28] : memref<1x18x18x128xbf16, #tpu.memory_space<vmem>>, vector<1x8x16x128xbf16>
    %48 = vector.shape_cast %47 : vector<1x8x16x128xbf16> to vector<8x16x128xbf16>
    %49 = vector.shape_cast %48 : vector<8x16x128xbf16> to vector<128x128xbf16>
    %50 = tpu.concatenate %13, %44, %23, %49 in 1 : vector<128x128xbf16>, vector<128x128xbf16>, vector<128x128xbf16>, vector<128x128xbf16> -> vector<128x512xbf16>
    %c1_29 = arith.constant 1 : index
    %c0_30 = arith.constant 0 : index
    %c0_31 = arith.constant 0 : index
    %51 = vector.load %arg3[%c1_29, %c0_30, %c0_31] : memref<4x512x128xbf16, #tpu.memory_space<vmem>>, vector<1x512x128xbf16>
    %52 = vector.shape_cast %51 : vector<1x512x128xbf16> to vector<512x128xbf16>
    %cst_32 = arith.constant dense<0.000000e+00> : vector<128x128xf32>
    %53 = tpu.matmul %50, %52, %cst_32 {dimension_numbers = #tpu.dot_dimension_numbers<[1], [0], [0], [1], [0, 0, 1, 1], [], []>} : vector<128x512xbf16>, vector<512x128xbf16>, vector<128x128xf32> -> vector<128x128xf32>
    %cst_33 = arith.constant dense<0.000000e+00> : vector<128xf32>
    %54 = vector.multi_reduction <add>, %53, %cst_33 [0] : vector<128x128xf32> to vector<128xf32>
    %55 = vector.shape_cast %54 : vector<128xf32> to vector<1x128xf32>
    %56 = arith.addf %30, %55 : vector<1x128xf32>
    %57 = arith.mulf %53, %53 : vector<128x128xf32>
    %cst_34 = arith.constant dense<0.000000e+00> : vector<128xf32>
    %58 = vector.multi_reduction <add>, %57, %cst_34 [0] : vector<128x128xf32> to vector<128xf32>
    %59 = vector.shape_cast %58 : vector<128xf32> to vector<1x128xf32>
    %60 = arith.addf %34, %59 : vector<1x128xf32>
    %61 = vector.extract_strided_slice %53 {offsets = [0, 0], sizes = [128, 8], strides = [1, 1]} : vector<128x128xf32> to vector<128x8xf32>
    %62 = arith.truncf %61 : vector<128x8xf32> to vector<128x8xbf16>
    %c0_35 = arith.constant 0 : index
    %c0_36 = arith.constant 0 : index
    %c8 = arith.constant 8 : index
    %63 = vector.load %arg4[%c0_35, %c0_36, %c8] : memref<1x128x32xbf16, #tpu.memory_space<vmem>>, vector<1x128x8xbf16>
    %64 = vector.shape_cast %63 : vector<1x128x8xbf16> to vector<128x8xbf16>
    %65 = vector.shape_cast %62 : vector<128x8xbf16> to vector<1x128x8xbf16>
    tpu.vector_store %arg4[%c0_35, %c0_36, %c8], %65 {strides = array<i32>} : memref<1x128x32xbf16, #tpu.memory_space<vmem>>, vector<1x128x8xbf16>,
    %c2_i32 = arith.constant 2 : i32
    %66 = arith.addi %1, %c2_i32 : i32
    %c0_37 = arith.constant 0 : index
    %67 = arith.index_cast %66 : i32 to index
    %c0_38 = arith.constant 0 : index
    %c0_39 = arith.constant 0 : index
    %68 = vector.load %arg2[%c0_37, %67, %c0_38, %c0_39] : memref<1x18x18x128xbf16, #tpu.memory_space<vmem>>, vector<1x8x16x128xbf16>
    %69 = vector.shape_cast %68 : vector<1x8x16x128xbf16> to vector<8x16x128xbf16>
    %70 = vector.shape_cast %69 : vector<8x16x128xbf16> to vector<128x128xbf16>
    %c2_i32_40 = arith.constant 2 : i32
    %71 = arith.addi %1, %c2_i32_40 : i32
    %c0_41 = arith.constant 0 : index
    %72 = arith.index_cast %71 : i32 to index
    %c1_42 = arith.constant 1 : index
    %c0_43 = arith.constant 0 : index
    %73 = vector.load %arg2[%c0_41, %72, %c1_42, %c0_43] : memref<1x18x18x128xbf16, #tpu.memory_space<vmem>>, vector<1x8x16x128xbf16>
    %74 = vector.shape_cast %73 : vector<1x8x16x128xbf16> to vector<8x16x128xbf16>
    %75 = vector.shape_cast %74 : vector<8x16x128xbf16> to vector<128x128xbf16>
    %76 = tpu.concatenate %18, %23, %70, %75 in 1 : vector<128x128xbf16>, vector<128x128xbf16>, vector<128x128xbf16>, vector<128x128xbf16> -> vector<128x512xbf16>
    %c2_44 = arith.constant 2 : index
    %c0_45 = arith.constant 0 : index
    %c0_46 = arith.constant 0 : index
    %77 = vector.load %arg3[%c2_44, %c0_45, %c0_46] : memref<4x512x128xbf16, #tpu.memory_space<vmem>>, vector<1x512x128xbf16>
    %78 = vector.shape_cast %77 : vector<1x512x128xbf16> to vector<512x128xbf16>
    %cst_47 = arith.constant dense<0.000000e+00> : vector<128x128xf32>
    %79 = tpu.matmul %76, %78, %cst_47 {dimension_numbers = #tpu.dot_dimension_numbers<[1], [0], [0], [1], [0, 0, 1, 1], [], []>} : vector<128x512xbf16>, vector<512x128xbf16>, vector<128x128xf32> -> vector<128x128xf32>
    %cst_48 = arith.constant dense<0.000000e+00> : vector<128xf32>
    %80 = vector.multi_reduction <add>, %79, %cst_48 [0] : vector<128x128xf32> to vector<128xf32>
    %81 = vector.shape_cast %80 : vector<128xf32> to vector<1x128xf32>
    %82 = arith.addf %56, %81 : vector<1x128xf32>
    %83 = arith.mulf %79, %79 : vector<128x128xf32>
    %cst_49 = arith.constant dense<0.000000e+00> : vector<128xf32>
    %84 = vector.multi_reduction <add>, %83, %cst_49 [0] : vector<128x128xf32> to vector<128xf32>
    %85 = vector.shape_cast %84 : vector<128xf32> to vector<1x128xf32>
    %86 = arith.addf %60, %85 : vector<1x128xf32>
    %87 = vector.extract_strided_slice %79 {offsets = [0, 0], sizes = [128, 8], strides = [1, 1]} : vector<128x128xf32> to vector<128x8xf32>
    %88 = arith.truncf %87 : vector<128x8xf32> to vector<128x8xbf16>
    %c0_50 = arith.constant 0 : index
    %c0_51 = arith.constant 0 : index
    %c16 = arith.constant 16 : index
    %89 = vector.load %arg4[%c0_50, %c0_51, %c16] : memref<1x128x32xbf16, #tpu.memory_space<vmem>>, vector<1x128x8xbf16>
    %90 = vector.shape_cast %89 : vector<1x128x8xbf16> to vector<128x8xbf16>
    %91 = vector.shape_cast %88 : vector<128x8xbf16> to vector<1x128x8xbf16>
    tpu.vector_store %arg4[%c0_50, %c0_51, %c16], %91 {strides = array<i32>} : memref<1x128x32xbf16, #tpu.memory_space<vmem>>, vector<1x128x8xbf16>,
    %c2_i32_52 = arith.constant 2 : i32
    %92 = arith.addi %1, %c2_i32_52 : i32
    %c0_53 = arith.constant 0 : index
    %93 = arith.index_cast %92 : i32 to index
    %c2_54 = arith.constant 2 : index
    %c0_55 = arith.constant 0 : index
    %94 = vector.load %arg2[%c0_53, %93, %c2_54, %c0_55] : memref<1x18x18x128xbf16, #tpu.memory_space<vmem>>, vector<1x8x16x128xbf16>
    %95 = vector.shape_cast %94 : vector<1x8x16x128xbf16> to vector<8x16x128xbf16>
    %96 = vector.shape_cast %95 : vector<8x16x128xbf16> to vector<128x128xbf16>
    %97 = tpu.concatenate %23, %49, %75, %96 in 1 : vector<128x128xbf16>, vector<128x128xbf16>, vector<128x128xbf16>, vector<128x128xbf16> -> vector<128x512xbf16>
    %c3 = arith.constant 3 : index
    %c0_56 = arith.constant 0 : index
    %c0_57 = arith.constant 0 : index
    %98 = vector.load %arg3[%c3, %c0_56, %c0_57] : memref<4x512x128xbf16, #tpu.memory_space<vmem>>, vector<1x512x128xbf16>
    %99 = vector.shape_cast %98 : vector<1x512x128xbf16> to vector<512x128xbf16>
    %cst_58 = arith.constant dense<0.000000e+00> : vector<128x128xf32>
    %100 = tpu.matmul %97, %99, %cst_58 {dimension_numbers = #tpu.dot_dimension_numbers<[1], [0], [0], [1], [0, 0, 1, 1], [], []>} : vector<128x512xbf16>, vector<512x128xbf16>, vector<128x128xf32> -> vector<128x128xf32>
    %cst_59 = arith.constant dense<0.000000e+00> : vector<128xf32>
    %101 = vector.multi_reduction <add>, %100, %cst_59 [0] : vector<128x128xf32> to vector<128xf32>
    %102 = vector.shape_cast %101 : vector<128xf32> to vector<1x128xf32>
    %103 = arith.addf %82, %102 : vector<1x128xf32>
    %104 = arith.mulf %100, %100 : vector<128x128xf32>
    %cst_60 = arith.constant dense<0.000000e+00> : vector<128xf32>
    %105 = vector.multi_reduction <add>, %104, %cst_60 [0] : vector<128x128xf32> to vector<128xf32>
    %106 = vector.shape_cast %105 : vector<128xf32> to vector<1x128xf32>
    %107 = arith.addf %86, %106 : vector<1x128xf32>
    %108 = vector.extract_strided_slice %100 {offsets = [0, 0], sizes = [128, 8], strides = [1, 1]} : vector<128x128xf32> to vector<128x8xf32>
    %109 = arith.truncf %108 : vector<128x8xf32> to vector<128x8xbf16>
    %c0_61 = arith.constant 0 : index
    %c0_62 = arith.constant 0 : index
    %c24 = arith.constant 24 : index
    %110 = vector.load %arg4[%c0_61, %c0_62, %c24] : memref<1x128x32xbf16, #tpu.memory_space<vmem>>, vector<1x128x8xbf16>
    %111 = vector.shape_cast %110 : vector<1x128x8xbf16> to vector<128x8xbf16>
    %112 = vector.shape_cast %109 : vector<128x8xbf16> to vector<1x128x8xbf16>
    tpu.vector_store %arg4[%c0_61, %c0_62, %c24], %112 {strides = array<i32>} : memref<1x128x32xbf16, #tpu.memory_space<vmem>>, vector<1x128x8xbf16>,
    %c0_63 = arith.constant 0 : index
    %c0_64 = arith.constant 0 : index
    %c0_65 = arith.constant 0 : index
    %c0_66 = arith.constant 0 : index
    %113 = vector.load %arg5[%c0_63, %c0_64, %c0_65, %c0_66] : memref<1x1x2x128xf32, #tpu.memory_space<vmem>>, vector<1x1x1x128xf32>
    %114 = vector.shape_cast %113 : vector<1x1x1x128xf32> to vector<1x128xf32>
    %115 = vector.shape_cast %103 : vector<1x128xf32> to vector<1x1x1x128xf32>
    tpu.vector_store %arg5[%c0_63, %c0_64, %c0_65, %c0_66], %115 {strides = array<i32>} : memref<1x1x2x128xf32, #tpu.memory_space<vmem>>, vector<1x1x1x128xf32>,
    %c0_67 = arith.constant 0 : index
    %c0_68 = arith.constant 0 : index
    %c1_69 = arith.constant 1 : index
    %c0_70 = arith.constant 0 : index
    %116 = vector.load %arg5[%c0_67, %c0_68, %c1_69, %c0_70] : memref<1x1x2x128xf32, #tpu.memory_space<vmem>>, vector<1x1x1x128xf32>
    %117 = vector.shape_cast %116 : vector<1x1x1x128xf32> to vector<1x128xf32>
    %118 = vector.shape_cast %107 : vector<1x128xf32> to vector<1x1x1x128xf32>
    tpu.vector_store %arg5[%c0_67, %c0_68, %c1_69, %c0_70], %118 {strides = array<i32>} : memref<1x1x2x128xf32, #tpu.memory_space<vmem>>, vector<1x1x1x128xf32>,
    return
  }
  func.func @transform_0(%arg0: i32, %arg1: i32) -> (i32, i32, i32, i32) {
    %c0_i32 = arith.constant 0 : i32
    %c0_i32_0 = arith.constant 0 : i32
    %c0_i32_1 = arith.constant 0 : i32
    %c0_i32_2 = arith.constant 0 : i32
    return %arg0, %c0_i32, %c0_i32_0, %c0_i32_1 : i32, i32, i32, i32
  }
  func.func @transform_1(%arg0: i32, %arg1: i32) -> (i32, i32, i32) {
    %c0_i32 = arith.constant 0 : i32
    %c0_i32_0 = arith.constant 0 : i32
    %c0_i32_1 = arith.constant 0 : i32
    %c0_i32_2 = arith.constant 0 : i32
    return %c0_i32, %c0_i32_0, %c0_i32_1 : i32, i32, i32
  }
  func.func @transform_2(%arg0: i32, %arg1: i32) -> (i32, i32, i32) {
    %c0_i32 = arith.constant 0 : i32
    %c0_i32_0 = arith.constant 0 : i32
    return %arg0, %arg1, %c0_i32 : i32, i32, i32
  }
  func.func @transform_3(%arg0: i32, %arg1: i32) -> (i32, i32, i32, i32) {
    %c0_i32 = arith.constant 0 : i32
    %c0_i32_0 = arith.constant 0 : i32
    %c0_i32_1 = arith.constant 0 : i32
    return %arg0, %arg1, %c0_i32, %c0_i32_0 : i32, i32, i32, i32
  }
}

</mosaic_0001>

<llo_original>
// kernel: tpu_custom_call.1
$region0: #{tpu_custom_call.1}
  #allocation0 [shape = 'u32[]', space=smem, size = 0x4, offset = 0x4, fixed_abs, tag = 'smem constant byte address 0x4 - core index']
  #allocation1 [shape = 'u32[144,128]{1,0:T(1,128)}', space=vmem, size = 0x12000, scoped, tag = 'internal scratch']
  %s0 = inlined_call_operand.vmem [shape: bf16[2,18,18,128], index: 0, kind: input, shape index: {}]
  %s1 = inlined_call_operand.hbm [shape: bf16[4,512,128], index: 1, kind: input, shape index: {}]
  %s2 = inlined_call_operand.vmem [shape: bf16[2,256,32], index: 2, kind: output, shape index: {0}]
  %s3 = inlined_call_operand.hbm [shape: f32[2,2,2,128], index: 3, kind: output, shape index: {1}]
  %4 = xla_tuple %s2, %s3
  %s5 = sld [smem:[#allocation0]]
  $region53: #{tpu_custom_call.1} parent=0
    _
  %s7 = ssub.s32 1, %s5
  %s8 = scalar_select 0, %s7, %s5
  $region1: #{tpu_custom_call.1} parent=0
    #allocation2 [shape = 'u8[524288]{0}', space=vmem, size = 0x80000, scoped, tag = 'input window, operand 1, single buffered']
    #allocation3 [shape = 's32[2]{0}', space=sflag, size = 0x8, scoped, tag = 'scoped memory for tpu_custom_call.1']
    #allocation4 [shape = 's32[2]{0}', space=sflag, size = 0x8, scoped, tag = 'scoped memory for tpu_custom_call.1']
    #allocation5 [shape = 'u8[2048]{0}', space=vmem, size = 0x800, scoped, tag = 'output window, operand 1']
    %9 = vsyncpa [#allocation3], 0
    %10 = vsyncpa [#allocation4], 0
    %s11 = scalar_lea.sflag [#allocation4], 1
    %12 = vsyncpa %s11, 0
    loop: start=0, step=1, limit=6
    $region2: #{tpu_custom_call.1} parent=1 // loop_pre_header
      _
    $region3: #{tpu_custom_call.1} parent=1 // loop_header
      %s14 = sphi 0, %s18
      %p15 = scmp.ge.s32.totalorder %s14, 6
      %s21 = sphi 0, %s33
      %s22 = sphi 0, %s29
      %s23 = sphi 0, %s21
      %s24 = sphi 0, %s22
      %s25 = sphi 0, %s23
      %s26 = sphi 0, %s24
      %s36 = sphi 0, %s38
      %s39 = sphi 0, %s36
      %s40 = sphi 0, %s39
      %s56 = sphi 0, %s40
      %s60 = sphi 0, %s60
      %s62 = sphi 0, %s60
      %s63 = sphi 0, %s62
      %s77 = sphi 0, %s63
      %s85 = sphi 0, %s87
      %s88 = sphi 0, %s85
      %s89 = sphi 0, %s88
      %s105 = sphi 0, %s89
      %s113 = sphi 0, %s115
      %s116 = sphi 0, %s113
      %s117 = sphi 0, %s116
      %s133 = sphi 0, %s117
    $region4: #{tpu_custom_call.1} parent=1 // loop_header_branch
      %17 = sbr.rel (%p15) target = $region8
    $region5: #{tpu_custom_call.1} parent=1 // loop_body
      %s19 = ssub.s32 %s14, 1
      %s20 = ssub.s32 %s14, 2
      %s27 = sadd.s32 1, %s22
      %p28 = scmp.ge.s32.totalorder %s27, 2
      %s29 = scalar_select %p28, 0, %s27
      %s30 = sadd.s32 1, %s21
      %s31 = scalar_select %p28, %s30, %s21
      %p32 = scmp.ge.s32.totalorder %s31, 2
      %s33 = scalar_select %p32, 0, %s31
      %s34 = ssub.s32 %s21, %s33
      %p35 = scmp.eq.s32.totalorder %s34, 0
      %s37 = sadd.s32 %s36, 1
      %s38 = scalar_select %p35, %s36, %s37
      %p41 = pneg %p35
      %p42 = scmp.eq.s32.totalorder %s14, 3
      %p43 = por %p41, %p42
      %p44 = scmp.ne.s32.totalorder %s36, %s39
      %p45 = scmp.eq.s32.totalorder %s14, 0
      %p46 = por %p44, %p45
      %p47 = scmp.ne.s32.totalorder %s36, %s39
      %p48 = scmp.eq.s32.totalorder %s19, 3
      %p49 = por %p47, %p48
      %p50 = scmp.ne.s32.totalorder %s39, %s40
      %p51 = scmp.eq.s32.totalorder %s19, 0
      %p52 = por %p50, %p51
      %p53 = scmp.ne.s32.totalorder %s39, %s40
      %p54 = scmp.eq.s32.totalorder %s20, 3
      %p55 = por %p53, %p54
      %p57 = scmp.ne.s32.totalorder %s40, %s56
      %p58 = scmp.eq.s32.totalorder %s20, 0
      %p59 = por %p57, %p58
      %s61 = sadd.s32 %s60, 1
      %p64 = scmp.eq.s32.totalorder %s14, 3
      %p65 = scmp.ne.s32.totalorder %s60, %s62
      %p66 = scmp.eq.s32.totalorder %s14, 0
      %p67 = por %p65, %p66
      %p68 = scmp.ne.s32.totalorder %s60, %s62
      %p69 = scmp.eq.s32.totalorder %s19, 3
      %p70 = por %p68, %p69
      %p71 = scmp.ne.s32.totalorder %s62, %s63
      %p72 = scmp.eq.s32.totalorder %s19, 0
      %p73 = por %p71, %p72
      %p74 = scmp.ne.s32.totalorder %s62, %s63
      %p75 = scmp.eq.s32.totalorder %s20, 3
      %p76 = por %p74, %p75
      %p78 = scmp.ne.s32.totalorder %s63, %s77
      %p79 = scmp.eq.s32.totalorder %s20, 0
      %p80 = por %p78, %p79
      %s81 = ssub.s32 %s21, %s33
      %s82 = ssub.s32 %s22, %s29
      %s83 = sor.u32 %s81, %s82
      %p84 = scmp.eq.s32.totalorder %s83, 0
      %s86 = sadd.s32 %s85, 1
      %s87 = scalar_select %p84, %s85, %s86
      %p90 = pneg %p84
      %p91 = scmp.eq.s32.totalorder %s14, 3
      %p92 = por %p90, %p91
      %p93 = scmp.ne.s32.totalorder %s85, %s88
      %p94 = scmp.eq.s32.totalorder %s14, 0
      %p95 = por %p93, %p94
      %p96 = scmp.ne.s32.totalorder %s85, %s88
      %p97 = scmp.eq.s32.totalorder %s19, 3
      %p98 = por %p96, %p97
      %p99 = scmp.ne.s32.totalorder %s88, %s89
      %p100 = scmp.eq.s32.totalorder %s19, 0
      %p101 = por %p99, %p100
      %p102 = scmp.ne.s32.totalorder %s88, %s89
      %p103 = scmp.eq.s32.totalorder %s20, 3
      %p104 = por %p102, %p103
      %p106 = scmp.ne.s32.totalorder %s89, %s105
      %p107 = scmp.eq.s32.totalorder %s20, 0
      %p108 = por %p106, %p107
      %s109 = ssub.s32 %s21, %s33
      %s110 = ssub.s32 %s22, %s29
      %s111 = sor.u32 %s109, %s110
      %p112 = scmp.eq.s32.totalorder %s111, 0
      %s114 = sadd.s32 %s113, 1
      %s115 = scalar_select %p112, %s113, %s114
      %p118 = pneg %p112
      %p119 = scmp.eq.s32.totalorder %s14, 3
      %p120 = por %p118, %p119
      %p121 = scmp.ne.s32.totalorder %s113, %s116
      %p122 = scmp.eq.s32.totalorder %s14, 0
      %p123 = por %p121, %p122
      %p124 = scmp.ne.s32.totalorder %s113, %s116
      %p125 = scmp.eq.s32.totalorder %s19, 3
      %p126 = por %p124, %p125
      %p127 = scmp.ne.s32.totalorder %s116, %s117
      %p128 = scmp.eq.s32.totalorder %s19, 0
      %p129 = por %p127, %p128
      %p130 = scmp.ne.s32.totalorder %s116, %s117
      %p131 = scmp.eq.s32.totalorder %s20, 3
      %p132 = por %p130, %p131
      %p134 = scmp.ne.s32.totalorder %s117, %s133
      %p135 = scmp.eq.s32.totalorder %s20, 0
      %p136 = por %p134, %p135
      %p137 = scmp.le.s32.totalorder 1, %s14
      %p138 = scmp.lt.s32.totalorder %s14, 5
      %p139 = pnand %p137, %p138
      %p140 = pneg %p139
      // Predicated region
      $region9: #{tpu_custom_call.1} parent=5 // pred_check
        _
      $region10: #{tpu_custom_call.1} parent=5 // pred_check_branch
        %142 = sbr.rel (%p139) target = $region12
      $region11: #{tpu_custom_call.1} parent=5 // pred_region
        %s143 = ssub.s32 %s14, 1
        // Predicated region
        $region13: #{tpu_custom_call.1} parent=11 // pred_check
          %p144 = pneg %p73
        $region14: #{tpu_custom_call.1} parent=11 // pred_check_branch
          %146 = sbr.rel (%p144) target = $region16
        $region15: #{tpu_custom_call.1} parent=11 // pred_region
          %s148 = ssub.s32 16384, 16384
          %149 = vsyncadd [#allocation3], %s148
          %s150 = sshll.u32 [#allocation2], 4
          %s151 = int_to_ptr.vmem [resolvable:$true] %s150
          %156 = dma.hbm_to_vmem [thread:$0]  %s1, 16384, %s151, [#allocation3], 64, 64, 4
        $region16: #{tpu_custom_call.1} parent=11 // pred_fallthru
          _
      $region12: #{tpu_custom_call.1} parent=5 // pred_fallthru
        _
      %p157 = scmp.lt.s32.totalorder %s14, 4
      // Predicated region
      $region17: #{tpu_custom_call.1} parent=5 // pred_check
        %p158 = pneg %p157
      $region18: #{tpu_custom_call.1} parent=5 // pred_check_branch
        %160 = sbr.rel (%p158) target = $region20
      $region19: #{tpu_custom_call.1} parent=5 // pred_region
        // Predicated region
        $region21: #{tpu_custom_call.1} parent=19 // pred_check
          %p161 = pneg %p46
        $region22: #{tpu_custom_call.1} parent=19 // pred_check_branch
          %163 = sbr.rel (%p161) target = $region24
        $region23: #{tpu_custom_call.1} parent=19 // pred_region
          %p164 = scmp.lt.s32.totalorder %s21, 1
          %s165 = scalar_select %p164, %s21, 1
          %s166 = smul.addr %s165, 54
          %s167 = smul.addr %s166, 4
          %s168 = scalar_lea.vmem %s0, %s167
        $region24: #{tpu_custom_call.1} parent=19 // pred_fallthru
          _
      $region20: #{tpu_custom_call.1} parent=5 // pred_fallthru
        _
      %p169 = scmp.le.s32.totalorder 1, %s14
      %p170 = scmp.lt.s32.totalorder %s14, 5
      %p171 = pnand %p169, %p170
      %p172 = pneg %p171
      // Predicated region
      $region25: #{tpu_custom_call.1} parent=5 // pred_check
        _
      $region26: #{tpu_custom_call.1} parent=5 // pred_check_branch
        %174 = sbr.rel (%p171) target = $region28
      $region27: #{tpu_custom_call.1} parent=5 // pred_region
        %s175 = ssub.s32 %s14, 1
        // Predicated region
        $region29: #{tpu_custom_call.1} parent=27 // pred_check
          %p176 = pneg %p73
        $region30: #{tpu_custom_call.1} parent=27 // pred_check_branch
          %178 = sbr.rel (%p176) target = $region32
        $region31: #{tpu_custom_call.1} parent=27 // pred_region
          %179 = dma.done [#allocation3], 16384
        $region32: #{tpu_custom_call.1} parent=27 // pred_fallthru
          _
        %p180 = scmp.lt.s32.totalorder %s23, 1
        %s181 = scalar_select %p180, %s23, 1
        %s182 = smul.addr %s181, 54
        %s183 = smul.addr %s182, 4
        %s184 = scalar_lea.vmem %s0, %s183
        %p185 = pneg %p52
        %p186 = pneg %p49
        %p187 = pneg %p73
        %p188 = pneg %p70
        %p189 = pneg %p101
        %p190 = pneg %p98
        %s191 = smul.u32 16, %s24
        %p192 = scmp.lt.s32.totalorder %s23, 1
        %s193 = scalar_select %p192, %s23, 1
        %p194 = scmp.lt.s32.totalorder %s191, 31
        %s195 = scalar_select %p194, %s191, 31
        %s196 = smul.addr %s193, 32
        %s197 = sadd.s32 %s195, %s196
        %s198 = smul.addr %s197, 4
        %s199 = scalar_lea.vmem %s2, %s198
        %p200 = pneg %p129
        %p201 = pneg %p126
        %s202 = sand.u32 %s116, 1
        %s203 = scalar_lea.sflag [#allocation4], %s202
        %s204 = sand.u32 %s116, 1
        %s205 = smul.addr %s204, 2
        %s206 = scalar_lea.vmem [#allocation5], %s205
        %p207 = scmp.lt.s32.totalorder %s23, 1
        %s208 = scalar_select %p207, %s23, 1
        %s209 = smul.addr %s208, 54
        %s210 = smul.addr %s209, 4
        %s211 = scalar_lea.vmem %s0, %s210
        %s212 = smul.u32 16, %s24
        %p213 = scmp.lt.s32.totalorder %s23, 1
        %s214 = scalar_select %p213, %s23, 1
        %p215 = scmp.lt.s32.totalorder %s212, 31
        %s216 = scalar_select %p215, %s212, 31
        %s217 = smul.addr %s214, 32
        %s218 = sadd.s32 %s216, %s217
        %s219 = smul.addr %s218, 4
        %s220 = scalar_lea.vmem %s2, %s219
        %s221 = smul.u32 16, %s24
        %s223 = smul.u32 %s24, 8
        %s224 = smul.u32 %s223, 3
        %s225 = smul.addr %s224, 4
        %s226 = scalar_lea.vmem %s211, %s225
        %v227 = vld [vmem:[%s226] sm:$0xf]
        %v228 = vld [vmem:[%s226 + $0x4] sm:$0xf]
        %v229 = vld [vmem:[%s226 + $0xc] sm:$0xf]
        %v230 = vld [vmem:[%s226 + $0x10] sm:$0xf]
        %v231 = vld [vmem:[%s226 + $0x18] sm:$0xf]
        %v232 = vld [vmem:[%s226 + $0x1c] sm:$0xf]
        %v233 = vld [vmem:[%s226 + $0x24] sm:$0xf]
        %v234 = vld [vmem:[%s226 + $0x28] sm:$0xf]
        %v235 = vld [vmem:[%s226 + $0x30] sm:$0xf]
        %v236 = vld [vmem:[%s226 + $0x34] sm:$0xf]
        %v237 = vld [vmem:[%s226 + $0x3c] sm:$0xf]
        %v238 = vld [vmem:[%s226 + $0x40] sm:$0xf]
        %v239 = vld [vmem:[%s226 + $0x48] sm:$0xf]
        %v240 = vld [vmem:[%s226 + $0x4c] sm:$0xf]
        %v241 = vld [vmem:[%s226 + $0x54] sm:$0xf]
        %v242 = vld [vmem:[%s226 + $0x58] sm:$0xf]
        %v243 = vld [vmem:[%s226 + $0x8] sm:$0x1]
        %v244 = vld [vmem:[%s226 + $0x14] sm:$0x1]
        %v245 = vld [vmem:[%s226 + $0x20] sm:$0x1]
        %v246 = vld [vmem:[%s226 + $0x2c] sm:$0x1]
        %v247 = vld [vmem:[%s226 + $0x38] sm:$0x1]
        %v248 = vld [vmem:[%s226 + $0x44] sm:$0x1]
        %v249 = vld [vmem:[%s226 + $0x50] sm:$0x1]
        %v250 = vld [vmem:[%s226 + $0x5c] sm:$0x1]
        %vm251 = vsmask.f32 3328
        %vm252 = vsmask.f32 7440
        %vm253 = vmor %vm251, %vm252
        %v255 = vshrl.u32 %v227, 16
        %v257 = vrot.slane %v255, 4
        %v258 = vshll.u32 %v227, 16
        %v260 = vrot.slane %v258, 5
        %v261 = vor.u32 %v257, %v260
        %v262 = vrot.slane %v261, 4
        %v264 = vshll.u32 %v228, 16
        %v266 = vrot.slane %v264, 5
        %v267 = vsel %vm253, %v262, %v266
        %v268 = vshrl.u32 %v228, 16
        %v270 = vrot.slane %v268, 4
        %v271 = vor.u32 %v270, %v266
        %v272 = vrot.slane %v271, 4
        %v274 = vshll.u32 %v243, 16
        %v276 = vrot.slane %v274, 5
        %v277 = vsel %vm253, %v272, %v276
        %v279 = vshrl.u32 %v229, 16
        %v281 = vrot.slane %v279, 4
        %v282 = vshll.u32 %v229, 16
        %v284 = vrot.slane %v282, 5
        %v285 = vor.u32 %v281, %v284
        %v286 = vrot.slane %v285, 4
        %v288 = vshll.u32 %v230, 16
        %v290 = vrot.slane %v288, 5
        %v291 = vsel %vm253, %v286, %v290
        %v292 = vshrl.u32 %v230, 16
        %v294 = vrot.slane %v292, 4
        %v295 = vor.u32 %v294, %v290
        %v296 = vrot.slane %v295, 4
        %v298 = vshll.u32 %v244, 16
        %v300 = vrot.slane %v298, 5
        %v301 = vsel %vm253, %v296, %v300
        %v303 = vshrl.u32 %v231, 16
        %v305 = vrot.slane %v303, 4
        %v306 = vshll.u32 %v231, 16
        %v308 = vrot.slane %v306, 5
        %v309 = vor.u32 %v305, %v308
        %v310 = vrot.slane %v309, 4
        %v312 = vshll.u32 %v232, 16
        %v314 = vrot.slane %v312, 5
        %v315 = vsel %vm253, %v310, %v314
        %v316 = vshrl.u32 %v232, 16
        %v318 = vrot.slane %v316, 4
        %v319 = vor.u32 %v318, %v314
        %v320 = vrot.slane %v319, 4
        %v322 = vshll.u32 %v245, 16
        %v324 = vrot.slane %v322, 5
        %v325 = vsel %vm253, %v320, %v324
        %v327 = vshrl.u32 %v233, 16
        %v329 = vrot.slane %v327, 4
        %v330 = vshll.u32 %v233, 16
        %v332 = vrot.slane %v330, 5
        %v333 = vor.u32 %v329, %v332
        %v334 = vrot.slane %v333, 4
        %v336 = vshll.u32 %v234, 16
        %v338 = vrot.slane %v336, 5
        %v339 = vsel %vm253, %v334, %v338
        %v340 = vshrl.u32 %v234, 16
        %v342 = vrot.slane %v340, 4
        %v343 = vor.u32 %v342, %v338
        %v344 = vrot.slane %v343, 4
        %v346 = vshll.u32 %v246, 16
        %v348 = vrot.slane %v346, 5
        %v349 = vsel %vm253, %v344, %v348
        %v351 = vshrl.u32 %v235, 16
        %v353 = vrot.slane %v351, 4
        %v354 = vshll.u32 %v235, 16
        %v356 = vrot.slane %v354, 5
        %v357 = vor.u32 %v353, %v356
        %v358 = vrot.slane %v357, 4
        %v360 = vshll.u32 %v236, 16
        %v362 = vrot.slane %v360, 5
        %v363 = vsel %vm253, %v358, %v362
        %v364 = vshrl.u32 %v236, 16
        %v366 = vrot.slane %v364, 4
        %v367 = vor.u32 %v366, %v362
        %v368 = vrot.slane %v367, 4
        %v370 = vshll.u32 %v247, 16
        %v372 = vrot.slane %v370, 5
        %v373 = vsel %vm253, %v368, %v372
        %v375 = vshrl.u32 %v237, 16
        %v377 = vrot.slane %v375, 4
        %v378 = vshll.u32 %v237, 16
        %v380 = vrot.slane %v378, 5
        %v381 = vor.u32 %v377, %v380
        %v382 = vrot.slane %v381, 4
        %v384 = vshll.u32 %v238, 16
        %v386 = vrot.slane %v384, 5
        %v387 = vsel %vm253, %v382, %v386
        %v388 = vshrl.u32 %v238, 16
        %v390 = vrot.slane %v388, 4
        %v391 = vor.u32 %v390, %v386
        %v392 = vrot.slane %v391, 4
        %v394 = vshll.u32 %v248, 16
        %v396 = vrot.slane %v394, 5
        %v397 = vsel %vm253, %v392, %v396
        %v399 = vshrl.u32 %v239, 16
        %v401 = vrot.slane %v399, 4
        %v402 = vshll.u32 %v239, 16
        %v404 = vrot.slane %v402, 5
        %v405 = vor.u32 %v401, %v404
        %v406 = vrot.slane %v405, 4
        %v408 = vshll.u32 %v240, 16
        %v410 = vrot.slane %v408, 5
        %v411 = vsel %vm253, %v406, %v410
        %v412 = vshrl.u32 %v240, 16
        %v414 = vrot.slane %v412, 4
        %v415 = vor.u32 %v414, %v410
        %v416 = vrot.slane %v415, 4
        %v418 = vshll.u32 %v249, 16
        %v420 = vrot.slane %v418, 5
        %v421 = vsel %vm253, %v416, %v420
        %v423 = vshrl.u32 %v241, 16
        %v425 = vrot.slane %v423, 4
        %v426 = vshll.u32 %v241, 16
        %v428 = vrot.slane %v426, 5
        %v429 = vor.u32 %v425, %v428
        %v430 = vrot.slane %v429, 4
        %v432 = vshll.u32 %v242, 16
        %v434 = vrot.slane %v432, 5
        %v435 = vsel %vm253, %v430, %v434
        %v436 = vshrl.u32 %v242, 16
        %v438 = vrot.slane %v436, 4
        %v439 = vor.u32 %v438, %v434
        %v440 = vrot.slane %v439, 4
        %v442 = vshll.u32 %v250, 16
        %v444 = vrot.slane %v442, 5
        %v445 = vsel %vm253, %v440, %v444
        %s446 = sadd.s32 %s223, 1
        %s447 = smul.u32 %s446, 3
        %s448 = smul.addr %s447, 4
        %s449 = scalar_lea.vmem %s211, %s448
        %v450 = vld [vmem:[%s449] sm:$0xf]
        %v451 = vld [vmem:[%s449 + $0x4] sm:$0xf]
        %v452 = vld [vmem:[%s449 + $0xc] sm:$0xf]
        %v453 = vld [vmem:[%s449 + $0x10] sm:$0xf]
        %v454 = vld [vmem:[%s449 + $0x18] sm:$0xf]
        %v455 = vld [vmem:[%s449 + $0x1c] sm:$0xf]
        %v456 = vld [vmem:[%s449 + $0x24] sm:$0xf]
        %v457 = vld [vmem:[%s449 + $0x28] sm:$0xf]
        %v458 = vld [vmem:[%s449 + $0x30] sm:$0xf]
        %v459 = vld [vmem:[%s449 + $0x34] sm:$0xf]
        %v460 = vld [vmem:[%s449 + $0x3c] sm:$0xf]
        %v461 = vld [vmem:[%s449 + $0x40] sm:$0xf]
        %v462 = vld [vmem:[%s449 + $0x48] sm:$0xf]
        %v463 = vld [vmem:[%s449 + $0x4c] sm:$0xf]
        %v464 = vld [vmem:[%s449 + $0x54] sm:$0xf]
        %v465 = vld [vmem:[%s449 + $0x58] sm:$0xf]
        %v466 = vld [vmem:[%s449 + $0x8] sm:$0x1]
        %v467 = vld [vmem:[%s449 + $0x14] sm:$0x1]
        %v468 = vld [vmem:[%s449 + $0x20] sm:$0x1]
        %v469 = vld [vmem:[%s449 + $0x2c] sm:$0x1]
        %v470 = vld [vmem:[%s449 + $0x38] sm:$0x1]
        %v471 = vld [vmem:[%s449 + $0x44] sm:$0x1]
        %v472 = vld [vmem:[%s449 + $0x50] sm:$0x1]
        %v473 = vld [vmem:[%s449 + $0x5c] sm:$0x1]
        %v475 = vshrl.u32 %v450, 16
        %v477 = vrot.slane %v475, 4
        %v478 = vshll.u32 %v450, 16
        %v480 = vrot.slane %v478, 5
        %v481 = vor.u32 %v477, %v480
        %v482 = vrot.slane %v481, 4
        %v484 = vshll.u32 %v451, 16
        %v486 = vrot.slane %v484, 5
        %v487 = vsel %vm253, %v482, %v486
        %v488 = vshrl.u32 %v451, 16
        %v490 = vrot.slane %v488, 4
        %v491 = vor.u32 %v490, %v486
        %v492 = vrot.slane %v491, 4
        %v494 = vshll.u32 %v466, 16
        %v496 = vrot.slane %v494, 5
        %v497 = vsel %vm253, %v492, %v496
        %v499 = vshrl.u32 %v452, 16
        %v501 = vrot.slane %v499, 4
        %v502 = vshll.u32 %v452, 16
        %v504 = vrot.slane %v502, 5
        %v505 = vor.u32 %v501, %v504
        %v506 = vrot.slane %v505, 4
        %v508 = vshll.u32 %v453, 16
        %v510 = vrot.slane %v508, 5
        %v511 = vsel %vm253, %v506, %v510
        %v512 = vshrl.u32 %v453, 16
        %v514 = vrot.slane %v512, 4
        %v515 = vor.u32 %v514, %v510
        %v516 = vrot.slane %v515, 4
        %v518 = vshll.u32 %v467, 16
        %v520 = vrot.slane %v518, 5
        %v521 = vsel %vm253, %v516, %v520
        %v523 = vshrl.u32 %v454, 16
        %v525 = vrot.slane %v523, 4
        %v526 = vshll.u32 %v454, 16
        %v528 = vrot.slane %v526, 5
        %v529 = vor.u32 %v525, %v528
        %v530 = vrot.slane %v529, 4
        %v532 = vshll.u32 %v455, 16
        %v534 = vrot.slane %v532, 5
        %v535 = vsel %vm253, %v530, %v534
        %v536 = vshrl.u32 %v455, 16
        %v538 = vrot.slane %v536, 4
        %v539 = vor.u32 %v538, %v534
        %v540 = vrot.slane %v539, 4
        %v542 = vshll.u32 %v468, 16
        %v544 = vrot.slane %v542, 5
        %v545 = vsel %vm253, %v540, %v544
        %v547 = vshrl.u32 %v456, 16
        %v549 = vrot.slane %v547, 4
        %v550 = vshll.u32 %v456, 16
        %v552 = vrot.slane %v550, 5
        %v553 = vor.u32 %v549, %v552
        %v554 = vrot.slane %v553, 4
        %v556 = vshll.u32 %v457, 16
        %v558 = vrot.slane %v556, 5
        %v559 = vsel %vm253, %v554, %v558
        %v560 = vshrl.u32 %v457, 16
        %v562 = vrot.slane %v560, 4
        %v563 = vor.u32 %v562, %v558
        %v564 = vrot.slane %v563, 4
        %v566 = vshll.u32 %v469, 16
        %v568 = vrot.slane %v566, 5
        %v569 = vsel %vm253, %v564, %v568
        %v571 = vshrl.u32 %v458, 16
        %v573 = vrot.slane %v571, 4
        %v574 = vshll.u32 %v458, 16
        %v576 = vrot.slane %v574, 5
        %v577 = vor.u32 %v573, %v576
        %v578 = vrot.slane %v577, 4
        %v580 = vshll.u32 %v459, 16
        %v582 = vrot.slane %v580, 5
        %v583 = vsel %vm253, %v578, %v582
        %v584 = vshrl.u32 %v459, 16
        %v586 = vrot.slane %v584, 4
        %v587 = vor.u32 %v586, %v582
        %v588 = vrot.slane %v587, 4
        %v590 = vshll.u32 %v470, 16
        %v592 = vrot.slane %v590, 5
        %v593 = vsel %vm253, %v588, %v592
        %v595 = vshrl.u32 %v460, 16
        %v597 = vrot.slane %v595, 4
        %v598 = vshll.u32 %v460, 16
        %v600 = vrot.slane %v598, 5
        %v601 = vor.u32 %v597, %v600
        %v602 = vrot.slane %v601, 4
        %v604 = vshll.u32 %v461, 16
        %v606 = vrot.slane %v604, 5
        %v607 = vsel %vm253, %v602, %v606
        %v608 = vshrl.u32 %v461, 16
        %v610 = vrot.slane %v608, 4
        %v611 = vor.u32 %v610, %v606
        %v612 = vrot.slane %v611, 4
        %v614 = vshll.u32 %v471, 16
        %v616 = vrot.slane %v614, 5
        %v617 = vsel %vm253, %v612, %v616
        %v619 = vshrl.u32 %v462, 16
        %v621 = vrot.slane %v619, 4
        %v622 = vshll.u32 %v462, 16
        %v624 = vrot.slane %v622, 5
        %v625 = vor.u32 %v621, %v624
        %v626 = vrot.slane %v625, 4
        %v628 = vshll.u32 %v463, 16
        %v630 = vrot.slane %v628, 5
        %v631 = vsel %vm253, %v626, %v630
        %v632 = vshrl.u32 %v463, 16
        %v634 = vrot.slane %v632, 4
        %v635 = vor.u32 %v634, %v630
        %v636 = vrot.slane %v635, 4
        %v638 = vshll.u32 %v472, 16
        %v640 = vrot.slane %v638, 5
        %v641 = vsel %vm253, %v636, %v640
        %v643 = vshrl.u32 %v464, 16
        %v645 = vrot.slane %v643, 4
        %v646 = vshll.u32 %v464, 16
        %v648 = vrot.slane %v646, 5
        %v649 = vor.u32 %v645, %v648
        %v650 = vrot.slane %v649, 4
        %v652 = vshll.u32 %v465, 16
        %v654 = vrot.slane %v652, 5
        %v655 = vsel %vm253, %v650, %v654
        %v656 = vshrl.u32 %v465, 16
        %v658 = vrot.slane %v656, 4
        %v659 = vor.u32 %v658, %v654
        %v660 = vrot.slane %v659, 4
        %v662 = vshll.u32 %v473, 16
        %v664 = vrot.slane %v662, 5
        %v665 = vsel %vm253, %v660, %v664
        %v682 = vunpack.c.l.b16 %v227
        %v683 = vunpack.c.l.b16 %v228
        %v684 = vunpack.c.l.b16 %v229
        %v685 = vunpack.c.l.b16 %v230
        %v686 = vunpack.c.l.b16 %v231
        %v687 = vunpack.c.l.b16 %v232
        %v688 = vunpack.c.l.b16 %v233
        %v689 = vunpack.c.l.b16 %v234
        %v690 = vunpack.c.l.b16 %v235
        %v691 = vunpack.c.l.b16 %v236
        %v692 = vunpack.c.l.b16 %v237
        %v693 = vunpack.c.l.b16 %v238
        %v694 = vunpack.c.l.b16 %v239
        %v695 = vunpack.c.l.b16 %v240
        %v696 = vunpack.c.l.b16 %v241
        %v697 = vunpack.c.l.b16 %v242
        %v698 = vpack.c.b16 %v683, %v682
        %v699 = vpack.c.b16 %v685, %v684
        %v700 = vpack.c.b16 %v687, %v686
        %v701 = vpack.c.b16 %v689, %v688
        %v702 = vpack.c.b16 %v691, %v690
        %v703 = vpack.c.b16 %v693, %v692
        %v704 = vpack.c.b16 %v695, %v694
        %v705 = vpack.c.b16 %v697, %v696
        %v714 = vunpack.c.l.b16 %v267
        %v715 = vunpack.c.l.b16 %v277
        %v716 = vunpack.c.l.b16 %v291
        %v717 = vunpack.c.l.b16 %v301
        %v718 = vunpack.c.l.b16 %v315
        %v719 = vunpack.c.l.b16 %v325
        %v720 = vunpack.c.l.b16 %v339
        %v721 = vunpack.c.l.b16 %v349
        %v722 = vunpack.c.l.b16 %v363
        %v723 = vunpack.c.l.b16 %v373
        %v724 = vunpack.c.l.b16 %v387
        %v725 = vunpack.c.l.b16 %v397
        %v726 = vunpack.c.l.b16 %v411
        %v727 = vunpack.c.l.b16 %v421
        %v728 = vunpack.c.l.b16 %v435
        %v729 = vunpack.c.l.b16 %v445
        %v730 = vpack.c.b16 %v715, %v714
        %v731 = vpack.c.b16 %v717, %v716
        %v732 = vpack.c.b16 %v719, %v718
        %v733 = vpack.c.b16 %v721, %v720
        %v734 = vpack.c.b16 %v723, %v722
        %v735 = vpack.c.b16 %v725, %v724
        %v736 = vpack.c.b16 %v727, %v726
        %v737 = vpack.c.b16 %v729, %v728
        %v762 = vunpack.c.l.b16 %v450
        %v763 = vunpack.c.l.b16 %v451
        %v764 = vunpack.c.l.b16 %v452
        %v765 = vunpack.c.l.b16 %v453
        %v766 = vunpack.c.l.b16 %v454
        %v767 = vunpack.c.l.b16 %v455
        %v768 = vunpack.c.l.b16 %v456
        %v769 = vunpack.c.l.b16 %v457
        %v770 = vunpack.c.l.b16 %v458
        %v771 = vunpack.c.l.b16 %v459
        %v772 = vunpack.c.l.b16 %v460
        %v773 = vunpack.c.l.b16 %v461
        %v774 = vunpack.c.l.b16 %v462
        %v775 = vunpack.c.l.b16 %v463
        %v776 = vunpack.c.l.b16 %v464
        %v777 = vunpack.c.l.b16 %v465
        %v778 = vpack.c.b16 %v763, %v762
        %v779 = vpack.c.b16 %v765, %v764
        %v780 = vpack.c.b16 %v767, %v766
        %v781 = vpack.c.b16 %v769, %v768
        %v782 = vpack.c.b16 %v771, %v770
        %v783 = vpack.c.b16 %v773, %v772
        %v784 = vpack.c.b16 %v775, %v774
        %v785 = vpack.c.b16 %v777, %v776
        %v794 = vunpack.c.l.b16 %v487
        %v795 = vunpack.c.l.b16 %v497
        %v796 = vunpack.c.l.b16 %v511
        %v797 = vunpack.c.l.b16 %v521
        %v798 = vunpack.c.l.b16 %v535
        %v799 = vunpack.c.l.b16 %v545
        %v800 = vunpack.c.l.b16 %v559
        %v801 = vunpack.c.l.b16 %v569
        %v802 = vunpack.c.l.b16 %v583
        %v803 = vunpack.c.l.b16 %v593
        %v804 = vunpack.c.l.b16 %v607
        %v805 = vunpack.c.l.b16 %v617
        %v806 = vunpack.c.l.b16 %v631
        %v807 = vunpack.c.l.b16 %v641
        %v808 = vunpack.c.l.b16 %v655
        %v809 = vunpack.c.l.b16 %v665
        %v810 = vpack.c.b16 %v795, %v794
        %v811 = vpack.c.b16 %v797, %v796
        %v812 = vpack.c.b16 %v799, %v798
        %v813 = vpack.c.b16 %v801, %v800
        %v814 = vpack.c.b16 %v803, %v802
        %v815 = vpack.c.b16 %v805, %v804
        %v816 = vpack.c.b16 %v807, %v806
        %v817 = vpack.c.b16 %v809, %v808
        %v826 = vld [vmem:[#allocation2] sm:$0xf]
        %v827 = vld [vmem:[#allocation2 + $0x4] sm:$0xf]
        %v828 = vld [vmem:[#allocation2 + $0x8] sm:$0xf]
        %v829 = vld [vmem:[#allocation2 + $0xc] sm:$0xf]
        %v830 = vld [vmem:[#allocation2 + $0x10] sm:$0xf]
        %v831 = vld [vmem:[#allocation2 + $0x14] sm:$0xf]
        %v832 = vld [vmem:[#allocation2 + $0x18] sm:$0xf]
        %v833 = vld [vmem:[#allocation2 + $0x1c] sm:$0xf]
        %v834 = vld [vmem:[#allocation2 + $0x20] sm:$0xf]
        %v835 = vld [vmem:[#allocation2 + $0x24] sm:$0xf]
        %v836 = vld [vmem:[#allocation2 + $0x28] sm:$0xf]
        %v837 = vld [vmem:[#allocation2 + $0x2c] sm:$0xf]
        %v838 = vld [vmem:[#allocation2 + $0x30] sm:$0xf]
        %v839 = vld [vmem:[#allocation2 + $0x34] sm:$0xf]
        %v840 = vld [vmem:[#allocation2 + $0x38] sm:$0xf]
        %v841 = vld [vmem:[#allocation2 + $0x3c] sm:$0xf]
        %v842 = vld [vmem:[#allocation2 + $0x40] sm:$0xf]
        %v843 = vld [vmem:[#allocation2 + $0x44] sm:$0xf]
        %v844 = vld [vmem:[#allocation2 + $0x48] sm:$0xf]
        %v845 = vld [vmem:[#allocation2 + $0x4c] sm:$0xf]
        %v846 = vld [vmem:[#allocation2 + $0x50] sm:$0xf]
        %v847 = vld [vmem:[#allocation2 + $0x54] sm:$0xf]
        %v848 = vld [vmem:[#allocation2 + $0x58] sm:$0xf]
        %v849 = vld [vmem:[#allocation2 + $0x5c] sm:$0xf]
        %v850 = vld [vmem:[#allocation2 + $0x60] sm:$0xf]
        %v851 = vld [vmem:[#allocation2 + $0x64] sm:$0xf]
        %v852 = vld [vmem:[#allocation2 + $0x68] sm:$0xf]
        %v853 = vld [vmem:[#allocation2 + $0x6c] sm:$0xf]
        %v854 = vld [vmem:[#allocation2 + $0x70] sm:$0xf]
        %v855 = vld [vmem:[#allocation2 + $0x74] sm:$0xf]
        %v856 = vld [vmem:[#allocation2 + $0x78] sm:$0xf]
        %v857 = vld [vmem:[#allocation2 + $0x7c] sm:$0xf]
        %v858 = vld [vmem:[#allocation2 + $0x80] sm:$0xf]
        %v859 = vld [vmem:[#allocation2 + $0x84] sm:$0xf]
        %v860 = vld [vmem:[#allocation2 + $0x88] sm:$0xf]
        %v861 = vld [vmem:[#allocation2 + $0x8c] sm:$0xf]
        %v862 = vld [vmem:[#allocation2 + $0x90] sm:$0xf]
        %v863 = vld [vmem:[#allocation2 + $0x94] sm:$0xf]
        %v864 = vld [vmem:[#allocation2 + $0x98] sm:$0xf]
        %v865 = vld [vmem:[#allocation2 + $0x9c] sm:$0xf]
        %v866 = vld [vmem:[#allocation2 + $0xa0] sm:$0xf]
        %v867 = vld [vmem:[#allocation2 + $0xa4] sm:$0xf]
        %v868 = vld [vmem:[#allocation2 + $0xa8] sm:$0xf]
        %v869 = vld [vmem:[#allocation2 + $0xac] sm:$0xf]
        %v870 = vld [vmem:[#allocation2 + $0xb0] sm:$0xf]
        %v871 = vld [vmem:[#allocation2 + $0xb4] sm:$0xf]
        %v872 = vld [vmem:[#allocation2 + $0xb8] sm:$0xf]
        %v873 = vld [vmem:[#allocation2 + $0xbc] sm:$0xf]
        %v874 = vld [vmem:[#allocation2 + $0xc0] sm:$0xf]
        %v875 = vld [vmem:[#allocation2 + $0xc4] sm:$0xf]
        %v876 = vld [vmem:[#allocation2 + $0xc8] sm:$0xf]
        %v877 = vld [vmem:[#allocation2 + $0xcc] sm:$0xf]
        %v878 = vld [vmem:[#allocation2 + $0xd0] sm:$0xf]
        %v879 = vld [vmem:[#allocation2 + $0xd4] sm:$0xf]
        %v880 = vld [vmem:[#allocation2 + $0xd8] sm:$0xf]
        %v881 = vld [vmem:[#allocation2 + $0xdc] sm:$0xf]
        %v882 = vld [vmem:[#allocation2 + $0xe0] sm:$0xf]
        %v883 = vld [vmem:[#allocation2 + $0xe4] sm:$0xf]
        %v884 = vld [vmem:[#allocation2 + $0xe8] sm:$0xf]
        %v885 = vld [vmem:[#allocation2 + $0xec] sm:$0xf]
        %v886 = vld [vmem:[#allocation2 + $0xf0] sm:$0xf]
        %v887 = vld [vmem:[#allocation2 + $0xf4] sm:$0xf]
        %v888 = vld [vmem:[#allocation2 + $0xf8] sm:$0xf]
        %v889 = vld [vmem:[#allocation2 + $0xfc] sm:$0xf]
        %v954 = vunpack.c.l.b16 %v826
        %v955 = vunpack.c.l.b16 %v827
        %v956 = vunpack.c.l.b16 %v828
        %v957 = vunpack.c.l.b16 %v829
        %v958 = vunpack.c.l.b16 %v830
        %v959 = vunpack.c.l.b16 %v831
        %v960 = vunpack.c.l.b16 %v832
        %v961 = vunpack.c.l.b16 %v833
        %v962 = vunpack.c.l.b16 %v834
        %v963 = vunpack.c.l.b16 %v835
        %v964 = vunpack.c.l.b16 %v836
        %v965 = vunpack.c.l.b16 %v837
        %v966 = vunpack.c.l.b16 %v838
        %v967 = vunpack.c.l.b16 %v839
        %v968 = vunpack.c.l.b16 %v840
        %v969 = vunpack.c.l.b16 %v841
        %v970 = vunpack.c.l.b16 %v842
        %v971 = vunpack.c.l.b16 %v843
        %v972 = vunpack.c.l.b16 %v844
        %v973 = vunpack.c.l.b16 %v845
        %v974 = vunpack.c.l.b16 %v846
        %v975 = vunpack.c.l.b16 %v847
        %v976 = vunpack.c.l.b16 %v848
        %v977 = vunpack.c.l.b16 %v849
        %v978 = vunpack.c.l.b16 %v850
        %v979 = vunpack.c.l.b16 %v851
        %v980 = vunpack.c.l.b16 %v852
        %v981 = vunpack.c.l.b16 %v853
        %v982 = vunpack.c.l.b16 %v854
        %v983 = vunpack.c.l.b16 %v855
        %v984 = vunpack.c.l.b16 %v856
        %v985 = vunpack.c.l.b16 %v857
        %v986 = vunpack.c.l.b16 %v858
        %v987 = vunpack.c.l.b16 %v859
        %v988 = vunpack.c.l.b16 %v860
        %v989 = vunpack.c.l.b16 %v861
        %v990 = vunpack.c.l.b16 %v862
        %v991 = vunpack.c.l.b16 %v863
        %v992 = vunpack.c.l.b16 %v864
        %v993 = vunpack.c.l.b16 %v865
        %v994 = vunpack.c.l.b16 %v866
        %v995 = vunpack.c.l.b16 %v867
        %v996 = vunpack.c.l.b16 %v868
        %v997 = vunpack.c.l.b16 %v869
        %v998 = vunpack.c.l.b16 %v870
        %v999 = vunpack.c.l.b16 %v871
        %v1000 = vunpack.c.l.b16 %v872
        %v1001 = vunpack.c.l.b16 %v873
        %v1002 = vunpack.c.l.b16 %v874
        %v1003 = vunpack.c.l.b16 %v875
        %v1004 = vunpack.c.l.b16 %v876
        %v1005 = vunpack.c.l.b16 %v877
        %v1006 = vunpack.c.l.b16 %v878
        %v1007 = vunpack.c.l.b16 %v879
        %v1008 = vunpack.c.l.b16 %v880
        %v1009 = vunpack.c.l.b16 %v881
        %v1010 = vunpack.c.l.b16 %v882
        %v1011 = vunpack.c.l.b16 %v883
        %v1012 = vunpack.c.l.b16 %v884
        %v1013 = vunpack.c.l.b16 %v885
        %v1014 = vunpack.c.l.b16 %v886
        %v1015 = vunpack.c.l.b16 %v887
        %v1016 = vunpack.c.l.b16 %v888
        %v1017 = vunpack.c.l.b16 %v889
        %v1018 = vpack.c.b16 %v955, %v954
        %v1019 = vpack.c.b16 %v957, %v956
        %v1020 = vpack.c.b16 %v959, %v958
        %v1021 = vpack.c.b16 %v961, %v960
        %v1022 = vpack.c.b16 %v963, %v962
        %v1023 = vpack.c.b16 %v965, %v964
        %v1024 = vpack.c.b16 %v967, %v966
        %v1025 = vpack.c.b16 %v969, %v968
        %v1026 = vpack.c.b16 %v971, %v970
        %v1027 = vpack.c.b16 %v973, %v972
        %v1028 = vpack.c.b16 %v975, %v974
        %v1029 = vpack.c.b16 %v977, %v976
        %v1030 = vpack.c.b16 %v979, %v978
        %v1031 = vpack.c.b16 %v981, %v980
        %v1032 = vpack.c.b16 %v983, %v982
        %v1033 = vpack.c.b16 %v985, %v984
        %v1034 = vpack.c.b16 %v987, %v986
        %v1035 = vpack.c.b16 %v989, %v988
        %v1036 = vpack.c.b16 %v991, %v990
        %v1037 = vpack.c.b16 %v993, %v992
        %v1038 = vpack.c.b16 %v995, %v994
        %v1039 = vpack.c.b16 %v997, %v996
        %v1040 = vpack.c.b16 %v999, %v998
        %v1041 = vpack.c.b16 %v1001, %v1000
        %v1042 = vpack.c.b16 %v1003, %v1002
        %v1043 = vpack.c.b16 %v1005, %v1004
        %v1044 = vpack.c.b16 %v1007, %v1006
        %v1045 = vpack.c.b16 %v1009, %v1008
        %v1046 = vpack.c.b16 %v1011, %v1010
        %v1047 = vpack.c.b16 %v1013, %v1012
        %v1048 = vpack.c.b16 %v1015, %v1014
        %v1049 = vpack.c.b16 %v1017, %v1016
        %1082 = vmatprep.subr.bf16.mxu0 0
        %1083 = vmatpush1.bf16.msra.mxu0 %v1025
        %1084 = vmatprep.subr.bf16.mxu0 0
        %1085 = vmatpush1.bf16.msra.mxu0 %v1024
        %1086 = vmatprep.subr.bf16.mxu0 0
        %1087 = vmatpush1.bf16.msra.mxu0 %v1023
        %1088 = vmatprep.subr.bf16.mxu0 0
        %1089 = vmatpush1.bf16.msra.mxu0 %v1022
        %1090 = vmatprep.subr.bf16.mxu0 0
        %1091 = vmatpush1.bf16.msra.mxu0 %v1021
        %1092 = vmatprep.subr.bf16.mxu0 0
        %1093 = vmatpush1.bf16.msra.mxu0 %v1020
        %1094 = vmatprep.subr.bf16.mxu0 0
        %1095 = vmatpush1.bf16.msra.mxu0 %v1019
        %1096 = vmatprep.subr.bf16.mxu0 0
        %1097 = vmatpush1.bf16.msra.mxu0 %v1018
        %1098 = vmatprep.subr.bf16.mxu0 0
        %1099 = vmatpush2.bf16.msra.mxu0 %v1033
        %1100 = vmatprep.subr.bf16.mxu0 0
        %1101 = vmatpush2.bf16.msra.mxu0 %v1032
        %1102 = vmatprep.subr.bf16.mxu0 0
        %1103 = vmatpush2.bf16.msra.mxu0 %v1031
        %1104 = vmatprep.subr.bf16.mxu0 0
        %1105 = vmatpush2.bf16.msra.mxu0 %v1030
        %1106 = vmatprep.subr.bf16.mxu0 0
        %1107 = vmatpush2.bf16.msra.mxu0 %v1029
        %1108 = vmatprep.subr.bf16.mxu0 0
        %1109 = vmatpush2.bf16.msra.mxu0 %v1028
        %1110 = vmatprep.subr.bf16.mxu0 0
        %1111 = vmatpush2.bf16.msra.mxu0 %v1027
        %1112 = vmatprep.subr.bf16.mxu0 0
        %1113 = vmatpush2.bf16.msra.mxu0 %v1026
        %1114 = vmatprep.mubr.bf16.mxu0 %v730
        %1115 = vmatmul.mubr.bf16.gmra.mxu0 %v698
        %v1116 = vpop.f32.mrf.mxu0
        %v1117 = vadd.f32 0.0, %v1116
        %v1118 = vpop.f32.mrf.mxu0
        %v1119 = vpop.f32.mrf.mxu0
        %v1120 = vadd.f32 0.0, %v1119
        %v1121 = vpop.f32.mrf.mxu0
        %1122 = vmatprep.mubr.bf16.mxu0 %v731
        %1123 = vmatmul.mubr.bf16.gmra.mxu0 %v699
        %v1124 = vpop.f32.mrf.mxu0
        %v1125 = vadd.f32 0.0, %v1124
        %v1126 = vpop.f32.mrf.mxu0
        %v1127 = vpop.f32.mrf.mxu0
        %v1128 = vadd.f32 0.0, %v1127
        %v1129 = vpop.f32.mrf.mxu0
        %1130 = vmatprep.mubr.bf16.mxu0 %v732
        %1131 = vmatmul.mubr.bf16.gmra.mxu0 %v700
        %v1132 = vpop.f32.mrf.mxu0
        %v1133 = vadd.f32 0.0, %v1132
        %v1134 = vpop.f32.mrf.mxu0
        %v1135 = vpop.f32.mrf.mxu0
        %v1136 = vadd.f32 0.0, %v1135
        %v1137 = vpop.f32.mrf.mxu0
        %1138 = vmatprep.mubr.bf16.mxu0 %v733
        %1139 = vmatmul.mubr.bf16.gmra.mxu0 %v701
        %v1140 = vpop.f32.mrf.mxu0
        %v1141 = vadd.f32 0.0, %v1140
        %v1142 = vpop.f32.mrf.mxu0
        %v1143 = vpop.f32.mrf.mxu0
        %v1144 = vadd.f32 0.0, %v1143
        %v1145 = vpop.f32.mrf.mxu0
        %1146 = vmatprep.mubr.bf16.mxu0 %v734
        %1147 = vmatmul.mubr.bf16.gmra.mxu0 %v702
        %v1148 = vpop.f32.mrf.mxu0
        %v1149 = vadd.f32 0.0, %v1148
        %v1150 = vpop.f32.mrf.mxu0
        %v1151 = vpop.f32.mrf.mxu0
        %v1152 = vadd.f32 0.0, %v1151
        %v1153 = vpop.f32.mrf.mxu0
        %1154 = vmatprep.mubr.bf16.mxu0 %v735
        %1155 = vmatmul.mubr.bf16.gmra.mxu0 %v703
        %v1156 = vpop.f32.mrf.mxu0
        %v1157 = vadd.f32 0.0, %v1156
        %v1158 = vpop.f32.mrf.mxu0
        %v1159 = vpop.f32.mrf.mxu0
        %v1160 = vadd.f32 0.0, %v1159
        %v1161 = vpop.f32.mrf.mxu0
        %1162 = vmatprep.mubr.bf16.mxu0 %v736
        %1163 = vmatmul.mubr.bf16.gmra.mxu0 %v704
        %v1164 = vpop.f32.mrf.mxu0
        %v1165 = vadd.f32 0.0, %v1164
        %v1166 = vpop.f32.mrf.mxu0
        %v1167 = vpop.f32.mrf.mxu0
        %v1168 = vadd.f32 0.0, %v1167
        %v1169 = vpop.f32.mrf.mxu0
        %1170 = vmatprep.mubr.bf16.mxu0 %v737
        %1171 = vmatmul.mubr.bf16.gmra.mxu0 %v705
        %v1172 = vpop.f32.mrf.mxu0
        %v1173 = vadd.f32 0.0, %v1172
        %v1174 = vpop.f32.mrf.mxu0
        %v1175 = vpop.f32.mrf.mxu0
        %v1176 = vadd.f32 0.0, %v1175
        %v1177 = vpop.f32.mrf.mxu0
        %1178 = vdwg.mxu0
        %1179 = vmatprep.subr.bf16.mxu0 0
        %1180 = vmatpush1.bf16.msra.mxu0 %v1041
        %1181 = vmatprep.subr.bf16.mxu0 0
        %1182 = vmatpush1.bf16.msra.mxu0 %v1040
        %1183 = vmatprep.subr.bf16.mxu0 0
        %1184 = vmatpush1.bf16.msra.mxu0 %v1039
        %1185 = vmatprep.subr.bf16.mxu0 0
        %1186 = vmatpush1.bf16.msra.mxu0 %v1038
        %1187 = vmatprep.subr.bf16.mxu0 0
        %1188 = vmatpush1.bf16.msra.mxu0 %v1037
        %1189 = vmatprep.subr.bf16.mxu0 0
        %1190 = vmatpush1.bf16.msra.mxu0 %v1036
        %1191 = vmatprep.subr.bf16.mxu0 0
        %1192 = vmatpush1.bf16.msra.mxu0 %v1035
        %1193 = vmatprep.subr.bf16.mxu0 0
        %1194 = vmatpush1.bf16.msra.mxu0 %v1034
        %1195 = vmatprep.subr.bf16.mxu0 0
        %1196 = vmatpush2.bf16.msra.mxu0 %v1049
        %1197 = vmatprep.subr.bf16.mxu0 0
        %1198 = vmatpush2.bf16.msra.mxu0 %v1048
        %1199 = vmatprep.subr.bf16.mxu0 0
        %1200 = vmatpush2.bf16.msra.mxu0 %v1047
        %1201 = vmatprep.subr.bf16.mxu0 0
        %1202 = vmatpush2.bf16.msra.mxu0 %v1046
        %1203 = vmatprep.subr.bf16.mxu0 0
        %1204 = vmatpush2.bf16.msra.mxu0 %v1045
        %1205 = vmatprep.subr.bf16.mxu0 0
        %1206 = vmatpush2.bf16.msra.mxu0 %v1044
        %1207 = vmatprep.subr.bf16.mxu0 0
        %1208 = vmatpush2.bf16.msra.mxu0 %v1043
        %1209 = vmatprep.subr.bf16.mxu0 0
        %1210 = vmatpush2.bf16.msra.mxu0 %v1042
        %1211 = vmatprep.mubr.bf16.mxu0 %v810
        %1212 = vmatmul.mubr.bf16.gmra.mxu0 %v778
        %v1213 = vpop.f32.mrf.mxu0
        %v1214 = vadd.f32 %v1117, %v1213
        %v1215 = vpop.f32.mrf.mxu0
        %v1216 = vpop.f32.mrf.mxu0
        %v1217 = vadd.f32 %v1120, %v1216
        %v1218 = vpop.f32.mrf.mxu0
        %1219 = vmatprep.mubr.bf16.mxu0 %v811
        %1220 = vmatmul.mubr.bf16.gmra.mxu0 %v779
        %v1221 = vpop.f32.mrf.mxu0
        %v1222 = vadd.f32 %v1125, %v1221
        %v1223 = vpop.f32.mrf.mxu0
        %v1224 = vpop.f32.mrf.mxu0
        %v1225 = vadd.f32 %v1128, %v1224
        %v1226 = vpop.f32.mrf.mxu0
        %1227 = vmatprep.mubr.bf16.mxu0 %v812
        %1228 = vmatmul.mubr.bf16.gmra.mxu0 %v780
        %v1229 = vpop.f32.mrf.mxu0
        %v1230 = vadd.f32 %v1133, %v1229
        %v1231 = vpop.f32.mrf.mxu0
        %v1232 = vpop.f32.mrf.mxu0
        %v1233 = vadd.f32 %v1136, %v1232
        %v1234 = vpop.f32.mrf.mxu0
        %1235 = vmatprep.mubr.bf16.mxu0 %v813
        %1236 = vmatmul.mubr.bf16.gmra.mxu0 %v781
        %v1237 = vpop.f32.mrf.mxu0
        %v1238 = vadd.f32 %v1141, %v1237
        %v1239 = vpop.f32.mrf.mxu0
        %v1240 = vpop.f32.mrf.mxu0
        %v1241 = vadd.f32 %v1144, %v1240
        %v1242 = vpop.f32.mrf.mxu0
        %1243 = vmatprep.mubr.bf16.mxu0 %v814
        %1244 = vmatmul.mubr.bf16.gmra.mxu0 %v782
        %v1245 = vpop.f32.mrf.mxu0
        %v1246 = vadd.f32 %v1149, %v1245
        %v1247 = vpop.f32.mrf.mxu0
        %v1248 = vpop.f32.mrf.mxu0
        %v1249 = vadd.f32 %v1152, %v1248
        %v1250 = vpop.f32.mrf.mxu0
        %1251 = vmatprep.mubr.bf16.mxu0 %v815
        %1252 = vmatmul.mubr.bf16.gmra.mxu0 %v783
        %v1253 = vpop.f32.mrf.mxu0
        %v1254 = vadd.f32 %v1157, %v1253
        %v1255 = vpop.f32.mrf.mxu0
        %v1256 = vpop.f32.mrf.mxu0
        %v1257 = vadd.f32 %v1160, %v1256
        %v1258 = vpop.f32.mrf.mxu0
        %1259 = vmatprep.mubr.bf16.mxu0 %v816
        %1260 = vmatmul.mubr.bf16.gmra.mxu0 %v784
        %v1261 = vpop.f32.mrf.mxu0
        %v1262 = vadd.f32 %v1165, %v1261
        %v1263 = vpop.f32.mrf.mxu0
        %v1264 = vpop.f32.mrf.mxu0
        %v1265 = vadd.f32 %v1168, %v1264
        %v1266 = vpop.f32.mrf.mxu0
        %1267 = vmatprep.mubr.bf16.mxu0 %v817
        %1268 = vmatmul.mubr.bf16.gmra.mxu0 %v785
        %v1269 = vpop.f32.mrf.mxu0
        %v1270 = vadd.f32 %v1173, %v1269
        %v1271 = vpop.f32.mrf.mxu0
        %v1272 = vpop.f32.mrf.mxu0
        %v1273 = vadd.f32 %v1176, %v1272
        %v1274 = vpop.f32.mrf.mxu0
        %1275 = vdwg.mxu0
        %v1276 = vadd.f32 %v1214, %v1217
        %v1277 = vadd.f32 %v1276, %v1222
        %v1278 = vadd.f32 %v1277, %v1225
        %v1279 = vadd.f32 %v1278, %v1230
        %v1280 = vadd.f32 %v1279, %v1233
        %v1281 = vadd.f32 %v1280, %v1238
        %v1282 = vadd.f32 %v1281, %v1241
        %v1283 = vadd.f32 %v1282, %v1246
        %v1284 = vadd.f32 %v1283, %v1249
        %v1285 = vadd.f32 %v1284, %v1254
        %v1286 = vadd.f32 %v1285, %v1257
        %v1287 = vadd.f32 %v1286, %v1262
        %v1288 = vadd.f32 %v1287, %v1265
        %v1289 = vadd.f32 %v1288, %v1270
        %v1290 = vadd.f32 %v1289, %v1273
        %v1291 = vrot.slane %v1290, 4
        %v1292 = vadd.f32 %v1290, %v1291
        %v1293 = vrot.slane %v1292, 2
        %v1294 = vadd.f32 %v1292, %v1293
        %v1295 = vrot.slane %v1294, 1
        %v1296 = vadd.f32 %v1294, %v1295
        %v1297 = vadd.f32 %v1296, 0.0
        %v1298 = vmul.f32 %v1214, %v1214
        %v1299 = vmul.f32 %v1217, %v1217
        %v1300 = vmul.f32 %v1222, %v1222
        %v1301 = vmul.f32 %v1225, %v1225
        %v1302 = vmul.f32 %v1230, %v1230
        %v1303 = vmul.f32 %v1233, %v1233
        %v1304 = vmul.f32 %v1238, %v1238
        %v1305 = vmul.f32 %v1241, %v1241
        %v1306 = vmul.f32 %v1246, %v1246
        %v1307 = vmul.f32 %v1249, %v1249
        %v1308 = vmul.f32 %v1254, %v1254
        %v1309 = vmul.f32 %v1257, %v1257
        %v1310 = vmul.f32 %v1262, %v1262
        %v1311 = vmul.f32 %v1265, %v1265
        %v1312 = vmul.f32 %v1270, %v1270
        %v1313 = vmul.f32 %v1273, %v1273
        %v1314 = vadd.f32 %v1298, %v1299
        %v1315 = vadd.f32 %v1314, %v1300
        %v1316 = vadd.f32 %v1315, %v1301
        %v1317 = vadd.f32 %v1316, %v1302
        %v1318 = vadd.f32 %v1317, %v1303
        %v1319 = vadd.f32 %v1318, %v1304
        %v1320 = vadd.f32 %v1319, %v1305
        %v1321 = vadd.f32 %v1320, %v1306
        %v1322 = vadd.f32 %v1321, %v1307
        %v1323 = vadd.f32 %v1322, %v1308
        %v1324 = vadd.f32 %v1323, %v1309
        %v1325 = vadd.f32 %v1324, %v1310
        %v1326 = vadd.f32 %v1325, %v1311
        %v1327 = vadd.f32 %v1326, %v1312
        %v1328 = vadd.f32 %v1327, %v1313
        %v1329 = vrot.slane %v1328, 4
        %v1330 = vadd.f32 %v1328, %v1329
        %v1331 = vrot.slane %v1330, 2
        %v1332 = vadd.f32 %v1330, %v1331
        %v1333 = vrot.slane %v1332, 1
        %v1334 = vadd.f32 %v1332, %v1333
        %v1335 = vadd.f32 %v1334, 0.0
        %v1336 = vpack.c.bf16 %v1217, %v1214
        %v1337 = vpack.c.bf16 %v1225, %v1222
        %v1338 = vpack.c.bf16 %v1233, %v1230
        %v1339 = vpack.c.bf16 %v1241, %v1238
        %v1340 = vpack.c.bf16 %v1249, %v1246
        %v1341 = vpack.c.bf16 %v1257, %v1254
        %v1342 = vpack.c.bf16 %v1265, %v1262
        %v1343 = vpack.c.bf16 %v1273, %v1270
        %v1352 = vunpack.c.l.b16 %v1336
        %v1353 = vunpack.c.h.b16 %v1336
        %v1354 = vunpack.c.l.b16 %v1337
        %v1355 = vunpack.c.h.b16 %v1337
        %v1356 = vunpack.c.l.b16 %v1338
        %v1357 = vunpack.c.h.b16 %v1338
        %v1358 = vunpack.c.l.b16 %v1339
        %v1359 = vunpack.c.h.b16 %v1339
        %v1360 = vunpack.c.l.b16 %v1340
        %v1361 = vunpack.c.h.b16 %v1340
        %v1362 = vunpack.c.l.b16 %v1341
        %v1363 = vunpack.c.h.b16 %v1341
        %v1364 = vunpack.c.l.b16 %v1342
        %v1365 = vunpack.c.h.b16 %v1342
        %v1366 = vunpack.c.l.b16 %v1343
        %v1367 = vunpack.c.h.b16 %v1343
        %v1368 = vpack.c.b16 %v1352, %v1352
        %v1369 = vpack.c.b16 %v1353, %v1353
        %v1370 = vpack.c.b16 %v1354, %v1354
        %v1371 = vpack.c.b16 %v1355, %v1355
        %v1372 = vpack.c.b16 %v1356, %v1356
        %v1373 = vpack.c.b16 %v1357, %v1357
        %v1374 = vpack.c.b16 %v1358, %v1358
        %v1375 = vpack.c.b16 %v1359, %v1359
        %v1376 = vpack.c.b16 %v1360, %v1360
        %v1377 = vpack.c.b16 %v1361, %v1361
        %v1378 = vpack.c.b16 %v1362, %v1362
        %v1379 = vpack.c.b16 %v1363, %v1363
        %v1380 = vpack.c.b16 %v1364, %v1364
        %v1381 = vpack.c.b16 %v1365, %v1365
        %v1382 = vpack.c.b16 %v1366, %v1366
        %v1383 = vpack.c.b16 %v1367, %v1367
        %vm1400 = vcmask 60416
        %1401 = vst.msk [vmem:[%s220] sm:$0xf] %vm1400, %v1368
        %1402 = vst.msk [vmem:[%s220 + $0x4] sm:$0xf] %vm1400, %v1369
        %1403 = vst.msk [vmem:[%s220 + $0x8] sm:$0xf] %vm1400, %v1370
        %1404 = vst.msk [vmem:[%s220 + $0xc] sm:$0xf] %vm1400, %v1371
        %1405 = vst.msk [vmem:[%s220 + $0x10] sm:$0xf] %vm1400, %v1372
        %1406 = vst.msk [vmem:[%s220 + $0x14] sm:$0xf] %vm1400, %v1373
        %1407 = vst.msk [vmem:[%s220 + $0x18] sm:$0xf] %vm1400, %v1374
        %1408 = vst.msk [vmem:[%s220 + $0x1c] sm:$0xf] %vm1400, %v1375
        %1409 = vst.msk [vmem:[%s220 + $0x20] sm:$0xf] %vm1400, %v1376
        %1410 = vst.msk [vmem:[%s220 + $0x24] sm:$0xf] %vm1400, %v1377
        %1411 = vst.msk [vmem:[%s220 + $0x28] sm:$0xf] %vm1400, %v1378
        %1412 = vst.msk [vmem:[%s220 + $0x2c] sm:$0xf] %vm1400, %v1379
        %1413 = vst.msk [vmem:[%s220 + $0x30] sm:$0xf] %vm1400, %v1380
        %1414 = vst.msk [vmem:[%s220 + $0x34] sm:$0xf] %vm1400, %v1381
        %1415 = vst.msk [vmem:[%s220 + $0x38] sm:$0xf] %vm1400, %v1382
        %1416 = vst.msk [vmem:[%s220 + $0x3c] sm:$0xf] %vm1400, %v1383
        %v1417 = vld [vmem:[%s226] sm:$0xe]
        %v1418 = vld [vmem:[%s226 + $0x4] sm:$0xf]
        %v1419 = vld [vmem:[%s226 + $0x8] sm:$0x1]
        %v1420 = vld [vmem:[%s226 + $0xc] sm:$0xe]
        %v1421 = vld [vmem:[%s226 + $0x10] sm:$0xf]
        %v1422 = vld [vmem:[%s226 + $0x14] sm:$0x1]
        %v1423 = vld [vmem:[%s226 + $0x18] sm:$0xe]
        %v1424 = vld [vmem:[%s226 + $0x1c] sm:$0xf]
        %v1425 = vld [vmem:[%s226 + $0x20] sm:$0x1]
        %v1426 = vld [vmem:[%s226 + $0x24] sm:$0xe]
        %v1427 = vld [vmem:[%s226 + $0x28] sm:$0xf]
        %v1428 = vld [vmem:[%s226 + $0x2c] sm:$0x1]
        %v1429 = vld [vmem:[%s226 + $0x30] sm:$0xe]
        %v1430 = vld [vmem:[%s226 + $0x34] sm:$0xf]
        %v1431 = vld [vmem:[%s226 + $0x38] sm:$0x1]
        %v1432 = vld [vmem:[%s226 + $0x3c] sm:$0xe]
        %v1433 = vld [vmem:[%s226 + $0x40] sm:$0xf]
        %v1434 = vld [vmem:[%s226 + $0x44] sm:$0x1]
        %v1435 = vld [vmem:[%s226 + $0x48] sm:$0xe]
        %v1436 = vld [vmem:[%s226 + $0x4c] sm:$0xf]
        %v1437 = vld [vmem:[%s226 + $0x50] sm:$0x1]
        %v1438 = vld [vmem:[%s226 + $0x54] sm:$0xe]
        %v1439 = vld [vmem:[%s226 + $0x58] sm:$0xf]
        %v1440 = vld [vmem:[%s226 + $0x5c] sm:$0x1]
        %vm1465 = vcmask 1042432
        %vm1466 = vcmask 1046532
        %vm1467 = vmor %vm1465, %vm1466
        %v1468 = vrot.slane %v1417, 5
        %v1469 = vrot.slane %v1468, 4
        %v1470 = vrot.slane %v1418, 5
        %v1471 = vsel %vm1467, %v1469, %v1470
        %v1472 = vrot.slane %v1470, 4
        %v1473 = vrot.slane %v1419, 5
        %v1474 = vsel %vm1467, %v1472, %v1473
        %v1475 = vrot.slane %v1420, 5
        %v1476 = vrot.slane %v1475, 4
        %v1477 = vrot.slane %v1421, 5
        %v1478 = vsel %vm1467, %v1476, %v1477
        %v1479 = vrot.slane %v1477, 4
        %v1480 = vrot.slane %v1422, 5
        %v1481 = vsel %vm1467, %v1479, %v1480
        %v1482 = vrot.slane %v1423, 5
        %v1483 = vrot.slane %v1482, 4
        %v1484 = vrot.slane %v1424, 5
        %v1485 = vsel %vm1467, %v1483, %v1484
        %v1486 = vrot.slane %v1484, 4
        %v1487 = vrot.slane %v1425, 5
        %v1488 = vsel %vm1467, %v1486, %v1487
        %v1489 = vrot.slane %v1426, 5
        %v1490 = vrot.slane %v1489, 4
        %v1491 = vrot.slane %v1427, 5
        %v1492 = vsel %vm1467, %v1490, %v1491
        %v1493 = vrot.slane %v1491, 4
        %v1494 = vrot.slane %v1428, 5
        %v1495 = vsel %vm1467, %v1493, %v1494
        %v1496 = vrot.slane %v1429, 5
        %v1497 = vrot.slane %v1496, 4
        %v1498 = vrot.slane %v1430, 5
        %v1499 = vsel %vm1467, %v1497, %v1498
        %v1500 = vrot.slane %v1498, 4
        %v1501 = vrot.slane %v1431, 5
        %v1502 = vsel %vm1467, %v1500, %v1501
        %v1503 = vrot.slane %v1432, 5
        %v1504 = vrot.slane %v1503, 4
        %v1505 = vrot.slane %v1433, 5
        %v1506 = vsel %vm1467, %v1504, %v1505
        %v1507 = vrot.slane %v1505, 4
        %v1508 = vrot.slane %v1434, 5
        %v1509 = vsel %vm1467, %v1507, %v1508
        %v1510 = vrot.slane %v1435, 5
        %v1511 = vrot.slane %v1510, 4
        %v1512 = vrot.slane %v1436, 5
        %v1513 = vsel %vm1467, %v1511, %v1512
        %v1514 = vrot.slane %v1512, 4
        %v1515 = vrot.slane %v1437, 5
        %v1516 = vsel %vm1467, %v1514, %v1515
        %v1517 = vrot.slane %v1438, 5
        %v1518 = vrot.slane %v1517, 4
        %v1519 = vrot.slane %v1439, 5
        %v1520 = vsel %vm1467, %v1518, %v1519
        %v1521 = vrot.slane %v1519, 4
        %v1522 = vrot.slane %v1440, 5
        %v1523 = vsel %vm1467, %v1521, %v1522
        %v1524 = vld [vmem:[%s449] sm:$0xe]
        %v1525 = vld [vmem:[%s449 + $0x4] sm:$0xf]
        %v1526 = vld [vmem:[%s449 + $0x8] sm:$0x1]
        %v1527 = vld [vmem:[%s449 + $0xc] sm:$0xe]
        %v1528 = vld [vmem:[%s449 + $0x10] sm:$0xf]
        %v1529 = vld [vmem:[%s449 + $0x14] sm:$0x1]
        %v1530 = vld [vmem:[%s449 + $0x18] sm:$0xe]
        %v1531 = vld [vmem:[%s449 + $0x1c] sm:$0xf]
        %v1532 = vld [vmem:[%s449 + $0x20] sm:$0x1]
        %v1533 = vld [vmem:[%s449 + $0x24] sm:$0xe]
        %v1534 = vld [vmem:[%s449 + $0x28] sm:$0xf]
        %v1535 = vld [vmem:[%s449 + $0x2c] sm:$0x1]
        %v1536 = vld [vmem:[%s449 + $0x30] sm:$0xe]
        %v1537 = vld [vmem:[%s449 + $0x34] sm:$0xf]
        %v1538 = vld [vmem:[%s449 + $0x38] sm:$0x1]
        %v1539 = vld [vmem:[%s449 + $0x3c] sm:$0xe]
        %v1540 = vld [vmem:[%s449 + $0x40] sm:$0xf]
        %v1541 = vld [vmem:[%s449 + $0x44] sm:$0x1]
        %v1542 = vld [vmem:[%s449 + $0x48] sm:$0xe]
        %v1543 = vld [vmem:[%s449 + $0x4c] sm:$0xf]
        %v1544 = vld [vmem:[%s449 + $0x50] sm:$0x1]
        %v1545 = vld [vmem:[%s449 + $0x54] sm:$0xe]
        %v1546 = vld [vmem:[%s449 + $0x58] sm:$0xf]
        %v1547 = vld [vmem:[%s449 + $0x5c] sm:$0x1]
        %v1572 = vrot.slane %v1524, 5
        %v1573 = vrot.slane %v1572, 4
        %v1574 = vrot.slane %v1525, 5
        %v1575 = vsel %vm1467, %v1573, %v1574
        %v1576 = vrot.slane %v1574, 4
        %v1577 = vrot.slane %v1526, 5
        %v1578 = vsel %vm1467, %v1576, %v1577
        %v1579 = vrot.slane %v1527, 5
        %v1580 = vrot.slane %v1579, 4
        %v1581 = vrot.slane %v1528, 5
        %v1582 = vsel %vm1467, %v1580, %v1581
        %v1583 = vrot.slane %v1581, 4
        %v1584 = vrot.slane %v1529, 5
        %v1585 = vsel %vm1467, %v1583, %v1584
        %v1586 = vrot.slane %v1530, 5
        %v1587 = vrot.slane %v1586, 4
        %v1588 = vrot.slane %v1531, 5
        %v1589 = vsel %vm1467, %v1587, %v1588
        %v1590 = vrot.slane %v1588, 4
        %v1591 = vrot.slane %v1532, 5
        %v1592 = vsel %vm1467, %v1590, %v1591
        %v1593 = vrot.slane %v1533, 5
        %v1594 = vrot.slane %v1593, 4
        %v1595 = vrot.slane %v1534, 5
        %v1596 = vsel %vm1467, %v1594, %v1595
        %v1597 = vrot.slane %v1595, 4
        %v1598 = vrot.slane %v1535, 5
        %v1599 = vsel %vm1467, %v1597, %v1598
        %v1600 = vrot.slane %v1536, 5
        %v1601 = vrot.slane %v1600, 4
        %v1602 = vrot.slane %v1537, 5
        %v1603 = vsel %vm1467, %v1601, %v1602
        %v1604 = vrot.slane %v1602, 4
        %v1605 = vrot.slane %v1538, 5
        %v1606 = vsel %vm1467, %v1604, %v1605
        %v1607 = vrot.slane %v1539, 5
        %v1608 = vrot.slane %v1607, 4
        %v1609 = vrot.slane %v1540, 5
        %v1610 = vsel %vm1467, %v1608, %v1609
        %v1611 = vrot.slane %v1609, 4
        %v1612 = vrot.slane %v1541, 5
        %v1613 = vsel %vm1467, %v1611, %v1612
        %v1614 = vrot.slane %v1542, 5
        %v1615 = vrot.slane %v1614, 4
        %v1616 = vrot.slane %v1543, 5
        %v1617 = vsel %vm1467, %v1615, %v1616
        %v1618 = vrot.slane %v1616, 4
        %v1619 = vrot.slane %v1544, 5
        %v1620 = vsel %vm1467, %v1618, %v1619
        %v1621 = vrot.slane %v1545, 5
        %v1622 = vrot.slane %v1621, 4
        %v1623 = vrot.slane %v1546, 5
        %v1624 = vsel %vm1467, %v1622, %v1623
        %v1625 = vrot.slane %v1623, 4
        %v1626 = vrot.slane %v1547, 5
        %v1627 = vsel %vm1467, %v1625, %v1626
        %v1628 = vunpack.c.l.b16 %v1471
        %v1629 = vunpack.c.l.b16 %v1474
        %v1630 = vunpack.c.l.b16 %v1478
        %v1631 = vunpack.c.l.b16 %v1481
        %v1632 = vunpack.c.l.b16 %v1485
        %v1633 = vunpack.c.l.b16 %v1488
        %v1634 = vunpack.c.l.b16 %v1492
        %v1635 = vunpack.c.l.b16 %v1495
        %v1636 = vunpack.c.l.b16 %v1499
        %v1637 = vunpack.c.l.b16 %v1502
        %v1638 = vunpack.c.l.b16 %v1506
        %v1639 = vunpack.c.l.b16 %v1509
        %v1640 = vunpack.c.l.b16 %v1513
        %v1641 = vunpack.c.l.b16 %v1516
        %v1642 = vunpack.c.l.b16 %v1520
        %v1643 = vunpack.c.l.b16 %v1523
        %v1644 = vpack.c.b16 %v1629, %v1628
        %v1645 = vpack.c.b16 %v1631, %v1630
        %v1646 = vpack.c.b16 %v1633, %v1632
        %v1647 = vpack.c.b16 %v1635, %v1634
        %v1648 = vpack.c.b16 %v1637, %v1636
        %v1649 = vpack.c.b16 %v1639, %v1638
        %v1650 = vpack.c.b16 %v1641, %v1640
        %v1651 = vpack.c.b16 %v1643, %v1642
        %v1660 = vunpack.c.l.b16 %v1575
        %v1661 = vunpack.c.l.b16 %v1578
        %v1662 = vunpack.c.l.b16 %v1582
        %v1663 = vunpack.c.l.b16 %v1585
        %v1664 = vunpack.c.l.b16 %v1589
        %v1665 = vunpack.c.l.b16 %v1592
        %v1666 = vunpack.c.l.b16 %v1596
        %v1667 = vunpack.c.l.b16 %v1599
        %v1668 = vunpack.c.l.b16 %v1603
        %v1669 = vunpack.c.l.b16 %v1606
        %v1670 = vunpack.c.l.b16 %v1610
        %v1671 = vunpack.c.l.b16 %v1613
        %v1672 = vunpack.c.l.b16 %v1617
        %v1673 = vunpack.c.l.b16 %v1620
        %v1674 = vunpack.c.l.b16 %v1624
        %v1675 = vunpack.c.l.b16 %v1627
        %v1676 = vpack.c.b16 %v1661, %v1660
        %v1677 = vpack.c.b16 %v1663, %v1662
        %v1678 = vpack.c.b16 %v1665, %v1664
        %v1679 = vpack.c.b16 %v1667, %v1666
        %v1680 = vpack.c.b16 %v1669, %v1668
        %v1681 = vpack.c.b16 %v1671, %v1670
        %v1682 = vpack.c.b16 %v1673, %v1672
        %v1683 = vpack.c.b16 %v1675, %v1674
        %s1692 = scalar_lea.vmem [#allocation2], 256
        %v1693 = vld [vmem:[%s1692] sm:$0xf]
        %v1694 = vld [vmem:[%s1692 + $0x4] sm:$0xf]
        %v1695 = vld [vmem:[%s1692 + $0x8] sm:$0xf]
        %v1696 = vld [vmem:[%s1692 + $0xc] sm:$0xf]
        %v1697 = vld [vmem:[%s1692 + $0x10] sm:$0xf]
        %v1698 = vld [vmem:[%s1692 + $0x14] sm:$0xf]
        %v1699 = vld [vmem:[%s1692 + $0x18] sm:$0xf]
        %v1700 = vld [vmem:[%s1692 + $0x1c] sm:$0xf]
        %v1701 = vld [vmem:[%s1692 + $0x20] sm:$0xf]
        %v1702 = vld [vmem:[%s1692 + $0x24] sm:$0xf]
        %v1703 = vld [vmem:[%s1692 + $0x28] sm:$0xf]
        %v1704 = vld [vmem:[%s1692 + $0x2c] sm:$0xf]
        %v1705 = vld [vmem:[%s1692 + $0x30] sm:$0xf]
        %v1706 = vld [vmem:[%s1692 + $0x34] sm:$0xf]
        %v1707 = vld [vmem:[%s1692 + $0x38] sm:$0xf]
        %v1708 = vld [vmem:[%s1692 + $0x3c] sm:$0xf]
        %v1709 = vld [vmem:[%s1692 + $0x40] sm:$0xf]
        %v1710 = vld [vmem:[%s1692 + $0x44] sm:$0xf]
        %v1711 = vld [vmem:[%s1692 + $0x48] sm:$0xf]
        %v1712 = vld [vmem:[%s1692 + $0x4c] sm:$0xf]
        %v1713 = vld [vmem:[%s1692 + $0x50] sm:$0xf]
        %v1714 = vld [vmem:[%s1692 + $0x54] sm:$0xf]
        %v1715 = vld [vmem:[%s1692 + $0x58] sm:$0xf]
        %v1716 = vld [vmem:[%s1692 + $0x5c] sm:$0xf]
        %v1717 = vld [vmem:[%s1692 + $0x60] sm:$0xf]
        %v1718 = vld [vmem:[%s1692 + $0x64] sm:$0xf]
        %v1719 = vld [vmem:[%s1692 + $0x68] sm:$0xf]
        %v1720 = vld [vmem:[%s1692 + $0x6c] sm:$0xf]
        %v1721 = vld [vmem:[%s1692 + $0x70] sm:$0xf]
        %v1722 = vld [vmem:[%s1692 + $0x74] sm:$0xf]
        %v1723 = vld [vmem:[%s1692 + $0x78] sm:$0xf]
        %v1724 = vld [vmem:[%s1692 + $0x7c] sm:$0xf]
        %v1725 = vld [vmem:[%s1692 + $0x80] sm:$0xf]
        %v1726 = vld [vmem:[%s1692 + $0x84] sm:$0xf]
        %v1727 = vld [vmem:[%s1692 + $0x88] sm:$0xf]
        %v1728 = vld [vmem:[%s1692 + $0x8c] sm:$0xf]
        %v1729 = vld [vmem:[%s1692 + $0x90] sm:$0xf]
        %v1730 = vld [vmem:[%s1692 + $0x94] sm:$0xf]
        %v1731 = vld [vmem:[%s1692 + $0x98] sm:$0xf]
        %v1732 = vld [vmem:[%s1692 + $0x9c] sm:$0xf]
        %v1733 = vld [vmem:[%s1692 + $0xa0] sm:$0xf]
        %v1734 = vld [vmem:[%s1692 + $0xa4] sm:$0xf]
        %v1735 = vld [vmem:[%s1692 + $0xa8] sm:$0xf]
        %v1736 = vld [vmem:[%s1692 + $0xac] sm:$0xf]
        %v1737 = vld [vmem:[%s1692 + $0xb0] sm:$0xf]
        %v1738 = vld [vmem:[%s1692 + $0xb4] sm:$0xf]
        %v1739 = vld [vmem:[%s1692 + $0xb8] sm:$0xf]
        %v1740 = vld [vmem:[%s1692 + $0xbc] sm:$0xf]
        %v1741 = vld [vmem:[%s1692 + $0xc0] sm:$0xf]
        %v1742 = vld [vmem:[%s1692 + $0xc4] sm:$0xf]
        %v1743 = vld [vmem:[%s1692 + $0xc8] sm:$0xf]
        %v1744 = vld [vmem:[%s1692 + $0xcc] sm:$0xf]
        %v1745 = vld [vmem:[%s1692 + $0xd0] sm:$0xf]
        %v1746 = vld [vmem:[%s1692 + $0xd4] sm:$0xf]
        %v1747 = vld [vmem:[%s1692 + $0xd8] sm:$0xf]
        %v1748 = vld [vmem:[%s1692 + $0xdc] sm:$0xf]
        %v1749 = vld [vmem:[%s1692 + $0xe0] sm:$0xf]
        %v1750 = vld [vmem:[%s1692 + $0xe4] sm:$0xf]
        %v1751 = vld [vmem:[%s1692 + $0xe8] sm:$0xf]
        %v1752 = vld [vmem:[%s1692 + $0xec] sm:$0xf]
        %v1753 = vld [vmem:[%s1692 + $0xf0] sm:$0xf]
        %v1754 = vld [vmem:[%s1692 + $0xf4] sm:$0xf]
        %v1755 = vld [vmem:[%s1692 + $0xf8] sm:$0xf]
        %v1756 = vld [vmem:[%s1692 + $0xfc] sm:$0xf]
        %v1821 = vunpack.c.l.b16 %v1693
        %v1822 = vunpack.c.l.b16 %v1694
        %v1823 = vunpack.c.l.b16 %v1695
        %v1824 = vunpack.c.l.b16 %v1696
        %v1825 = vunpack.c.l.b16 %v1697
        %v1826 = vunpack.c.l.b16 %v1698
        %v1827 = vunpack.c.l.b16 %v1699
        %v1828 = vunpack.c.l.b16 %v1700
        %v1829 = vunpack.c.l.b16 %v1701
        %v1830 = vunpack.c.l.b16 %v1702
        %v1831 = vunpack.c.l.b16 %v1703
        %v1832 = vunpack.c.l.b16 %v1704
        %v1833 = vunpack.c.l.b16 %v1705
        %v1834 = vunpack.c.l.b16 %v1706
        %v1835 = vunpack.c.l.b16 %v1707
        %v1836 = vunpack.c.l.b16 %v1708
        %v1837 = vunpack.c.l.b16 %v1709
        %v1838 = vunpack.c.l.b16 %v1710
        %v1839 = vunpack.c.l.b16 %v1711
        %v1840 = vunpack.c.l.b16 %v1712
        %v1841 = vunpack.c.l.b16 %v1713
        %v1842 = vunpack.c.l.b16 %v1714
        %v1843 = vunpack.c.l.b16 %v1715
        %v1844 = vunpack.c.l.b16 %v1716
        %v1845 = vunpack.c.l.b16 %v1717
        %v1846 = vunpack.c.l.b16 %v1718
        %v1847 = vunpack.c.l.b16 %v1719
        %v1848 = vunpack.c.l.b16 %v1720
        %v1849 = vunpack.c.l.b16 %v1721
        %v1850 = vunpack.c.l.b16 %v1722
        %v1851 = vunpack.c.l.b16 %v1723
        %v1852 = vunpack.c.l.b16 %v1724
        %v1853 = vunpack.c.l.b16 %v1725
        %v1854 = vunpack.c.l.b16 %v1726
        %v1855 = vunpack.c.l.b16 %v1727
        %v1856 = vunpack.c.l.b16 %v1728
        %v1857 = vunpack.c.l.b16 %v1729
        %v1858 = vunpack.c.l.b16 %v1730
        %v1859 = vunpack.c.l.b16 %v1731
        %v1860 = vunpack.c.l.b16 %v1732
        %v1861 = vunpack.c.l.b16 %v1733
        %v1862 = vunpack.c.l.b16 %v1734
        %v1863 = vunpack.c.l.b16 %v1735
        %v1864 = vunpack.c.l.b16 %v1736
        %v1865 = vunpack.c.l.b16 %v1737
        %v1866 = vunpack.c.l.b16 %v1738
        %v1867 = vunpack.c.l.b16 %v1739
        %v1868 = vunpack.c.l.b16 %v1740
        %v1869 = vunpack.c.l.b16 %v1741
        %v1870 = vunpack.c.l.b16 %v1742
        %v1871 = vunpack.c.l.b16 %v1743
        %v1872 = vunpack.c.l.b16 %v1744
        %v1873 = vunpack.c.l.b16 %v1745
        %v1874 = vunpack.c.l.b16 %v1746
        %v1875 = vunpack.c.l.b16 %v1747
        %v1876 = vunpack.c.l.b16 %v1748
        %v1877 = vunpack.c.l.b16 %v1749
        %v1878 = vunpack.c.l.b16 %v1750
        %v1879 = vunpack.c.l.b16 %v1751
        %v1880 = vunpack.c.l.b16 %v1752
        %v1881 = vunpack.c.l.b16 %v1753
        %v1882 = vunpack.c.l.b16 %v1754
        %v1883 = vunpack.c.l.b16 %v1755
        %v1884 = vunpack.c.l.b16 %v1756
        %v1885 = vpack.c.b16 %v1822, %v1821
        %v1886 = vpack.c.b16 %v1824, %v1823
        %v1887 = vpack.c.b16 %v1826, %v1825
        %v1888 = vpack.c.b16 %v1828, %v1827
        %v1889 = vpack.c.b16 %v1830, %v1829
        %v1890 = vpack.c.b16 %v1832, %v1831
        %v1891 = vpack.c.b16 %v1834, %v1833
        %v1892 = vpack.c.b16 %v1836, %v1835
        %v1893 = vpack.c.b16 %v1838, %v1837
        %v1894 = vpack.c.b16 %v1840, %v1839
        %v1895 = vpack.c.b16 %v1842, %v1841
        %v1896 = vpack.c.b16 %v1844, %v1843
        %v1897 = vpack.c.b16 %v1846, %v1845
        %v1898 = vpack.c.b16 %v1848, %v1847
        %v1899 = vpack.c.b16 %v1850, %v1849
        %v1900 = vpack.c.b16 %v1852, %v1851
        %v1901 = vpack.c.b16 %v1854, %v1853
        %v1902 = vpack.c.b16 %v1856, %v1855
        %v1903 = vpack.c.b16 %v1858, %v1857
        %v1904 = vpack.c.b16 %v1860, %v1859
        %v1905 = vpack.c.b16 %v1862, %v1861
        %v1906 = vpack.c.b16 %v1864, %v1863
        %v1907 = vpack.c.b16 %v1866, %v1865
        %v1908 = vpack.c.b16 %v1868, %v1867
        %v1909 = vpack.c.b16 %v1870, %v1869
        %v1910 = vpack.c.b16 %v1872, %v1871
        %v1911 = vpack.c.b16 %v1874, %v1873
        %v1912 = vpack.c.b16 %v1876, %v1875
        %v1913 = vpack.c.b16 %v1878, %v1877
        %v1914 = vpack.c.b16 %v1880, %v1879
        %v1915 = vpack.c.b16 %v1882, %v1881
        %v1916 = vpack.c.b16 %v1884, %v1883
        %1949 = vmatprep.subr.bf16.mxu0 0
        %1950 = vmatpush1.bf16.msra.mxu0 %v1892
        %1951 = vmatprep.subr.bf16.mxu0 0
        %1952 = vmatpush1.bf16.msra.mxu0 %v1891
        %1953 = vmatprep.subr.bf16.mxu0 0
        %1954 = vmatpush1.bf16.msra.mxu0 %v1890
        %1955 = vmatprep.subr.bf16.mxu0 0
        %1956 = vmatpush1.bf16.msra.mxu0 %v1889
        %1957 = vmatprep.subr.bf16.mxu0 0
        %1958 = vmatpush1.bf16.msra.mxu0 %v1888
        %1959 = vmatprep.subr.bf16.mxu0 0
        %1960 = vmatpush1.bf16.msra.mxu0 %v1887
        %1961 = vmatprep.subr.bf16.mxu0 0
        %1962 = vmatpush1.bf16.msra.mxu0 %v1886
        %1963 = vmatprep.subr.bf16.mxu0 0
        %1964 = vmatpush1.bf16.msra.mxu0 %v1885
        %1965 = vmatprep.subr.bf16.mxu0 0
        %1966 = vmatpush2.bf16.msra.mxu0 %v1900
        %1967 = vmatprep.subr.bf16.mxu0 0
        %1968 = vmatpush2.bf16.msra.mxu0 %v1899
        %1969 = vmatprep.subr.bf16.mxu0 0
        %1970 = vmatpush2.bf16.msra.mxu0 %v1898
        %1971 = vmatprep.subr.bf16.mxu0 0
        %1972 = vmatpush2.bf16.msra.mxu0 %v1897
        %1973 = vmatprep.subr.bf16.mxu0 0
        %1974 = vmatpush2.bf16.msra.mxu0 %v1896
        %1975 = vmatprep.subr.bf16.mxu0 0
        %1976 = vmatpush2.bf16.msra.mxu0 %v1895
        %1977 = vmatprep.subr.bf16.mxu0 0
        %1978 = vmatpush2.bf16.msra.mxu0 %v1894
        %1979 = vmatprep.subr.bf16.mxu0 0
        %1980 = vmatpush2.bf16.msra.mxu0 %v1893
        %1981 = vmatprep.mubr.bf16.mxu0 %v1644
        %1982 = vmatmul.mubr.bf16.gmra.mxu0 %v730
        %v1983 = vpop.f32.mrf.mxu0
        %v1984 = vadd.f32 0.0, %v1983
        %v1985 = vpop.f32.mrf.mxu0
        %v1986 = vpop.f32.mrf.mxu0
        %v1987 = vadd.f32 0.0, %v1986
        %v1988 = vpop.f32.mrf.mxu0
        %1989 = vmatprep.mubr.bf16.mxu0 %v1645
        %1990 = vmatmul.mubr.bf16.gmra.mxu0 %v731
        %v1991 = vpop.f32.mrf.mxu0
        %v1992 = vadd.f32 0.0, %v1991
        %v1993 = vpop.f32.mrf.mxu0
        %v1994 = vpop.f32.mrf.mxu0
        %v1995 = vadd.f32 0.0, %v1994
        %v1996 = vpop.f32.mrf.mxu0
        %1997 = vmatprep.mubr.bf16.mxu0 %v1646
        %1998 = vmatmul.mubr.bf16.gmra.mxu0 %v732
        %v1999 = vpop.f32.mrf.mxu0
        %v2000 = vadd.f32 0.0, %v1999
        %v2001 = vpop.f32.mrf.mxu0
        %v2002 = vpop.f32.mrf.mxu0
        %v2003 = vadd.f32 0.0, %v2002
        %v2004 = vpop.f32.mrf.mxu0
        %2005 = vmatprep.mubr.bf16.mxu0 %v1647
        %2006 = vmatmul.mubr.bf16.gmra.mxu0 %v733
        %v2007 = vpop.f32.mrf.mxu0
        %v2008 = vadd.f32 0.0, %v2007
        %v2009 = vpop.f32.mrf.mxu0
        %v2010 = vpop.f32.mrf.mxu0
        %v2011 = vadd.f32 0.0, %v2010
        %v2012 = vpop.f32.mrf.mxu0
        %2013 = vmatprep.mubr.bf16.mxu0 %v1648
        %2014 = vmatmul.mubr.bf16.gmra.mxu0 %v734
        %v2015 = vpop.f32.mrf.mxu0
        %v2016 = vadd.f32 0.0, %v2015
        %v2017 = vpop.f32.mrf.mxu0
        %v2018 = vpop.f32.mrf.mxu0
        %v2019 = vadd.f32 0.0, %v2018
        %v2020 = vpop.f32.mrf.mxu0
        %2021 = vmatprep.mubr.bf16.mxu0 %v1649
        %2022 = vmatmul.mubr.bf16.gmra.mxu0 %v735
        %v2023 = vpop.f32.mrf.mxu0
        %v2024 = vadd.f32 0.0, %v2023
        %v2025 = vpop.f32.mrf.mxu0
        %v2026 = vpop.f32.mrf.mxu0
        %v2027 = vadd.f32 0.0, %v2026
        %v2028 = vpop.f32.mrf.mxu0
        %2029 = vmatprep.mubr.bf16.mxu0 %v1650
        %2030 = vmatmul.mubr.bf16.gmra.mxu0 %v736
        %v2031 = vpop.f32.mrf.mxu0
        %v2032 = vadd.f32 0.0, %v2031
        %v2033 = vpop.f32.mrf.mxu0
        %v2034 = vpop.f32.mrf.mxu0
        %v2035 = vadd.f32 0.0, %v2034
        %v2036 = vpop.f32.mrf.mxu0
        %2037 = vmatprep.mubr.bf16.mxu0 %v1651
        %2038 = vmatmul.mubr.bf16.gmra.mxu0 %v737
        %v2039 = vpop.f32.mrf.mxu0
        %v2040 = vadd.f32 0.0, %v2039
        %v2041 = vpop.f32.mrf.mxu0
        %v2042 = vpop.f32.mrf.mxu0
        %v2043 = vadd.f32 0.0, %v2042
        %v2044 = vpop.f32.mrf.mxu0
        %2045 = vdwg.mxu0
        %2046 = vmatprep.subr.bf16.mxu0 0
        %2047 = vmatpush1.bf16.msra.mxu0 %v1908
        %2048 = vmatprep.subr.bf16.mxu0 0
        %2049 = vmatpush1.bf16.msra.mxu0 %v1907
        %2050 = vmatprep.subr.bf16.mxu0 0
        %2051 = vmatpush1.bf16.msra.mxu0 %v1906
        %2052 = vmatprep.subr.bf16.mxu0 0
        %2053 = vmatpush1.bf16.msra.mxu0 %v1905
        %2054 = vmatprep.subr.bf16.mxu0 0
        %2055 = vmatpush1.bf16.msra.mxu0 %v1904
        %2056 = vmatprep.subr.bf16.mxu0 0
        %2057 = vmatpush1.bf16.msra.mxu0 %v1903
        %2058 = vmatprep.subr.bf16.mxu0 0
        %2059 = vmatpush1.bf16.msra.mxu0 %v1902
        %2060 = vmatprep.subr.bf16.mxu0 0
        %2061 = vmatpush1.bf16.msra.mxu0 %v1901
        %2062 = vmatprep.subr.bf16.mxu0 0
        %2063 = vmatpush2.bf16.msra.mxu0 %v1916
        %2064 = vmatprep.subr.bf16.mxu0 0
        %2065 = vmatpush2.bf16.msra.mxu0 %v1915
        %2066 = vmatprep.subr.bf16.mxu0 0
        %2067 = vmatpush2.bf16.msra.mxu0 %v1914
        %2068 = vmatprep.subr.bf16.mxu0 0
        %2069 = vmatpush2.bf16.msra.mxu0 %v1913
        %2070 = vmatprep.subr.bf16.mxu0 0
        %2071 = vmatpush2.bf16.msra.mxu0 %v1912
        %2072 = vmatprep.subr.bf16.mxu0 0
        %2073 = vmatpush2.bf16.msra.mxu0 %v1911
        %2074 = vmatprep.subr.bf16.mxu0 0
        %2075 = vmatpush2.bf16.msra.mxu0 %v1910
        %2076 = vmatprep.subr.bf16.mxu0 0
        %2077 = vmatpush2.bf16.msra.mxu0 %v1909
        %2078 = vmatprep.mubr.bf16.mxu0 %v1676
        %2079 = vmatmul.mubr.bf16.gmra.mxu0 %v810
        %v2080 = vpop.f32.mrf.mxu0
        %v2081 = vadd.f32 %v1984, %v2080
        %v2082 = vpop.f32.mrf.mxu0
        %v2083 = vpop.f32.mrf.mxu0
        %v2084 = vadd.f32 %v1987, %v2083
        %v2085 = vpop.f32.mrf.mxu0
        %2086 = vmatprep.mubr.bf16.mxu0 %v1677
        %2087 = vmatmul.mubr.bf16.gmra.mxu0 %v811
        %v2088 = vpop.f32.mrf.mxu0
        %v2089 = vadd.f32 %v1992, %v2088
        %v2090 = vpop.f32.mrf.mxu0
        %v2091 = vpop.f32.mrf.mxu0
        %v2092 = vadd.f32 %v1995, %v2091
        %v2093 = vpop.f32.mrf.mxu0
        %2094 = vmatprep.mubr.bf16.mxu0 %v1678
        %2095 = vmatmul.mubr.bf16.gmra.mxu0 %v812
        %v2096 = vpop.f32.mrf.mxu0
        %v2097 = vadd.f32 %v2000, %v2096
        %v2098 = vpop.f32.mrf.mxu0
        %v2099 = vpop.f32.mrf.mxu0
        %v2100 = vadd.f32 %v2003, %v2099
        %v2101 = vpop.f32.mrf.mxu0
        %2102 = vmatprep.mubr.bf16.mxu0 %v1679
        %2103 = vmatmul.mubr.bf16.gmra.mxu0 %v813
        %v2104 = vpop.f32.mrf.mxu0
        %v2105 = vadd.f32 %v2008, %v2104
        %v2106 = vpop.f32.mrf.mxu0
        %v2107 = vpop.f32.mrf.mxu0
        %v2108 = vadd.f32 %v2011, %v2107
        %v2109 = vpop.f32.mrf.mxu0
        %2110 = vmatprep.mubr.bf16.mxu0 %v1680
        %2111 = vmatmul.mubr.bf16.gmra.mxu0 %v814
        %v2112 = vpop.f32.mrf.mxu0
        %v2113 = vadd.f32 %v2016, %v2112
        %v2114 = vpop.f32.mrf.mxu0
        %v2115 = vpop.f32.mrf.mxu0
        %v2116 = vadd.f32 %v2019, %v2115
        %v2117 = vpop.f32.mrf.mxu0
        %2118 = vmatprep.mubr.bf16.mxu0 %v1681
        %2119 = vmatmul.mubr.bf16.gmra.mxu0 %v815
        %v2120 = vpop.f32.mrf.mxu0
        %v2121 = vadd.f32 %v2024, %v2120
        %v2122 = vpop.f32.mrf.mxu0
        %v2123 = vpop.f32.mrf.mxu0
        %v2124 = vadd.f32 %v2027, %v2123
        %v2125 = vpop.f32.mrf.mxu0
        %2126 = vmatprep.mubr.bf16.mxu0 %v1682
        %2127 = vmatmul.mubr.bf16.gmra.mxu0 %v816
        %v2128 = vpop.f32.mrf.mxu0
        %v2129 = vadd.f32 %v2032, %v2128
        %v2130 = vpop.f32.mrf.mxu0
        %v2131 = vpop.f32.mrf.mxu0
        %v2132 = vadd.f32 %v2035, %v2131
        %v2133 = vpop.f32.mrf.mxu0
        %2134 = vmatprep.mubr.bf16.mxu0 %v1683
        %2135 = vmatmul.mubr.bf16.gmra.mxu0 %v817
        %v2136 = vpop.f32.mrf.mxu0
        %v2137 = vadd.f32 %v2040, %v2136
        %v2138 = vpop.f32.mrf.mxu0
        %v2139 = vpop.f32.mrf.mxu0
        %v2140 = vadd.f32 %v2043, %v2139
        %v2141 = vpop.f32.mrf.mxu0
        %2142 = vdwg.mxu0
        %v2143 = vadd.f32 %v2081, %v2084
        %v2144 = vadd.f32 %v2143, %v2089
        %v2145 = vadd.f32 %v2144, %v2092
        %v2146 = vadd.f32 %v2145, %v2097
        %v2147 = vadd.f32 %v2146, %v2100
        %v2148 = vadd.f32 %v2147, %v2105
        %v2149 = vadd.f32 %v2148, %v2108
        %v2150 = vadd.f32 %v2149, %v2113
        %v2151 = vadd.f32 %v2150, %v2116
        %v2152 = vadd.f32 %v2151, %v2121
        %v2153 = vadd.f32 %v2152, %v2124
        %v2154 = vadd.f32 %v2153, %v2129
        %v2155 = vadd.f32 %v2154, %v2132
        %v2156 = vadd.f32 %v2155, %v2137
        %v2157 = vadd.f32 %v2156, %v2140
        %v2158 = vrot.slane %v2157, 4
        %v2159 = vadd.f32 %v2157, %v2158
        %v2160 = vrot.slane %v2159, 2
        %v2161 = vadd.f32 %v2159, %v2160
        %v2162 = vrot.slane %v2161, 1
        %v2163 = vadd.f32 %v2161, %v2162
        %v2164 = vadd.f32 %v1297, %v2163
        %v2165 = vmul.f32 %v2081, %v2081
        %v2166 = vmul.f32 %v2084, %v2084
        %v2167 = vmul.f32 %v2089, %v2089
        %v2168 = vmul.f32 %v2092, %v2092
        %v2169 = vmul.f32 %v2097, %v2097
        %v2170 = vmul.f32 %v2100, %v2100
        %v2171 = vmul.f32 %v2105, %v2105
        %v2172 = vmul.f32 %v2108, %v2108
        %v2173 = vmul.f32 %v2113, %v2113
        %v2174 = vmul.f32 %v2116, %v2116
        %v2175 = vmul.f32 %v2121, %v2121
        %v2176 = vmul.f32 %v2124, %v2124
        %v2177 = vmul.f32 %v2129, %v2129
        %v2178 = vmul.f32 %v2132, %v2132
        %v2179 = vmul.f32 %v2137, %v2137
        %v2180 = vmul.f32 %v2140, %v2140
        %v2181 = vadd.f32 %v2165, %v2166
        %v2182 = vadd.f32 %v2181, %v2167
        %v2183 = vadd.f32 %v2182, %v2168
        %v2184 = vadd.f32 %v2183, %v2169
        %v2185 = vadd.f32 %v2184, %v2170
        %v2186 = vadd.f32 %v2185, %v2171
        %v2187 = vadd.f32 %v2186, %v2172
        %v2188 = vadd.f32 %v2187, %v2173
        %v2189 = vadd.f32 %v2188, %v2174
        %v2190 = vadd.f32 %v2189, %v2175
        %v2191 = vadd.f32 %v2190, %v2176
        %v2192 = vadd.f32 %v2191, %v2177
        %v2193 = vadd.f32 %v2192, %v2178
        %v2194 = vadd.f32 %v2193, %v2179
        %v2195 = vadd.f32 %v2194, %v2180
        %v2196 = vrot.slane %v2195, 4
        %v2197 = vadd.f32 %v2195, %v2196
        %v2198 = vrot.slane %v2197, 2
        %v2199 = vadd.f32 %v2197, %v2198
        %v2200 = vrot.slane %v2199, 1
        %v2201 = vadd.f32 %v2199, %v2200
        %v2202 = vadd.f32 %v1335, %v2201
        %v2203 = vpack.c.bf16 %v2084, %v2081
        %v2204 = vpack.c.bf16 %v2092, %v2089
        %v2205 = vpack.c.bf16 %v2100, %v2097
        %v2206 = vpack.c.bf16 %v2108, %v2105
        %v2207 = vpack.c.bf16 %v2116, %v2113
        %v2208 = vpack.c.bf16 %v2124, %v2121
        %v2209 = vpack.c.bf16 %v2132, %v2129
        %v2210 = vpack.c.bf16 %v2140, %v2137
        %v2219 = vunpack.c.l.b16 %v2203
        %v2220 = vunpack.c.h.b16 %v2203
        %v2221 = vunpack.c.l.b16 %v2204
        %v2222 = vunpack.c.h.b16 %v2204
        %v2223 = vunpack.c.l.b16 %v2205
        %v2224 = vunpack.c.h.b16 %v2205
        %v2225 = vunpack.c.l.b16 %v2206
        %v2226 = vunpack.c.h.b16 %v2206
        %v2227 = vunpack.c.l.b16 %v2207
        %v2228 = vunpack.c.h.b16 %v2207
        %v2229 = vunpack.c.l.b16 %v2208
        %v2230 = vunpack.c.h.b16 %v2208
        %v2231 = vunpack.c.l.b16 %v2209
        %v2232 = vunpack.c.h.b16 %v2209
        %v2233 = vunpack.c.l.b16 %v2210
        %v2234 = vunpack.c.h.b16 %v2210
        %v2235 = vpack.c.b16 %v2219, %v2219
        %v2236 = vpack.c.b16 %v2220, %v2220
        %v2237 = vpack.c.b16 %v2221, %v2221
        %v2238 = vpack.c.b16 %v2222, %v2222
        %v2239 = vpack.c.b16 %v2223, %v2223
        %v2240 = vpack.c.b16 %v2224, %v2224
        %v2241 = vpack.c.b16 %v2225, %v2225
        %v2242 = vpack.c.b16 %v2226, %v2226
        %v2243 = vpack.c.b16 %v2227, %v2227
        %v2244 = vpack.c.b16 %v2228, %v2228
        %v2245 = vpack.c.b16 %v2229, %v2229
        %v2246 = vpack.c.b16 %v2230, %v2230
        %v2247 = vpack.c.b16 %v2231, %v2231
        %v2248 = vpack.c.b16 %v2232, %v2232
        %v2249 = vpack.c.b16 %v2233, %v2233
        %v2250 = vpack.c.b16 %v2234, %v2234
        %2251 = vrot.lane.b32.xlu0 %v2235, 8
        %v2252 = vpop.permute.xlu0 %2251
        %2253 = vrot.lane.b32.xlu0 %v2236, 8
        %v2254 = vpop.permute.xlu0 %2253
        %2255 = vrot.lane.b32.xlu0 %v2237, 8
        %v2256 = vpop.permute.xlu0 %2255
        %2257 = vrot.lane.b32.xlu0 %v2238, 8
        %v2258 = vpop.permute.xlu0 %2257
        %2259 = vrot.lane.b32.xlu0 %v2239, 8
        %v2260 = vpop.permute.xlu0 %2259
        %2261 = vrot.lane.b32.xlu0 %v2240, 8
        %v2262 = vpop.permute.xlu0 %2261
        %2263 = vrot.lane.b32.xlu0 %v2241, 8
        %v2264 = vpop.permute.xlu0 %2263
        %2265 = vrot.lane.b32.xlu0 %v2242, 8
        %v2266 = vpop.permute.xlu0 %2265
        %2267 = vrot.lane.b32.xlu0 %v2243, 8
        %v2268 = vpop.permute.xlu0 %2267
        %2269 = vrot.lane.b32.xlu0 %v2244, 8
        %v2270 = vpop.permute.xlu0 %2269
        %2271 = vrot.lane.b32.xlu0 %v2245, 8
        %v2272 = vpop.permute.xlu0 %2271
        %2273 = vrot.lane.b32.xlu0 %v2246, 8
        %v2274 = vpop.permute.xlu0 %2273
        %2275 = vrot.lane.b32.xlu0 %v2247, 8
        %v2276 = vpop.permute.xlu0 %2275
        %2277 = vrot.lane.b32.xlu0 %v2248, 8
        %v2278 = vpop.permute.xlu0 %2277
        %2279 = vrot.lane.b32.xlu0 %v2249, 8
        %v2280 = vpop.permute.xlu0 %2279
        %2281 = vrot.lane.b32.xlu0 %v2250, 8
        %v2282 = vpop.permute.xlu0 %2281
        %vm2299 = vcmask 126016
        %2300 = vst.msk [vmem:[%s220] sm:$0xf] %vm2299, %v2252
        %2301 = vst.msk [vmem:[%s220 + $0x4] sm:$0xf] %vm2299, %v2254
        %2302 = vst.msk [vmem:[%s220 + $0x8] sm:$0xf] %vm2299, %v2256
        %2303 = vst.msk [vmem:[%s220 + $0xc] sm:$0xf] %vm2299, %v2258
        %2304 = vst.msk [vmem:[%s220 + $0x10] sm:$0xf] %vm2299, %v2260
        %2305 = vst.msk [vmem:[%s220 + $0x14] sm:$0xf] %vm2299, %v2262
        %2306 = vst.msk [vmem:[%s220 + $0x18] sm:$0xf] %vm2299, %v2264
        %2307 = vst.msk [vmem:[%s220 + $0x1c] sm:$0xf] %vm2299, %v2266
        %2308 = vst.msk [vmem:[%s220 + $0x20] sm:$0xf] %vm2299, %v2268
        %2309 = vst.msk [vmem:[%s220 + $0x24] sm:$0xf] %vm2299, %v2270
        %2310 = vst.msk [vmem:[%s220 + $0x28] sm:$0xf] %vm2299, %v2272
        %2311 = vst.msk [vmem:[%s220 + $0x2c] sm:$0xf] %vm2299, %v2274
        %2312 = vst.msk [vmem:[%s220 + $0x30] sm:$0xf] %vm2299, %v2276
        %2313 = vst.msk [vmem:[%s220 + $0x34] sm:$0xf] %vm2299, %v2278
        %2314 = vst.msk [vmem:[%s220 + $0x38] sm:$0xf] %vm2299, %v2280
        %2315 = vst.msk [vmem:[%s220 + $0x3c] sm:$0xf] %vm2299, %v2282
        %s2316 = sadd.s32 %s223, 2
        %s2317 = smul.u32 %s2316, 3
        %s2318 = smul.addr %s2317, 4
        %s2319 = scalar_lea.vmem %s211, %s2318
        %v2320 = vld [vmem:[%s2319] sm:$0xf]
        %v2321 = vld [vmem:[%s2319 + $0x4] sm:$0xf]
        %v2322 = vld [vmem:[%s2319 + $0xc] sm:$0xf]
        %v2323 = vld [vmem:[%s2319 + $0x10] sm:$0xf]
        %v2324 = vld [vmem:[%s2319 + $0x18] sm:$0xf]
        %v2325 = vld [vmem:[%s2319 + $0x1c] sm:$0xf]
        %v2326 = vld [vmem:[%s2319 + $0x24] sm:$0xf]
        %v2327 = vld [vmem:[%s2319 + $0x28] sm:$0xf]
        %v2328 = vld [vmem:[%s2319 + $0x30] sm:$0xf]
        %v2329 = vld [vmem:[%s2319 + $0x34] sm:$0xf]
        %v2330 = vld [vmem:[%s2319 + $0x3c] sm:$0xf]
        %v2331 = vld [vmem:[%s2319 + $0x40] sm:$0xf]
        %v2332 = vld [vmem:[%s2319 + $0x48] sm:$0xf]
        %v2333 = vld [vmem:[%s2319 + $0x4c] sm:$0xf]
        %v2334 = vld [vmem:[%s2319 + $0x54] sm:$0xf]
        %v2335 = vld [vmem:[%s2319 + $0x58] sm:$0xf]
        %v2336 = vld [vmem:[%s2319 + $0x8] sm:$0x1]
        %v2337 = vld [vmem:[%s2319 + $0x14] sm:$0x1]
        %v2338 = vld [vmem:[%s2319 + $0x20] sm:$0x1]
        %v2339 = vld [vmem:[%s2319 + $0x2c] sm:$0x1]
        %v2340 = vld [vmem:[%s2319 + $0x38] sm:$0x1]
        %v2341 = vld [vmem:[%s2319 + $0x44] sm:$0x1]
        %v2342 = vld [vmem:[%s2319 + $0x50] sm:$0x1]
        %v2343 = vld [vmem:[%s2319 + $0x5c] sm:$0x1]
        %v2345 = vshrl.u32 %v2320, 16
        %v2347 = vrot.slane %v2345, 4
        %v2348 = vshll.u32 %v2320, 16
        %v2350 = vrot.slane %v2348, 5
        %v2351 = vor.u32 %v2347, %v2350
        %v2352 = vrot.slane %v2351, 4
        %v2354 = vshll.u32 %v2321, 16
        %v2356 = vrot.slane %v2354, 5
        %v2357 = vsel %vm253, %v2352, %v2356
        %v2358 = vshrl.u32 %v2321, 16
        %v2360 = vrot.slane %v2358, 4
        %v2361 = vor.u32 %v2360, %v2356
        %v2362 = vrot.slane %v2361, 4
        %v2364 = vshll.u32 %v2336, 16
        %v2366 = vrot.slane %v2364, 5
        %v2367 = vsel %vm253, %v2362, %v2366
        %v2369 = vshrl.u32 %v2322, 16
        %v2371 = vrot.slane %v2369, 4
        %v2372 = vshll.u32 %v2322, 16
        %v2374 = vrot.slane %v2372, 5
        %v2375 = vor.u32 %v2371, %v2374
        %v2376 = vrot.slane %v2375, 4
        %v2378 = vshll.u32 %v2323, 16
        %v2380 = vrot.slane %v2378, 5
        %v2381 = vsel %vm253, %v2376, %v2380
        %v2382 = vshrl.u32 %v2323, 16
        %v2384 = vrot.slane %v2382, 4
        %v2385 = vor.u32 %v2384, %v2380
        %v2386 = vrot.slane %v2385, 4
        %v2388 = vshll.u32 %v2337, 16
        %v2390 = vrot.slane %v2388, 5
        %v2391 = vsel %vm253, %v2386, %v2390
        %v2393 = vshrl.u32 %v2324, 16
        %v2395 = vrot.slane %v2393, 4
        %v2396 = vshll.u32 %v2324, 16
        %v2398 = vrot.slane %v2396, 5
        %v2399 = vor.u32 %v2395, %v2398
        %v2400 = vrot.slane %v2399, 4
        %v2402 = vshll.u32 %v2325, 16
        %v2404 = vrot.slane %v2402, 5
        %v2405 = vsel %vm253, %v2400, %v2404
        %v2406 = vshrl.u32 %v2325, 16
        %v2408 = vrot.slane %v2406, 4
        %v2409 = vor.u32 %v2408, %v2404
        %v2410 = vrot.slane %v2409, 4
        %v2412 = vshll.u32 %v2338, 16
        %v2414 = vrot.slane %v2412, 5
        %v2415 = vsel %vm253, %v2410, %v2414
        %v2417 = vshrl.u32 %v2326, 16
        %v2419 = vrot.slane %v2417, 4
        %v2420 = vshll.u32 %v2326, 16
        %v2422 = vrot.slane %v2420, 5
        %v2423 = vor.u32 %v2419, %v2422
        %v2424 = vrot.slane %v2423, 4
        %v2426 = vshll.u32 %v2327, 16
        %v2428 = vrot.slane %v2426, 5
        %v2429 = vsel %vm253, %v2424, %v2428
        %v2430 = vshrl.u32 %v2327, 16
        %v2432 = vrot.slane %v2430, 4
        %v2433 = vor.u32 %v2432, %v2428
        %v2434 = vrot.slane %v2433, 4
        %v2436 = vshll.u32 %v2339, 16
        %v2438 = vrot.slane %v2436, 5
        %v2439 = vsel %vm253, %v2434, %v2438
        %v2441 = vshrl.u32 %v2328, 16
        %v2443 = vrot.slane %v2441, 4
        %v2444 = vshll.u32 %v2328, 16
        %v2446 = vrot.slane %v2444, 5
        %v2447 = vor.u32 %v2443, %v2446
        %v2448 = vrot.slane %v2447, 4
        %v2450 = vshll.u32 %v2329, 16
        %v2452 = vrot.slane %v2450, 5
        %v2453 = vsel %vm253, %v2448, %v2452
        %v2454 = vshrl.u32 %v2329, 16
        %v2456 = vrot.slane %v2454, 4
        %v2457 = vor.u32 %v2456, %v2452
        %v2458 = vrot.slane %v2457, 4
        %v2460 = vshll.u32 %v2340, 16
        %v2462 = vrot.slane %v2460, 5
        %v2463 = vsel %vm253, %v2458, %v2462
        %v2465 = vshrl.u32 %v2330, 16
        %v2467 = vrot.slane %v2465, 4
        %v2468 = vshll.u32 %v2330, 16
        %v2470 = vrot.slane %v2468, 5
        %v2471 = vor.u32 %v2467, %v2470
        %v2472 = vrot.slane %v2471, 4
        %v2474 = vshll.u32 %v2331, 16
        %v2476 = vrot.slane %v2474, 5
        %v2477 = vsel %vm253, %v2472, %v2476
        %v2478 = vshrl.u32 %v2331, 16
        %v2480 = vrot.slane %v2478, 4
        %v2481 = vor.u32 %v2480, %v2476
        %v2482 = vrot.slane %v2481, 4
        %v2484 = vshll.u32 %v2341, 16
        %v2486 = vrot.slane %v2484, 5
        %v2487 = vsel %vm253, %v2482, %v2486
        %v2489 = vshrl.u32 %v2332, 16
        %v2491 = vrot.slane %v2489, 4
        %v2492 = vshll.u32 %v2332, 16
        %v2494 = vrot.slane %v2492, 5
        %v2495 = vor.u32 %v2491, %v2494
        %v2496 = vrot.slane %v2495, 4
        %v2498 = vshll.u32 %v2333, 16
        %v2500 = vrot.slane %v2498, 5
        %v2501 = vsel %vm253, %v2496, %v2500
        %v2502 = vshrl.u32 %v2333, 16
        %v2504 = vrot.slane %v2502, 4
        %v2505 = vor.u32 %v2504, %v2500
        %v2506 = vrot.slane %v2505, 4
        %v2508 = vshll.u32 %v2342, 16
        %v2510 = vrot.slane %v2508, 5
        %v2511 = vsel %vm253, %v2506, %v2510
        %v2513 = vshrl.u32 %v2334, 16
        %v2515 = vrot.slane %v2513, 4
        %v2516 = vshll.u32 %v2334, 16
        %v2518 = vrot.slane %v2516, 5
        %v2519 = vor.u32 %v2515, %v2518
        %v2520 = vrot.slane %v2519, 4
        %v2522 = vshll.u32 %v2335, 16
        %v2524 = vrot.slane %v2522, 5
        %v2525 = vsel %vm253, %v2520, %v2524
        %v2526 = vshrl.u32 %v2335, 16
        %v2528 = vrot.slane %v2526, 4
        %v2529 = vor.u32 %v2528, %v2524
        %v2530 = vrot.slane %v2529, 4
        %v2532 = vshll.u32 %v2343, 16
        %v2534 = vrot.slane %v2532, 5
        %v2535 = vsel %vm253, %v2530, %v2534
        %v2552 = vunpack.c.l.b16 %v2320
        %v2553 = vunpack.c.l.b16 %v2321
        %v2554 = vunpack.c.l.b16 %v2322
        %v2555 = vunpack.c.l.b16 %v2323
        %v2556 = vunpack.c.l.b16 %v2324
        %v2557 = vunpack.c.l.b16 %v2325
        %v2558 = vunpack.c.l.b16 %v2326
        %v2559 = vunpack.c.l.b16 %v2327
        %v2560 = vunpack.c.l.b16 %v2328
        %v2561 = vunpack.c.l.b16 %v2329
        %v2562 = vunpack.c.l.b16 %v2330
        %v2563 = vunpack.c.l.b16 %v2331
        %v2564 = vunpack.c.l.b16 %v2332
        %v2565 = vunpack.c.l.b16 %v2333
        %v2566 = vunpack.c.l.b16 %v2334
        %v2567 = vunpack.c.l.b16 %v2335
        %v2568 = vpack.c.b16 %v2553, %v2552
        %v2569 = vpack.c.b16 %v2555, %v2554
        %v2570 = vpack.c.b16 %v2557, %v2556
        %v2571 = vpack.c.b16 %v2559, %v2558
        %v2572 = vpack.c.b16 %v2561, %v2560
        %v2573 = vpack.c.b16 %v2563, %v2562
        %v2574 = vpack.c.b16 %v2565, %v2564
        %v2575 = vpack.c.b16 %v2567, %v2566
        %v2584 = vunpack.c.l.b16 %v2357
        %v2585 = vunpack.c.l.b16 %v2367
        %v2586 = vunpack.c.l.b16 %v2381
        %v2587 = vunpack.c.l.b16 %v2391
        %v2588 = vunpack.c.l.b16 %v2405
        %v2589 = vunpack.c.l.b16 %v2415
        %v2590 = vunpack.c.l.b16 %v2429
        %v2591 = vunpack.c.l.b16 %v2439
        %v2592 = vunpack.c.l.b16 %v2453
        %v2593 = vunpack.c.l.b16 %v2463
        %v2594 = vunpack.c.l.b16 %v2477
        %v2595 = vunpack.c.l.b16 %v2487
        %v2596 = vunpack.c.l.b16 %v2501
        %v2597 = vunpack.c.l.b16 %v2511
        %v2598 = vunpack.c.l.b16 %v2525
        %v2599 = vunpack.c.l.b16 %v2535
        %v2600 = vpack.c.b16 %v2585, %v2584
        %v2601 = vpack.c.b16 %v2587, %v2586
        %v2602 = vpack.c.b16 %v2589, %v2588
        %v2603 = vpack.c.b16 %v2591, %v2590
        %v2604 = vpack.c.b16 %v2593, %v2592
        %v2605 = vpack.c.b16 %v2595, %v2594
        %v2606 = vpack.c.b16 %v2597, %v2596
        %v2607 = vpack.c.b16 %v2599, %v2598
        %s2616 = scalar_lea.vmem [#allocation2], 512
        %v2617 = vld [vmem:[%s2616] sm:$0xf]
        %v2618 = vld [vmem:[%s2616 + $0x4] sm:$0xf]
        %v2619 = vld [vmem:[%s2616 + $0x8] sm:$0xf]
        %v2620 = vld [vmem:[%s2616 + $0xc] sm:$0xf]
        %v2621 = vld [vmem:[%s2616 + $0x10] sm:$0xf]
        %v2622 = vld [vmem:[%s2616 + $0x14] sm:$0xf]
        %v2623 = vld [vmem:[%s2616 + $0x18] sm:$0xf]
        %v2624 = vld [vmem:[%s2616 + $0x1c] sm:$0xf]
        %v2625 = vld [vmem:[%s2616 + $0x20] sm:$0xf]
        %v2626 = vld [vmem:[%s2616 + $0x24] sm:$0xf]
        %v2627 = vld [vmem:[%s2616 + $0x28] sm:$0xf]
        %v2628 = vld [vmem:[%s2616 + $0x2c] sm:$0xf]
        %v2629 = vld [vmem:[%s2616 + $0x30] sm:$0xf]
        %v2630 = vld [vmem:[%s2616 + $0x34] sm:$0xf]
        %v2631 = vld [vmem:[%s2616 + $0x38] sm:$0xf]
        %v2632 = vld [vmem:[%s2616 + $0x3c] sm:$0xf]
        %v2633 = vld [vmem:[%s2616 + $0x40] sm:$0xf]
        %v2634 = vld [vmem:[%s2616 + $0x44] sm:$0xf]
        %v2635 = vld [vmem:[%s2616 + $0x48] sm:$0xf]
        %v2636 = vld [vmem:[%s2616 + $0x4c] sm:$0xf]
        %v2637 = vld [vmem:[%s2616 + $0x50] sm:$0xf]
        %v2638 = vld [vmem:[%s2616 + $0x54] sm:$0xf]
        %v2639 = vld [vmem:[%s2616 + $0x58] sm:$0xf]
        %v2640 = vld [vmem:[%s2616 + $0x5c] sm:$0xf]
        %v2641 = vld [vmem:[%s2616 + $0x60] sm:$0xf]
        %v2642 = vld [vmem:[%s2616 + $0x64] sm:$0xf]
        %v2643 = vld [vmem:[%s2616 + $0x68] sm:$0xf]
        %v2644 = vld [vmem:[%s2616 + $0x6c] sm:$0xf]
        %v2645 = vld [vmem:[%s2616 + $0x70] sm:$0xf]
        %v2646 = vld [vmem:[%s2616 + $0x74] sm:$0xf]
        %v2647 = vld [vmem:[%s2616 + $0x78] sm:$0xf]
        %v2648 = vld [vmem:[%s2616 + $0x7c] sm:$0xf]
        %v2649 = vld [vmem:[%s2616 + $0x80] sm:$0xf]
        %v2650 = vld [vmem:[%s2616 + $0x84] sm:$0xf]
        %v2651 = vld [vmem:[%s2616 + $0x88] sm:$0xf]
        %v2652 = vld [vmem:[%s2616 + $0x8c] sm:$0xf]
        %v2653 = vld [vmem:[%s2616 + $0x90] sm:$0xf]
        %v2654 = vld [vmem:[%s2616 + $0x94] sm:$0xf]
        %v2655 = vld [vmem:[%s2616 + $0x98] sm:$0xf]
        %v2656 = vld [vmem:[%s2616 + $0x9c] sm:$0xf]
        %v2657 = vld [vmem:[%s2616 + $0xa0] sm:$0xf]
        %v2658 = vld [vmem:[%s2616 + $0xa4] sm:$0xf]
        %v2659 = vld [vmem:[%s2616 + $0xa8] sm:$0xf]
        %v2660 = vld [vmem:[%s2616 + $0xac] sm:$0xf]
        %v2661 = vld [vmem:[%s2616 + $0xb0] sm:$0xf]
        %v2662 = vld [vmem:[%s2616 + $0xb4] sm:$0xf]
        %v2663 = vld [vmem:[%s2616 + $0xb8] sm:$0xf]
        %v2664 = vld [vmem:[%s2616 + $0xbc] sm:$0xf]
        %v2665 = vld [vmem:[%s2616 + $0xc0] sm:$0xf]
        %v2666 = vld [vmem:[%s2616 + $0xc4] sm:$0xf]
        %v2667 = vld [vmem:[%s2616 + $0xc8] sm:$0xf]
        %v2668 = vld [vmem:[%s2616 + $0xcc] sm:$0xf]
        %v2669 = vld [vmem:[%s2616 + $0xd0] sm:$0xf]
        %v2670 = vld [vmem:[%s2616 + $0xd4] sm:$0xf]
        %v2671 = vld [vmem:[%s2616 + $0xd8] sm:$0xf]
        %v2672 = vld [vmem:[%s2616 + $0xdc] sm:$0xf]
        %v2673 = vld [vmem:[%s2616 + $0xe0] sm:$0xf]
        %v2674 = vld [vmem:[%s2616 + $0xe4] sm:$0xf]
        %v2675 = vld [vmem:[%s2616 + $0xe8] sm:$0xf]
        %v2676 = vld [vmem:[%s2616 + $0xec] sm:$0xf]
        %v2677 = vld [vmem:[%s2616 + $0xf0] sm:$0xf]
        %v2678 = vld [vmem:[%s2616 + $0xf4] sm:$0xf]
        %v2679 = vld [vmem:[%s2616 + $0xf8] sm:$0xf]
        %v2680 = vld [vmem:[%s2616 + $0xfc] sm:$0xf]
        %v2745 = vunpack.c.l.b16 %v2617
        %v2746 = vunpack.c.l.b16 %v2618
        %v2747 = vunpack.c.l.b16 %v2619
        %v2748 = vunpack.c.l.b16 %v2620
        %v2749 = vunpack.c.l.b16 %v2621
        %v2750 = vunpack.c.l.b16 %v2622
        %v2751 = vunpack.c.l.b16 %v2623
        %v2752 = vunpack.c.l.b16 %v2624
        %v2753 = vunpack.c.l.b16 %v2625
        %v2754 = vunpack.c.l.b16 %v2626
        %v2755 = vunpack.c.l.b16 %v2627
        %v2756 = vunpack.c.l.b16 %v2628
        %v2757 = vunpack.c.l.b16 %v2629
        %v2758 = vunpack.c.l.b16 %v2630
        %v2759 = vunpack.c.l.b16 %v2631
        %v2760 = vunpack.c.l.b16 %v2632
        %v2761 = vunpack.c.l.b16 %v2633
        %v2762 = vunpack.c.l.b16 %v2634
        %v2763 = vunpack.c.l.b16 %v2635
        %v2764 = vunpack.c.l.b16 %v2636
        %v2765 = vunpack.c.l.b16 %v2637
        %v2766 = vunpack.c.l.b16 %v2638
        %v2767 = vunpack.c.l.b16 %v2639
        %v2768 = vunpack.c.l.b16 %v2640
        %v2769 = vunpack.c.l.b16 %v2641
        %v2770 = vunpack.c.l.b16 %v2642
        %v2771 = vunpack.c.l.b16 %v2643
        %v2772 = vunpack.c.l.b16 %v2644
        %v2773 = vunpack.c.l.b16 %v2645
        %v2774 = vunpack.c.l.b16 %v2646
        %v2775 = vunpack.c.l.b16 %v2647
        %v2776 = vunpack.c.l.b16 %v2648
        %v2777 = vunpack.c.l.b16 %v2649
        %v2778 = vunpack.c.l.b16 %v2650
        %v2779 = vunpack.c.l.b16 %v2651
        %v2780 = vunpack.c.l.b16 %v2652
        %v2781 = vunpack.c.l.b16 %v2653
        %v2782 = vunpack.c.l.b16 %v2654
        %v2783 = vunpack.c.l.b16 %v2655
        %v2784 = vunpack.c.l.b16 %v2656
        %v2785 = vunpack.c.l.b16 %v2657
        %v2786 = vunpack.c.l.b16 %v2658
        %v2787 = vunpack.c.l.b16 %v2659
        %v2788 = vunpack.c.l.b16 %v2660
        %v2789 = vunpack.c.l.b16 %v2661
        %v2790 = vunpack.c.l.b16 %v2662
        %v2791 = vunpack.c.l.b16 %v2663
        %v2792 = vunpack.c.l.b16 %v2664
        %v2793 = vunpack.c.l.b16 %v2665
        %v2794 = vunpack.c.l.b16 %v2666
        %v2795 = vunpack.c.l.b16 %v2667
        %v2796 = vunpack.c.l.b16 %v2668
        %v2797 = vunpack.c.l.b16 %v2669
        %v2798 = vunpack.c.l.b16 %v2670
        %v2799 = vunpack.c.l.b16 %v2671
        %v2800 = vunpack.c.l.b16 %v2672
        %v2801 = vunpack.c.l.b16 %v2673
        %v2802 = vunpack.c.l.b16 %v2674
        %v2803 = vunpack.c.l.b16 %v2675
        %v2804 = vunpack.c.l.b16 %v2676
        %v2805 = vunpack.c.l.b16 %v2677
        %v2806 = vunpack.c.l.b16 %v2678
        %v2807 = vunpack.c.l.b16 %v2679
        %v2808 = vunpack.c.l.b16 %v2680
        %v2809 = vpack.c.b16 %v2746, %v2745
        %v2810 = vpack.c.b16 %v2748, %v2747
        %v2811 = vpack.c.b16 %v2750, %v2749
        %v2812 = vpack.c.b16 %v2752, %v2751
        %v2813 = vpack.c.b16 %v2754, %v2753
        %v2814 = vpack.c.b16 %v2756, %v2755
        %v2815 = vpack.c.b16 %v2758, %v2757
        %v2816 = vpack.c.b16 %v2760, %v2759
        %v2817 = vpack.c.b16 %v2762, %v2761
        %v2818 = vpack.c.b16 %v2764, %v2763
        %v2819 = vpack.c.b16 %v2766, %v2765
        %v2820 = vpack.c.b16 %v2768, %v2767
        %v2821 = vpack.c.b16 %v2770, %v2769
        %v2822 = vpack.c.b16 %v2772, %v2771
        %v2823 = vpack.c.b16 %v2774, %v2773
        %v2824 = vpack.c.b16 %v2776, %v2775
        %v2825 = vpack.c.b16 %v2778, %v2777
        %v2826 = vpack.c.b16 %v2780, %v2779
        %v2827 = vpack.c.b16 %v2782, %v2781
        %v2828 = vpack.c.b16 %v2784, %v2783
        %v2829 = vpack.c.b16 %v2786, %v2785
        %v2830 = vpack.c.b16 %v2788, %v2787
        %v2831 = vpack.c.b16 %v2790, %v2789
        %v2832 = vpack.c.b16 %v2792, %v2791
        %v2833 = vpack.c.b16 %v2794, %v2793
        %v2834 = vpack.c.b16 %v2796, %v2795
        %v2835 = vpack.c.b16 %v2798, %v2797
        %v2836 = vpack.c.b16 %v2800, %v2799
        %v2837 = vpack.c.b16 %v2802, %v2801
        %v2838 = vpack.c.b16 %v2804, %v2803
        %v2839 = vpack.c.b16 %v2806, %v2805
        %v2840 = vpack.c.b16 %v2808, %v2807
        %2873 = vmatprep.subr.bf16.mxu0 0
        %2874 = vmatpush1.bf16.msra.mxu0 %v2816
        %2875 = vmatprep.subr.bf16.mxu0 0
        %2876 = vmatpush1.bf16.msra.mxu0 %v2815
        %2877 = vmatprep.subr.bf16.mxu0 0
        %2878 = vmatpush1.bf16.msra.mxu0 %v2814
        %2879 = vmatprep.subr.bf16.mxu0 0
        %2880 = vmatpush1.bf16.msra.mxu0 %v2813
        %2881 = vmatprep.subr.bf16.mxu0 0
        %2882 = vmatpush1.bf16.msra.mxu0 %v2812
        %2883 = vmatprep.subr.bf16.mxu0 0
        %2884 = vmatpush1.bf16.msra.mxu0 %v2811
        %2885 = vmatprep.subr.bf16.mxu0 0
        %2886 = vmatpush1.bf16.msra.mxu0 %v2810
        %2887 = vmatprep.subr.bf16.mxu0 0
        %2888 = vmatpush1.bf16.msra.mxu0 %v2809
        %2889 = vmatprep.subr.bf16.mxu0 0
        %2890 = vmatpush2.bf16.msra.mxu0 %v2824
        %2891 = vmatprep.subr.bf16.mxu0 0
        %2892 = vmatpush2.bf16.msra.mxu0 %v2823
        %2893 = vmatprep.subr.bf16.mxu0 0
        %2894 = vmatpush2.bf16.msra.mxu0 %v2822
        %2895 = vmatprep.subr.bf16.mxu0 0
        %2896 = vmatpush2.bf16.msra.mxu0 %v2821
        %2897 = vmatprep.subr.bf16.mxu0 0
        %2898 = vmatpush2.bf16.msra.mxu0 %v2820
        %2899 = vmatprep.subr.bf16.mxu0 0
        %2900 = vmatpush2.bf16.msra.mxu0 %v2819
        %2901 = vmatprep.subr.bf16.mxu0 0
        %2902 = vmatpush2.bf16.msra.mxu0 %v2818
        %2903 = vmatprep.subr.bf16.mxu0 0
        %2904 = vmatpush2.bf16.msra.mxu0 %v2817
        %2905 = vmatprep.mubr.bf16.mxu0 %v810
        %2906 = vmatmul.mubr.bf16.gmra.mxu0 %v778
        %v2907 = vpop.f32.mrf.mxu0
        %v2908 = vadd.f32 0.0, %v2907
        %v2909 = vpop.f32.mrf.mxu0
        %v2910 = vpop.f32.mrf.mxu0
        %v2911 = vadd.f32 0.0, %v2910
        %v2912 = vpop.f32.mrf.mxu0
        %2913 = vmatprep.mubr.bf16.mxu0 %v811
        %2914 = vmatmul.mubr.bf16.gmra.mxu0 %v779
        %v2915 = vpop.f32.mrf.mxu0
        %v2916 = vadd.f32 0.0, %v2915
        %v2917 = vpop.f32.mrf.mxu0
        %v2918 = vpop.f32.mrf.mxu0
        %v2919 = vadd.f32 0.0, %v2918
        %v2920 = vpop.f32.mrf.mxu0
        %2921 = vmatprep.mubr.bf16.mxu0 %v812
        %2922 = vmatmul.mubr.bf16.gmra.mxu0 %v780
        %v2923 = vpop.f32.mrf.mxu0
        %v2924 = vadd.f32 0.0, %v2923
        %v2925 = vpop.f32.mrf.mxu0
        %v2926 = vpop.f32.mrf.mxu0
        %v2927 = vadd.f32 0.0, %v2926
        %v2928 = vpop.f32.mrf.mxu0
        %2929 = vmatprep.mubr.bf16.mxu0 %v813
        %2930 = vmatmul.mubr.bf16.gmra.mxu0 %v781
        %v2931 = vpop.f32.mrf.mxu0
        %v2932 = vadd.f32 0.0, %v2931
        %v2933 = vpop.f32.mrf.mxu0
        %v2934 = vpop.f32.mrf.mxu0
        %v2935 = vadd.f32 0.0, %v2934
        %v2936 = vpop.f32.mrf.mxu0
        %2937 = vmatprep.mubr.bf16.mxu0 %v814
        %2938 = vmatmul.mubr.bf16.gmra.mxu0 %v782
        %v2939 = vpop.f32.mrf.mxu0
        %v2940 = vadd.f32 0.0, %v2939
        %v2941 = vpop.f32.mrf.mxu0
        %v2942 = vpop.f32.mrf.mxu0
        %v2943 = vadd.f32 0.0, %v2942
        %v2944 = vpop.f32.mrf.mxu0
        %2945 = vmatprep.mubr.bf16.mxu0 %v815
        %2946 = vmatmul.mubr.bf16.gmra.mxu0 %v783
        %v2947 = vpop.f32.mrf.mxu0
        %v2948 = vadd.f32 0.0, %v2947
        %v2949 = vpop.f32.mrf.mxu0
        %v2950 = vpop.f32.mrf.mxu0
        %v2951 = vadd.f32 0.0, %v2950
        %v2952 = vpop.f32.mrf.mxu0
        %2953 = vmatprep.mubr.bf16.mxu0 %v816
        %2954 = vmatmul.mubr.bf16.gmra.mxu0 %v784
        %v2955 = vpop.f32.mrf.mxu0
        %v2956 = vadd.f32 0.0, %v2955
        %v2957 = vpop.f32.mrf.mxu0
        %v2958 = vpop.f32.mrf.mxu0
        %v2959 = vadd.f32 0.0, %v2958
        %v2960 = vpop.f32.mrf.mxu0
        %2961 = vmatprep.mubr.bf16.mxu0 %v817
        %2962 = vmatmul.mubr.bf16.gmra.mxu0 %v785
        %v2963 = vpop.f32.mrf.mxu0
        %v2964 = vadd.f32 0.0, %v2963
        %v2965 = vpop.f32.mrf.mxu0
        %v2966 = vpop.f32.mrf.mxu0
        %v2967 = vadd.f32 0.0, %v2966
        %v2968 = vpop.f32.mrf.mxu0
        %2969 = vdwg.mxu0
        %2970 = vmatprep.subr.bf16.mxu0 0
        %2971 = vmatpush1.bf16.msra.mxu0 %v2832
        %2972 = vmatprep.subr.bf16.mxu0 0
        %2973 = vmatpush1.bf16.msra.mxu0 %v2831
        %2974 = vmatprep.subr.bf16.mxu0 0
        %2975 = vmatpush1.bf16.msra.mxu0 %v2830
        %2976 = vmatprep.subr.bf16.mxu0 0
        %2977 = vmatpush1.bf16.msra.mxu0 %v2829
        %2978 = vmatprep.subr.bf16.mxu0 0
        %2979 = vmatpush1.bf16.msra.mxu0 %v2828
        %2980 = vmatprep.subr.bf16.mxu0 0
        %2981 = vmatpush1.bf16.msra.mxu0 %v2827
        %2982 = vmatprep.subr.bf16.mxu0 0
        %2983 = vmatpush1.bf16.msra.mxu0 %v2826
        %2984 = vmatprep.subr.bf16.mxu0 0
        %2985 = vmatpush1.bf16.msra.mxu0 %v2825
        %2986 = vmatprep.subr.bf16.mxu0 0
        %2987 = vmatpush2.bf16.msra.mxu0 %v2840
        %2988 = vmatprep.subr.bf16.mxu0 0
        %2989 = vmatpush2.bf16.msra.mxu0 %v2839
        %2990 = vmatprep.subr.bf16.mxu0 0
        %2991 = vmatpush2.bf16.msra.mxu0 %v2838
        %2992 = vmatprep.subr.bf16.mxu0 0
        %2993 = vmatpush2.bf16.msra.mxu0 %v2837
        %2994 = vmatprep.subr.bf16.mxu0 0
        %2995 = vmatpush2.bf16.msra.mxu0 %v2836
        %2996 = vmatprep.subr.bf16.mxu0 0
        %2997 = vmatpush2.bf16.msra.mxu0 %v2835
        %2998 = vmatprep.subr.bf16.mxu0 0
        %2999 = vmatpush2.bf16.msra.mxu0 %v2834
        %3000 = vmatprep.subr.bf16.mxu0 0
        %3001 = vmatpush2.bf16.msra.mxu0 %v2833
        %3002 = vmatprep.mubr.bf16.mxu0 %v2600
        %3003 = vmatmul.mubr.bf16.gmra.mxu0 %v2568
        %v3004 = vpop.f32.mrf.mxu0
        %v3005 = vadd.f32 %v2908, %v3004
        %v3006 = vpop.f32.mrf.mxu0
        %v3007 = vpop.f32.mrf.mxu0
        %v3008 = vadd.f32 %v2911, %v3007
        %v3009 = vpop.f32.mrf.mxu0
        %3010 = vmatprep.mubr.bf16.mxu0 %v2601
        %3011 = vmatmul.mubr.bf16.gmra.mxu0 %v2569
        %v3012 = vpop.f32.mrf.mxu0
        %v3013 = vadd.f32 %v2916, %v3012
        %v3014 = vpop.f32.mrf.mxu0
        %v3015 = vpop.f32.mrf.mxu0
        %v3016 = vadd.f32 %v2919, %v3015
        %v3017 = vpop.f32.mrf.mxu0
        %3018 = vmatprep.mubr.bf16.mxu0 %v2602
        %3019 = vmatmul.mubr.bf16.gmra.mxu0 %v2570
        %v3020 = vpop.f32.mrf.mxu0
        %v3021 = vadd.f32 %v2924, %v3020
        %v3022 = vpop.f32.mrf.mxu0
        %v3023 = vpop.f32.mrf.mxu0
        %v3024 = vadd.f32 %v2927, %v3023
        %v3025 = vpop.f32.mrf.mxu0
        %3026 = vmatprep.mubr.bf16.mxu0 %v2603
        %3027 = vmatmul.mubr.bf16.gmra.mxu0 %v2571
        %v3028 = vpop.f32.mrf.mxu0
        %v3029 = vadd.f32 %v2932, %v3028
        %v3030 = vpop.f32.mrf.mxu0
        %v3031 = vpop.f32.mrf.mxu0
        %v3032 = vadd.f32 %v2935, %v3031
        %v3033 = vpop.f32.mrf.mxu0
        %3034 = vmatprep.mubr.bf16.mxu0 %v2604
        %3035 = vmatmul.mubr.bf16.gmra.mxu0 %v2572
        %v3036 = vpop.f32.mrf.mxu0
        %v3037 = vadd.f32 %v2940, %v3036
        %v3038 = vpop.f32.mrf.mxu0
        %v3039 = vpop.f32.mrf.mxu0
        %v3040 = vadd.f32 %v2943, %v3039
        %v3041 = vpop.f32.mrf.mxu0
        %3042 = vmatprep.mubr.bf16.mxu0 %v2605
        %3043 = vmatmul.mubr.bf16.gmra.mxu0 %v2573
        %v3044 = vpop.f32.mrf.mxu0
        %v3045 = vadd.f32 %v2948, %v3044
        %v3046 = vpop.f32.mrf.mxu0
        %v3047 = vpop.f32.mrf.mxu0
        %v3048 = vadd.f32 %v2951, %v3047
        %v3049 = vpop.f32.mrf.mxu0
        %3050 = vmatprep.mubr.bf16.mxu0 %v2606
        %3051 = vmatmul.mubr.bf16.gmra.mxu0 %v2574
        %v3052 = vpop.f32.mrf.mxu0
        %v3053 = vadd.f32 %v2956, %v3052
        %v3054 = vpop.f32.mrf.mxu0
        %v3055 = vpop.f32.mrf.mxu0
        %v3056 = vadd.f32 %v2959, %v3055
        %v3057 = vpop.f32.mrf.mxu0
        %3058 = vmatprep.mubr.bf16.mxu0 %v2607
        %3059 = vmatmul.mubr.bf16.gmra.mxu0 %v2575
        %v3060 = vpop.f32.mrf.mxu0
        %v3061 = vadd.f32 %v2964, %v3060
        %v3062 = vpop.f32.mrf.mxu0
        %v3063 = vpop.f32.mrf.mxu0
        %v3064 = vadd.f32 %v2967, %v3063
        %v3065 = vpop.f32.mrf.mxu0
        %3066 = vdwg.mxu0
        %v3067 = vadd.f32 %v3005, %v3008
        %v3068 = vadd.f32 %v3067, %v3013
        %v3069 = vadd.f32 %v3068, %v3016
        %v3070 = vadd.f32 %v3069, %v3021
        %v3071 = vadd.f32 %v3070, %v3024
        %v3072 = vadd.f32 %v3071, %v3029
        %v3073 = vadd.f32 %v3072, %v3032
        %v3074 = vadd.f32 %v3073, %v3037
        %v3075 = vadd.f32 %v3074, %v3040
        %v3076 = vadd.f32 %v3075, %v3045
        %v3077 = vadd.f32 %v3076, %v3048
        %v3078 = vadd.f32 %v3077, %v3053
        %v3079 = vadd.f32 %v3078, %v3056
        %v3080 = vadd.f32 %v3079, %v3061
        %v3081 = vadd.f32 %v3080, %v3064
        %v3082 = vrot.slane %v3081, 4
        %v3083 = vadd.f32 %v3081, %v3082
        %v3084 = vrot.slane %v3083, 2
        %v3085 = vadd.f32 %v3083, %v3084
        %v3086 = vrot.slane %v3085, 1
        %v3087 = vadd.f32 %v3085, %v3086
        %v3088 = vadd.f32 %v2164, %v3087
        %v3089 = vmul.f32 %v3005, %v3005
        %v3090 = vmul.f32 %v3008, %v3008
        %v3091 = vmul.f32 %v3013, %v3013
        %v3092 = vmul.f32 %v3016, %v3016
        %v3093 = vmul.f32 %v3021, %v3021
        %v3094 = vmul.f32 %v3024, %v3024
        %v3095 = vmul.f32 %v3029, %v3029
        %v3096 = vmul.f32 %v3032, %v3032
        %v3097 = vmul.f32 %v3037, %v3037
        %v3098 = vmul.f32 %v3040, %v3040
        %v3099 = vmul.f32 %v3045, %v3045
        %v3100 = vmul.f32 %v3048, %v3048
        %v3101 = vmul.f32 %v3053, %v3053
        %v3102 = vmul.f32 %v3056, %v3056
        %v3103 = vmul.f32 %v3061, %v3061
        %v3104 = vmul.f32 %v3064, %v3064
        %v3105 = vadd.f32 %v3089, %v3090
        %v3106 = vadd.f32 %v3105, %v3091
        %v3107 = vadd.f32 %v3106, %v3092
        %v3108 = vadd.f32 %v3107, %v3093
        %v3109 = vadd.f32 %v3108, %v3094
        %v3110 = vadd.f32 %v3109, %v3095
        %v3111 = vadd.f32 %v3110, %v3096
        %v3112 = vadd.f32 %v3111, %v3097
        %v3113 = vadd.f32 %v3112, %v3098
        %v3114 = vadd.f32 %v3113, %v3099
        %v3115 = vadd.f32 %v3114, %v3100
        %v3116 = vadd.f32 %v3115, %v3101
        %v3117 = vadd.f32 %v3116, %v3102
        %v3118 = vadd.f32 %v3117, %v3103
        %v3119 = vadd.f32 %v3118, %v3104
        %v3120 = vrot.slane %v3119, 4
        %v3121 = vadd.f32 %v3119, %v3120
        %v3122 = vrot.slane %v3121, 2
        %v3123 = vadd.f32 %v3121, %v3122
        %v3124 = vrot.slane %v3123, 1
        %v3125 = vadd.f32 %v3123, %v3124
        %v3126 = vadd.f32 %v2202, %v3125
        %v3127 = vpack.c.bf16 %v3008, %v3005
        %v3128 = vpack.c.bf16 %v3016, %v3013
        %v3129 = vpack.c.bf16 %v3024, %v3021
        %v3130 = vpack.c.bf16 %v3032, %v3029
        %v3131 = vpack.c.bf16 %v3040, %v3037
        %v3132 = vpack.c.bf16 %v3048, %v3045
        %v3133 = vpack.c.bf16 %v3056, %v3053
        %v3134 = vpack.c.bf16 %v3064, %v3061
        %v3143 = vunpack.c.l.b16 %v3127
        %v3144 = vunpack.c.h.b16 %v3127
        %v3145 = vunpack.c.l.b16 %v3128
        %v3146 = vunpack.c.h.b16 %v3128
        %v3147 = vunpack.c.l.b16 %v3129
        %v3148 = vunpack.c.h.b16 %v3129
        %v3149 = vunpack.c.l.b16 %v3130
        %v3150 = vunpack.c.h.b16 %v3130
        %v3151 = vunpack.c.l.b16 %v3131
        %v3152 = vunpack.c.h.b16 %v3131
        %v3153 = vunpack.c.l.b16 %v3132
        %v3154 = vunpack.c.h.b16 %v3132
        %v3155 = vunpack.c.l.b16 %v3133
        %v3156 = vunpack.c.h.b16 %v3133
        %v3157 = vunpack.c.l.b16 %v3134
        %v3158 = vunpack.c.h.b16 %v3134
        %v3159 = vpack.c.b16 %v3143, %v3143
        %v3160 = vpack.c.b16 %v3144, %v3144
        %v3161 = vpack.c.b16 %v3145, %v3145
        %v3162 = vpack.c.b16 %v3146, %v3146
        %v3163 = vpack.c.b16 %v3147, %v3147
        %v3164 = vpack.c.b16 %v3148, %v3148
        %v3165 = vpack.c.b16 %v3149, %v3149
        %v3166 = vpack.c.b16 %v3150, %v3150
        %v3167 = vpack.c.b16 %v3151, %v3151
        %v3168 = vpack.c.b16 %v3152, %v3152
        %v3169 = vpack.c.b16 %v3153, %v3153
        %v3170 = vpack.c.b16 %v3154, %v3154
        %v3171 = vpack.c.b16 %v3155, %v3155
        %v3172 = vpack.c.b16 %v3156, %v3156
        %v3173 = vpack.c.b16 %v3157, %v3157
        %v3174 = vpack.c.b16 %v3158, %v3158
        %3175 = vrot.lane.b32.xlu0 %v3159, 16
        %v3176 = vpop.permute.xlu0 %3175
        %3177 = vrot.lane.b32.xlu0 %v3160, 16
        %v3178 = vpop.permute.xlu0 %3177
        %3179 = vrot.lane.b32.xlu0 %v3161, 16
        %v3180 = vpop.permute.xlu0 %3179
        %3181 = vrot.lane.b32.xlu0 %v3162, 16
        %v3182 = vpop.permute.xlu0 %3181
        %3183 = vrot.lane.b32.xlu0 %v3163, 16
        %v3184 = vpop.permute.xlu0 %3183
        %3185 = vrot.lane.b32.xlu0 %v3164, 16
        %v3186 = vpop.permute.xlu0 %3185
        %3187 = vrot.lane.b32.xlu0 %v3165, 16
        %v3188 = vpop.permute.xlu0 %3187
        %3189 = vrot.lane.b32.xlu0 %v3166, 16
        %v3190 = vpop.permute.xlu0 %3189
        %3191 = vrot.lane.b32.xlu0 %v3167, 16
        %v3192 = vpop.permute.xlu0 %3191
        %3193 = vrot.lane.b32.xlu0 %v3168, 16
        %v3194 = vpop.permute.xlu0 %3193
        %3195 = vrot.lane.b32.xlu0 %v3169, 16
        %v3196 = vpop.permute.xlu0 %3195
        %3197 = vrot.lane.b32.xlu0 %v3170, 16
        %v3198 = vpop.permute.xlu0 %3197
        %3199 = vrot.lane.b32.xlu0 %v3171, 16
        %v3200 = vpop.permute.xlu0 %3199
        %3201 = vrot.lane.b32.xlu0 %v3172, 16
        %v3202 = vpop.permute.xlu0 %3201
        %3203 = vrot.lane.b32.xlu0 %v3173, 16
        %v3204 = vpop.permute.xlu0 %3203
        %3205 = vrot.lane.b32.xlu0 %v3174, 16
        %v3206 = vpop.permute.xlu0 %3205
        %vm3223 = vcmask 191616
        %3224 = vst.msk [vmem:[%s220] sm:$0xf] %vm3223, %v3176
        %3225 = vst.msk [vmem:[%s220 + $0x4] sm:$0xf] %vm3223, %v3178
        %3226 = vst.msk [vmem:[%s220 + $0x8] sm:$0xf] %vm3223, %v3180
        %3227 = vst.msk [vmem:[%s220 + $0xc] sm:$0xf] %vm3223, %v3182
        %3228 = vst.msk [vmem:[%s220 + $0x10] sm:$0xf] %vm3223, %v3184
        %3229 = vst.msk [vmem:[%s220 + $0x14] sm:$0xf] %vm3223, %v3186
        %3230 = vst.msk [vmem:[%s220 + $0x18] sm:$0xf] %vm3223, %v3188
        %3231 = vst.msk [vmem:[%s220 + $0x1c] sm:$0xf] %vm3223, %v3190
        %3232 = vst.msk [vmem:[%s220 + $0x20] sm:$0xf] %vm3223, %v3192
        %3233 = vst.msk [vmem:[%s220 + $0x24] sm:$0xf] %vm3223, %v3194
        %3234 = vst.msk [vmem:[%s220 + $0x28] sm:$0xf] %vm3223, %v3196
        %3235 = vst.msk [vmem:[%s220 + $0x2c] sm:$0xf] %vm3223, %v3198
        %3236 = vst.msk [vmem:[%s220 + $0x30] sm:$0xf] %vm3223, %v3200
        %3237 = vst.msk [vmem:[%s220 + $0x34] sm:$0xf] %vm3223, %v3202
        %3238 = vst.msk [vmem:[%s220 + $0x38] sm:$0xf] %vm3223, %v3204
        %3239 = vst.msk [vmem:[%s220 + $0x3c] sm:$0xf] %vm3223, %v3206
        %v3240 = vld [vmem:[%s2319] sm:$0xe]
        %v3241 = vld [vmem:[%s2319 + $0x4] sm:$0xf]
        %v3242 = vld [vmem:[%s2319 + $0x8] sm:$0x1]
        %v3243 = vld [vmem:[%s2319 + $0xc] sm:$0xe]
        %v3244 = vld [vmem:[%s2319 + $0x10] sm:$0xf]
        %v3245 = vld [vmem:[%s2319 + $0x14] sm:$0x1]
        %v3246 = vld [vmem:[%s2319 + $0x18] sm:$0xe]
        %v3247 = vld [vmem:[%s2319 + $0x1c] sm:$0xf]
        %v3248 = vld [vmem:[%s2319 + $0x20] sm:$0x1]
        %v3249 = vld [vmem:[%s2319 + $0x24] sm:$0xe]
        %v3250 = vld [vmem:[%s2319 + $0x28] sm:$0xf]
        %v3251 = vld [vmem:[%s2319 + $0x2c] sm:$0x1]
        %v3252 = vld [vmem:[%s2319 + $0x30] sm:$0xe]
        %v3253 = vld [vmem:[%s2319 + $0x34] sm:$0xf]
        %v3254 = vld [vmem:[%s2319 + $0x38] sm:$0x1]
        %v3255 = vld [vmem:[%s2319 + $0x3c] sm:$0xe]
        %v3256 = vld [vmem:[%s2319 + $0x40] sm:$0xf]
        %v3257 = vld [vmem:[%s2319 + $0x44] sm:$0x1]
        %v3258 = vld [vmem:[%s2319 + $0x48] sm:$0xe]
        %v3259 = vld [vmem:[%s2319 + $0x4c] sm:$0xf]
        %v3260 = vld [vmem:[%s2319 + $0x50] sm:$0x1]
        %v3261 = vld [vmem:[%s2319 + $0x54] sm:$0xe]
        %v3262 = vld [vmem:[%s2319 + $0x58] sm:$0xf]
        %v3263 = vld [vmem:[%s2319 + $0x5c] sm:$0x1]
        %v3288 = vrot.slane %v3240, 5
        %v3289 = vrot.slane %v3288, 4
        %v3290 = vrot.slane %v3241, 5
        %v3291 = vsel %vm1467, %v3289, %v3290
        %v3292 = vrot.slane %v3290, 4
        %v3293 = vrot.slane %v3242, 5
        %v3294 = vsel %vm1467, %v3292, %v3293
        %v3295 = vrot.slane %v3243, 5
        %v3296 = vrot.slane %v3295, 4
        %v3297 = vrot.slane %v3244, 5
        %v3298 = vsel %vm1467, %v3296, %v3297
        %v3299 = vrot.slane %v3297, 4
        %v3300 = vrot.slane %v3245, 5
        %v3301 = vsel %vm1467, %v3299, %v3300
        %v3302 = vrot.slane %v3246, 5
        %v3303 = vrot.slane %v3302, 4
        %v3304 = vrot.slane %v3247, 5
        %v3305 = vsel %vm1467, %v3303, %v3304
        %v3306 = vrot.slane %v3304, 4
        %v3307 = vrot.slane %v3248, 5
        %v3308 = vsel %vm1467, %v3306, %v3307
        %v3309 = vrot.slane %v3249, 5
        %v3310 = vrot.slane %v3309, 4
        %v3311 = vrot.slane %v3250, 5
        %v3312 = vsel %vm1467, %v3310, %v3311
        %v3313 = vrot.slane %v3311, 4
        %v3314 = vrot.slane %v3251, 5
        %v3315 = vsel %vm1467, %v3313, %v3314
        %v3316 = vrot.slane %v3252, 5
        %v3317 = vrot.slane %v3316, 4
        %v3318 = vrot.slane %v3253, 5
        %v3319 = vsel %vm1467, %v3317, %v3318
        %v3320 = vrot.slane %v3318, 4
        %v3321 = vrot.slane %v3254, 5
        %v3322 = vsel %vm1467, %v3320, %v3321
        %v3323 = vrot.slane %v3255, 5
        %v3324 = vrot.slane %v3323, 4
        %v3325 = vrot.slane %v3256, 5
        %v3326 = vsel %vm1467, %v3324, %v3325
        %v3327 = vrot.slane %v3325, 4
        %v3328 = vrot.slane %v3257, 5
        %v3329 = vsel %vm1467, %v3327, %v3328
        %v3330 = vrot.slane %v3258, 5
        %v3331 = vrot.slane %v3330, 4
        %v3332 = vrot.slane %v3259, 5
        %v3333 = vsel %vm1467, %v3331, %v3332
        %v3334 = vrot.slane %v3332, 4
        %v3335 = vrot.slane %v3260, 5
        %v3336 = vsel %vm1467, %v3334, %v3335
        %v3337 = vrot.slane %v3261, 5
        %v3338 = vrot.slane %v3337, 4
        %v3339 = vrot.slane %v3262, 5
        %v3340 = vsel %vm1467, %v3338, %v3339
        %v3341 = vrot.slane %v3339, 4
        %v3342 = vrot.slane %v3263, 5
        %v3343 = vsel %vm1467, %v3341, %v3342
        %v3344 = vunpack.c.l.b16 %v3291
        %v3345 = vunpack.c.l.b16 %v3294
        %v3346 = vunpack.c.l.b16 %v3298
        %v3347 = vunpack.c.l.b16 %v3301
        %v3348 = vunpack.c.l.b16 %v3305
        %v3349 = vunpack.c.l.b16 %v3308
        %v3350 = vunpack.c.l.b16 %v3312
        %v3351 = vunpack.c.l.b16 %v3315
        %v3352 = vunpack.c.l.b16 %v3319
        %v3353 = vunpack.c.l.b16 %v3322
        %v3354 = vunpack.c.l.b16 %v3326
        %v3355 = vunpack.c.l.b16 %v3329
        %v3356 = vunpack.c.l.b16 %v3333
        %v3357 = vunpack.c.l.b16 %v3336
        %v3358 = vunpack.c.l.b16 %v3340
        %v3359 = vunpack.c.l.b16 %v3343
        %v3360 = vpack.c.b16 %v3345, %v3344
        %v3361 = vpack.c.b16 %v3347, %v3346
        %v3362 = vpack.c.b16 %v3349, %v3348
        %v3363 = vpack.c.b16 %v3351, %v3350
        %v3364 = vpack.c.b16 %v3353, %v3352
        %v3365 = vpack.c.b16 %v3355, %v3354
        %v3366 = vpack.c.b16 %v3357, %v3356
        %v3367 = vpack.c.b16 %v3359, %v3358
        %s3376 = scalar_lea.vmem [#allocation2], 768
        %v3377 = vld [vmem:[%s3376] sm:$0xf]
        %v3378 = vld [vmem:[%s3376 + $0x4] sm:$0xf]
        %v3379 = vld [vmem:[%s3376 + $0x8] sm:$0xf]
        %v3380 = vld [vmem:[%s3376 + $0xc] sm:$0xf]
        %v3381 = vld [vmem:[%s3376 + $0x10] sm:$0xf]
        %v3382 = vld [vmem:[%s3376 + $0x14] sm:$0xf]
        %v3383 = vld [vmem:[%s3376 + $0x18] sm:$0xf]
        %v3384 = vld [vmem:[%s3376 + $0x1c] sm:$0xf]
        %v3385 = vld [vmem:[%s3376 + $0x20] sm:$0xf]
        %v3386 = vld [vmem:[%s3376 + $0x24] sm:$0xf]
        %v3387 = vld [vmem:[%s3376 + $0x28] sm:$0xf]
        %v3388 = vld [vmem:[%s3376 + $0x2c] sm:$0xf]
        %v3389 = vld [vmem:[%s3376 + $0x30] sm:$0xf]
        %v3390 = vld [vmem:[%s3376 + $0x34] sm:$0xf]
        %v3391 = vld [vmem:[%s3376 + $0x38] sm:$0xf]
        %v3392 = vld [vmem:[%s3376 + $0x3c] sm:$0xf]
        %v3393 = vld [vmem:[%s3376 + $0x40] sm:$0xf]
        %v3394 = vld [vmem:[%s3376 + $0x44] sm:$0xf]
        %v3395 = vld [vmem:[%s3376 + $0x48] sm:$0xf]
        %v3396 = vld [vmem:[%s3376 + $0x4c] sm:$0xf]
        %v3397 = vld [vmem:[%s3376 + $0x50] sm:$0xf]
        %v3398 = vld [vmem:[%s3376 + $0x54] sm:$0xf]
        %v3399 = vld [vmem:[%s3376 + $0x58] sm:$0xf]
        %v3400 = vld [vmem:[%s3376 + $0x5c] sm:$0xf]
        %v3401 = vld [vmem:[%s3376 + $0x60] sm:$0xf]
        %v3402 = vld [vmem:[%s3376 + $0x64] sm:$0xf]
        %v3403 = vld [vmem:[%s3376 + $0x68] sm:$0xf]
        %v3404 = vld [vmem:[%s3376 + $0x6c] sm:$0xf]
        %v3405 = vld [vmem:[%s3376 + $0x70] sm:$0xf]
        %v3406 = vld [vmem:[%s3376 + $0x74] sm:$0xf]
        %v3407 = vld [vmem:[%s3376 + $0x78] sm:$0xf]
        %v3408 = vld [vmem:[%s3376 + $0x7c] sm:$0xf]
        %v3409 = vld [vmem:[%s3376 + $0x80] sm:$0xf]
        %v3410 = vld [vmem:[%s3376 + $0x84] sm:$0xf]
        %v3411 = vld [vmem:[%s3376 + $0x88] sm:$0xf]
        %v3412 = vld [vmem:[%s3376 + $0x8c] sm:$0xf]
        %v3413 = vld [vmem:[%s3376 + $0x90] sm:$0xf]
        %v3414 = vld [vmem:[%s3376 + $0x94] sm:$0xf]
        %v3415 = vld [vmem:[%s3376 + $0x98] sm:$0xf]
        %v3416 = vld [vmem:[%s3376 + $0x9c] sm:$0xf]
        %v3417 = vld [vmem:[%s3376 + $0xa0] sm:$0xf]
        %v3418 = vld [vmem:[%s3376 + $0xa4] sm:$0xf]
        %v3419 = vld [vmem:[%s3376 + $0xa8] sm:$0xf]
        %v3420 = vld [vmem:[%s3376 + $0xac] sm:$0xf]
        %v3421 = vld [vmem:[%s3376 + $0xb0] sm:$0xf]
        %v3422 = vld [vmem:[%s3376 + $0xb4] sm:$0xf]
        %v3423 = vld [vmem:[%s3376 + $0xb8] sm:$0xf]
        %v3424 = vld [vmem:[%s3376 + $0xbc] sm:$0xf]
        %v3425 = vld [vmem:[%s3376 + $0xc0] sm:$0xf]
        %v3426 = vld [vmem:[%s3376 + $0xc4] sm:$0xf]
        %v3427 = vld [vmem:[%s3376 + $0xc8] sm:$0xf]
        %v3428 = vld [vmem:[%s3376 + $0xcc] sm:$0xf]
        %v3429 = vld [vmem:[%s3376 + $0xd0] sm:$0xf]
        %v3430 = vld [vmem:[%s3376 + $0xd4] sm:$0xf]
        %v3431 = vld [vmem:[%s3376 + $0xd8] sm:$0xf]
        %v3432 = vld [vmem:[%s3376 + $0xdc] sm:$0xf]
        %v3433 = vld [vmem:[%s3376 + $0xe0] sm:$0xf]
        %v3434 = vld [vmem:[%s3376 + $0xe4] sm:$0xf]
        %v3435 = vld [vmem:[%s3376 + $0xe8] sm:$0xf]
        %v3436 = vld [vmem:[%s3376 + $0xec] sm:$0xf]
        %v3437 = vld [vmem:[%s3376 + $0xf0] sm:$0xf]
        %v3438 = vld [vmem:[%s3376 + $0xf4] sm:$0xf]
        %v3439 = vld [vmem:[%s3376 + $0xf8] sm:$0xf]
        %v3440 = vld [vmem:[%s3376 + $0xfc] sm:$0xf]
        %v3505 = vunpack.c.l.b16 %v3377
        %v3506 = vunpack.c.l.b16 %v3378
        %v3507 = vunpack.c.l.b16 %v3379
        %v3508 = vunpack.c.l.b16 %v3380
        %v3509 = vunpack.c.l.b16 %v3381
        %v3510 = vunpack.c.l.b16 %v3382
        %v3511 = vunpack.c.l.b16 %v3383
        %v3512 = vunpack.c.l.b16 %v3384
        %v3513 = vunpack.c.l.b16 %v3385
        %v3514 = vunpack.c.l.b16 %v3386
        %v3515 = vunpack.c.l.b16 %v3387
        %v3516 = vunpack.c.l.b16 %v3388
        %v3517 = vunpack.c.l.b16 %v3389
        %v3518 = vunpack.c.l.b16 %v3390
        %v3519 = vunpack.c.l.b16 %v3391
        %v3520 = vunpack.c.l.b16 %v3392
        %v3521 = vunpack.c.l.b16 %v3393
        %v3522 = vunpack.c.l.b16 %v3394
        %v3523 = vunpack.c.l.b16 %v3395
        %v3524 = vunpack.c.l.b16 %v3396
        %v3525 = vunpack.c.l.b16 %v3397
        %v3526 = vunpack.c.l.b16 %v3398
        %v3527 = vunpack.c.l.b16 %v3399
        %v3528 = vunpack.c.l.b16 %v3400
        %v3529 = vunpack.c.l.b16 %v3401
        %v3530 = vunpack.c.l.b16 %v3402
        %v3531 = vunpack.c.l.b16 %v3403
        %v3532 = vunpack.c.l.b16 %v3404
        %v3533 = vunpack.c.l.b16 %v3405
        %v3534 = vunpack.c.l.b16 %v3406
        %v3535 = vunpack.c.l.b16 %v3407
        %v3536 = vunpack.c.l.b16 %v3408
        %v3537 = vunpack.c.l.b16 %v3409
        %v3538 = vunpack.c.l.b16 %v3410
        %v3539 = vunpack.c.l.b16 %v3411
        %v3540 = vunpack.c.l.b16 %v3412
        %v3541 = vunpack.c.l.b16 %v3413
        %v3542 = vunpack.c.l.b16 %v3414
        %v3543 = vunpack.c.l.b16 %v3415
        %v3544 = vunpack.c.l.b16 %v3416
        %v3545 = vunpack.c.l.b16 %v3417
        %v3546 = vunpack.c.l.b16 %v3418
        %v3547 = vunpack.c.l.b16 %v3419
        %v3548 = vunpack.c.l.b16 %v3420
        %v3549 = vunpack.c.l.b16 %v3421
        %v3550 = vunpack.c.l.b16 %v3422
        %v3551 = vunpack.c.l.b16 %v3423
        %v3552 = vunpack.c.l.b16 %v3424
        %v3553 = vunpack.c.l.b16 %v3425
        %v3554 = vunpack.c.l.b16 %v3426
        %v3555 = vunpack.c.l.b16 %v3427
        %v3556 = vunpack.c.l.b16 %v3428
        %v3557 = vunpack.c.l.b16 %v3429
        %v3558 = vunpack.c.l.b16 %v3430
        %v3559 = vunpack.c.l.b16 %v3431
        %v3560 = vunpack.c.l.b16 %v3432
        %v3561 = vunpack.c.l.b16 %v3433
        %v3562 = vunpack.c.l.b16 %v3434
        %v3563 = vunpack.c.l.b16 %v3435
        %v3564 = vunpack.c.l.b16 %v3436
        %v3565 = vunpack.c.l.b16 %v3437
        %v3566 = vunpack.c.l.b16 %v3438
        %v3567 = vunpack.c.l.b16 %v3439
        %v3568 = vunpack.c.l.b16 %v3440
        %v3569 = vpack.c.b16 %v3506, %v3505
        %v3570 = vpack.c.b16 %v3508, %v3507
        %v3571 = vpack.c.b16 %v3510, %v3509
        %v3572 = vpack.c.b16 %v3512, %v3511
        %v3573 = vpack.c.b16 %v3514, %v3513
        %v3574 = vpack.c.b16 %v3516, %v3515
        %v3575 = vpack.c.b16 %v3518, %v3517
        %v3576 = vpack.c.b16 %v3520, %v3519
        %v3577 = vpack.c.b16 %v3522, %v3521
        %v3578 = vpack.c.b16 %v3524, %v3523
        %v3579 = vpack.c.b16 %v3526, %v3525
        %v3580 = vpack.c.b16 %v3528, %v3527
        %v3581 = vpack.c.b16 %v3530, %v3529
        %v3582 = vpack.c.b16 %v3532, %v3531
        %v3583 = vpack.c.b16 %v3534, %v3533
        %v3584 = vpack.c.b16 %v3536, %v3535
        %v3585 = vpack.c.b16 %v3538, %v3537
        %v3586 = vpack.c.b16 %v3540, %v3539
        %v3587 = vpack.c.b16 %v3542, %v3541
        %v3588 = vpack.c.b16 %v3544, %v3543
        %v3589 = vpack.c.b16 %v3546, %v3545
        %v3590 = vpack.c.b16 %v3548, %v3547
        %v3591 = vpack.c.b16 %v3550, %v3549
        %v3592 = vpack.c.b16 %v3552, %v3551
        %v3593 = vpack.c.b16 %v3554, %v3553
        %v3594 = vpack.c.b16 %v3556, %v3555
        %v3595 = vpack.c.b16 %v3558, %v3557
        %v3596 = vpack.c.b16 %v3560, %v3559
        %v3597 = vpack.c.b16 %v3562, %v3561
        %v3598 = vpack.c.b16 %v3564, %v3563
        %v3599 = vpack.c.b16 %v3566, %v3565
        %v3600 = vpack.c.b16 %v3568, %v3567
        %3633 = vmatprep.subr.bf16.mxu0 0
        %3634 = vmatpush1.bf16.msra.mxu0 %v3576
        %3635 = vmatprep.subr.bf16.mxu0 0
        %3636 = vmatpush1.bf16.msra.mxu0 %v3575
        %3637 = vmatprep.subr.bf16.mxu0 0
        %3638 = vmatpush1.bf16.msra.mxu0 %v3574
        %3639 = vmatprep.subr.bf16.mxu0 0
        %3640 = vmatpush1.bf16.msra.mxu0 %v3573
        %3641 = vmatprep.subr.bf16.mxu0 0
        %3642 = vmatpush1.bf16.msra.mxu0 %v3572
        %3643 = vmatprep.subr.bf16.mxu0 0
        %3644 = vmatpush1.bf16.msra.mxu0 %v3571
        %3645 = vmatprep.subr.bf16.mxu0 0
        %3646 = vmatpush1.bf16.msra.mxu0 %v3570
        %3647 = vmatprep.subr.bf16.mxu0 0
        %3648 = vmatpush1.bf16.msra.mxu0 %v3569
        %3649 = vmatprep.subr.bf16.mxu0 0
        %3650 = vmatpush2.bf16.msra.mxu0 %v3584
        %3651 = vmatprep.subr.bf16.mxu0 0
        %3652 = vmatpush2.bf16.msra.mxu0 %v3583
        %3653 = vmatprep.subr.bf16.mxu0 0
        %3654 = vmatpush2.bf16.msra.mxu0 %v3582
        %3655 = vmatprep.subr.bf16.mxu0 0
        %3656 = vmatpush2.bf16.msra.mxu0 %v3581
        %3657 = vmatprep.subr.bf16.mxu0 0
        %3658 = vmatpush2.bf16.msra.mxu0 %v3580
        %3659 = vmatprep.subr.bf16.mxu0 0
        %3660 = vmatpush2.bf16.msra.mxu0 %v3579
        %3661 = vmatprep.subr.bf16.mxu0 0
        %3662 = vmatpush2.bf16.msra.mxu0 %v3578
        %3663 = vmatprep.subr.bf16.mxu0 0
        %3664 = vmatpush2.bf16.msra.mxu0 %v3577
        %3665 = vmatprep.mubr.bf16.mxu0 %v1676
        %3666 = vmatmul.mubr.bf16.gmra.mxu0 %v810
        %v3667 = vpop.f32.mrf.mxu0
        %v3668 = vadd.f32 0.0, %v3667
        %v3669 = vpop.f32.mrf.mxu0
        %v3670 = vpop.f32.mrf.mxu0
        %v3671 = vadd.f32 0.0, %v3670
        %v3672 = vpop.f32.mrf.mxu0
        %3673 = vmatprep.mubr.bf16.mxu0 %v1677
        %3674 = vmatmul.mubr.bf16.gmra.mxu0 %v811
        %v3675 = vpop.f32.mrf.mxu0
        %v3676 = vadd.f32 0.0, %v3675
        %v3677 = vpop.f32.mrf.mxu0
        %v3678 = vpop.f32.mrf.mxu0
        %v3679 = vadd.f32 0.0, %v3678
        %v3680 = vpop.f32.mrf.mxu0
        %3681 = vmatprep.mubr.bf16.mxu0 %v1678
        %3682 = vmatmul.mubr.bf16.gmra.mxu0 %v812
        %v3683 = vpop.f32.mrf.mxu0
        %v3684 = vadd.f32 0.0, %v3683
        %v3685 = vpop.f32.mrf.mxu0
        %v3686 = vpop.f32.mrf.mxu0
        %v3687 = vadd.f32 0.0, %v3686
        %v3688 = vpop.f32.mrf.mxu0
        %3689 = vmatprep.mubr.bf16.mxu0 %v1679
        %3690 = vmatmul.mubr.bf16.gmra.mxu0 %v813
        %v3691 = vpop.f32.mrf.mxu0
        %v3692 = vadd.f32 0.0, %v3691
        %v3693 = vpop.f32.mrf.mxu0
        %v3694 = vpop.f32.mrf.mxu0
        %v3695 = vadd.f32 0.0, %v3694
        %v3696 = vpop.f32.mrf.mxu0
        %3697 = vmatprep.mubr.bf16.mxu0 %v1680
        %3698 = vmatmul.mubr.bf16.gmra.mxu0 %v814
        %v3699 = vpop.f32.mrf.mxu0
        %v3700 = vadd.f32 0.0, %v3699
        %v3701 = vpop.f32.mrf.mxu0
        %v3702 = vpop.f32.mrf.mxu0
        %v3703 = vadd.f32 0.0, %v3702
        %v3704 = vpop.f32.mrf.mxu0
        %3705 = vmatprep.mubr.bf16.mxu0 %v1681
        %3706 = vmatmul.mubr.bf16.gmra.mxu0 %v815
        %v3707 = vpop.f32.mrf.mxu0
        %v3708 = vadd.f32 0.0, %v3707
        %v3709 = vpop.f32.mrf.mxu0
        %v3710 = vpop.f32.mrf.mxu0
        %v3711 = vadd.f32 0.0, %v3710
        %v3712 = vpop.f32.mrf.mxu0
        %3713 = vmatprep.mubr.bf16.mxu0 %v1682
        %3714 = vmatmul.mubr.bf16.gmra.mxu0 %v816
        %v3715 = vpop.f32.mrf.mxu0
        %v3716 = vadd.f32 0.0, %v3715
        %v3717 = vpop.f32.mrf.mxu0
        %v3718 = vpop.f32.mrf.mxu0
        %v3719 = vadd.f32 0.0, %v3718
        %v3720 = vpop.f32.mrf.mxu0
        %3721 = vmatprep.mubr.bf16.mxu0 %v1683
        %3722 = vmatmul.mubr.bf16.gmra.mxu0 %v817
        %v3723 = vpop.f32.mrf.mxu0
        %v3724 = vadd.f32 0.0, %v3723
        %v3725 = vpop.f32.mrf.mxu0
        %v3726 = vpop.f32.mrf.mxu0
        %v3727 = vadd.f32 0.0, %v3726
        %v3728 = vpop.f32.mrf.mxu0
        %3729 = vdwg.mxu0
        %3730 = vmatprep.subr.bf16.mxu0 0
        %3731 = vmatpush1.bf16.msra.mxu0 %v3592
        %3732 = vmatprep.subr.bf16.mxu0 0
        %3733 = vmatpush1.bf16.msra.mxu0 %v3591
        %3734 = vmatprep.subr.bf16.mxu0 0
        %3735 = vmatpush1.bf16.msra.mxu0 %v3590
        %3736 = vmatprep.subr.bf16.mxu0 0
        %3737 = vmatpush1.bf16.msra.mxu0 %v3589
        %3738 = vmatprep.subr.bf16.mxu0 0
        %3739 = vmatpush1.bf16.msra.mxu0 %v3588
        %3740 = vmatprep.subr.bf16.mxu0 0
        %3741 = vmatpush1.bf16.msra.mxu0 %v3587
        %3742 = vmatprep.subr.bf16.mxu0 0
        %3743 = vmatpush1.bf16.msra.mxu0 %v3586
        %3744 = vmatprep.subr.bf16.mxu0 0
        %3745 = vmatpush1.bf16.msra.mxu0 %v3585
        %3746 = vmatprep.subr.bf16.mxu0 0
        %3747 = vmatpush2.bf16.msra.mxu0 %v3600
        %3748 = vmatprep.subr.bf16.mxu0 0
        %3749 = vmatpush2.bf16.msra.mxu0 %v3599
        %3750 = vmatprep.subr.bf16.mxu0 0
        %3751 = vmatpush2.bf16.msra.mxu0 %v3598
        %3752 = vmatprep.subr.bf16.mxu0 0
        %3753 = vmatpush2.bf16.msra.mxu0 %v3597
        %3754 = vmatprep.subr.bf16.mxu0 0
        %3755 = vmatpush2.bf16.msra.mxu0 %v3596
        %3756 = vmatprep.subr.bf16.mxu0 0
        %3757 = vmatpush2.bf16.msra.mxu0 %v3595
        %3758 = vmatprep.subr.bf16.mxu0 0
        %3759 = vmatpush2.bf16.msra.mxu0 %v3594
        %3760 = vmatprep.subr.bf16.mxu0 0
        %3761 = vmatpush2.bf16.msra.mxu0 %v3593
        %3762 = vmatprep.mubr.bf16.mxu0 %v3360
        %3763 = vmatmul.mubr.bf16.gmra.mxu0 %v2600
        %v3764 = vpop.f32.mrf.mxu0
        %v3765 = vadd.f32 %v3668, %v3764
        %v3766 = vpop.f32.mrf.mxu0
        %v3767 = vpop.f32.mrf.mxu0
        %v3768 = vadd.f32 %v3671, %v3767
        %v3769 = vpop.f32.mrf.mxu0
        %3770 = vmatprep.mubr.bf16.mxu0 %v3361
        %3771 = vmatmul.mubr.bf16.gmra.mxu0 %v2601
        %v3772 = vpop.f32.mrf.mxu0
        %v3773 = vadd.f32 %v3676, %v3772
        %v3774 = vpop.f32.mrf.mxu0
        %v3775 = vpop.f32.mrf.mxu0
        %v3776 = vadd.f32 %v3679, %v3775
        %v3777 = vpop.f32.mrf.mxu0
        %3778 = vmatprep.mubr.bf16.mxu0 %v3362
        %3779 = vmatmul.mubr.bf16.gmra.mxu0 %v2602
        %v3780 = vpop.f32.mrf.mxu0
        %v3781 = vadd.f32 %v3684, %v3780
        %v3782 = vpop.f32.mrf.mxu0
        %v3783 = vpop.f32.mrf.mxu0
        %v3784 = vadd.f32 %v3687, %v3783
        %v3785 = vpop.f32.mrf.mxu0
        %3786 = vmatprep.mubr.bf16.mxu0 %v3363
        %3787 = vmatmul.mubr.bf16.gmra.mxu0 %v2603
        %v3788 = vpop.f32.mrf.mxu0
        %v3789 = vadd.f32 %v3692, %v3788
        %v3790 = vpop.f32.mrf.mxu0
        %v3791 = vpop.f32.mrf.mxu0
        %v3792 = vadd.f32 %v3695, %v3791
        %v3793 = vpop.f32.mrf.mxu0
        %3794 = vmatprep.mubr.bf16.mxu0 %v3364
        %3795 = vmatmul.mubr.bf16.gmra.mxu0 %v2604
        %v3796 = vpop.f32.mrf.mxu0
        %v3797 = vadd.f32 %v3700, %v3796
        %v3798 = vpop.f32.mrf.mxu0
        %v3799 = vpop.f32.mrf.mxu0
        %v3800 = vadd.f32 %v3703, %v3799
        %v3801 = vpop.f32.mrf.mxu0
        %3802 = vmatprep.mubr.bf16.mxu0 %v3365
        %3803 = vmatmul.mubr.bf16.gmra.mxu0 %v2605
        %v3804 = vpop.f32.mrf.mxu0
        %v3805 = vadd.f32 %v3708, %v3804
        %v3806 = vpop.f32.mrf.mxu0
        %v3807 = vpop.f32.mrf.mxu0
        %v3808 = vadd.f32 %v3711, %v3807
        %v3809 = vpop.f32.mrf.mxu0
        %3810 = vmatprep.mubr.bf16.mxu0 %v3366
        %3811 = vmatmul.mubr.bf16.gmra.mxu0 %v2606
        %v3812 = vpop.f32.mrf.mxu0
        %v3813 = vadd.f32 %v3716, %v3812
        %v3814 = vpop.f32.mrf.mxu0
        %v3815 = vpop.f32.mrf.mxu0
        %v3816 = vadd.f32 %v3719, %v3815
        %v3817 = vpop.f32.mrf.mxu0
        %3818 = vmatprep.mubr.bf16.mxu0 %v3367
        %3819 = vmatmul.mubr.bf16.gmra.mxu0 %v2607
        %v3820 = vpop.f32.mrf.mxu0
        %v3821 = vadd.f32 %v3724, %v3820
        %v3822 = vpop.f32.mrf.mxu0
        %v3823 = vpop.f32.mrf.mxu0
        %v3824 = vadd.f32 %v3727, %v3823
        %v3825 = vpop.f32.mrf.mxu0
        %3826 = vdwg.mxu0
        %v3827 = vadd.f32 %v3765, %v3768
        %v3828 = vadd.f32 %v3827, %v3773
        %v3829 = vadd.f32 %v3828, %v3776
        %v3830 = vadd.f32 %v3829, %v3781
        %v3831 = vadd.f32 %v3830, %v3784
        %v3832 = vadd.f32 %v3831, %v3789
        %v3833 = vadd.f32 %v3832, %v3792
        %v3834 = vadd.f32 %v3833, %v3797
        %v3835 = vadd.f32 %v3834, %v3800
        %v3836 = vadd.f32 %v3835, %v3805
        %v3837 = vadd.f32 %v3836, %v3808
        %v3838 = vadd.f32 %v3837, %v3813
        %v3839 = vadd.f32 %v3838, %v3816
        %v3840 = vadd.f32 %v3839, %v3821
        %v3841 = vadd.f32 %v3840, %v3824
        %v3842 = vrot.slane %v3841, 4
        %v3843 = vadd.f32 %v3841, %v3842
        %v3844 = vrot.slane %v3843, 2
        %v3845 = vadd.f32 %v3843, %v3844
        %v3846 = vrot.slane %v3845, 1
        %v3847 = vadd.f32 %v3845, %v3846
        %v3848 = vadd.f32 %v3088, %v3847
        %v3849 = vmul.f32 %v3765, %v3765
        %v3850 = vmul.f32 %v3768, %v3768
        %v3851 = vmul.f32 %v3773, %v3773
        %v3852 = vmul.f32 %v3776, %v3776
        %v3853 = vmul.f32 %v3781, %v3781
        %v3854 = vmul.f32 %v3784, %v3784
        %v3855 = vmul.f32 %v3789, %v3789
        %v3856 = vmul.f32 %v3792, %v3792
        %v3857 = vmul.f32 %v3797, %v3797
        %v3858 = vmul.f32 %v3800, %v3800
        %v3859 = vmul.f32 %v3805, %v3805
        %v3860 = vmul.f32 %v3808, %v3808
        %v3861 = vmul.f32 %v3813, %v3813
        %v3862 = vmul.f32 %v3816, %v3816
        %v3863 = vmul.f32 %v3821, %v3821
        %v3864 = vmul.f32 %v3824, %v3824
        %v3865 = vadd.f32 %v3849, %v3850
        %v3866 = vadd.f32 %v3865, %v3851
        %v3867 = vadd.f32 %v3866, %v3852
        %v3868 = vadd.f32 %v3867, %v3853
        %v3869 = vadd.f32 %v3868, %v3854
        %v3870 = vadd.f32 %v3869, %v3855
        %v3871 = vadd.f32 %v3870, %v3856
        %v3872 = vadd.f32 %v3871, %v3857
        %v3873 = vadd.f32 %v3872, %v3858
        %v3874 = vadd.f32 %v3873, %v3859
        %v3875 = vadd.f32 %v3874, %v3860
        %v3876 = vadd.f32 %v3875, %v3861
        %v3877 = vadd.f32 %v3876, %v3862
        %v3878 = vadd.f32 %v3877, %v3863
        %v3879 = vadd.f32 %v3878, %v3864
        %v3880 = vrot.slane %v3879, 4
        %v3881 = vadd.f32 %v3879, %v3880
        %v3882 = vrot.slane %v3881, 2
        %v3883 = vadd.f32 %v3881, %v3882
        %v3884 = vrot.slane %v3883, 1
        %v3885 = vadd.f32 %v3883, %v3884
        %v3886 = vadd.f32 %v3126, %v3885
        %v3887 = vpack.c.bf16 %v3768, %v3765
        %v3888 = vpack.c.bf16 %v3776, %v3773
        %v3889 = vpack.c.bf16 %v3784, %v3781
        %v3890 = vpack.c.bf16 %v3792, %v3789
        %v3891 = vpack.c.bf16 %v3800, %v3797
        %v3892 = vpack.c.bf16 %v3808, %v3805
        %v3893 = vpack.c.bf16 %v3816, %v3813
        %v3894 = vpack.c.bf16 %v3824, %v3821
        %v3903 = vunpack.c.l.b16 %v3887
        %v3904 = vunpack.c.h.b16 %v3887
        %v3905 = vunpack.c.l.b16 %v3888
        %v3906 = vunpack.c.h.b16 %v3888
        %v3907 = vunpack.c.l.b16 %v3889
        %v3908 = vunpack.c.h.b16 %v3889
        %v3909 = vunpack.c.l.b16 %v3890
        %v3910 = vunpack.c.h.b16 %v3890
        %v3911 = vunpack.c.l.b16 %v3891
        %v3912 = vunpack.c.h.b16 %v3891
        %v3913 = vunpack.c.l.b16 %v3892
        %v3914 = vunpack.c.h.b16 %v3892
        %v3915 = vunpack.c.l.b16 %v3893
        %v3916 = vunpack.c.h.b16 %v3893
        %v3917 = vunpack.c.l.b16 %v3894
        %v3918 = vunpack.c.h.b16 %v3894
        %v3919 = vpack.c.b16 %v3903, %v3903
        %v3920 = vpack.c.b16 %v3904, %v3904
        %v3921 = vpack.c.b16 %v3905, %v3905
        %v3922 = vpack.c.b16 %v3906, %v3906
        %v3923 = vpack.c.b16 %v3907, %v3907
        %v3924 = vpack.c.b16 %v3908, %v3908
        %v3925 = vpack.c.b16 %v3909, %v3909
        %v3926 = vpack.c.b16 %v3910, %v3910
        %v3927 = vpack.c.b16 %v3911, %v3911
        %v3928 = vpack.c.b16 %v3912, %v3912
        %v3929 = vpack.c.b16 %v3913, %v3913
        %v3930 = vpack.c.b16 %v3914, %v3914
        %v3931 = vpack.c.b16 %v3915, %v3915
        %v3932 = vpack.c.b16 %v3916, %v3916
        %v3933 = vpack.c.b16 %v3917, %v3917
        %v3934 = vpack.c.b16 %v3918, %v3918
        %3935 = vrot.lane.b32.xlu0 %v3919, 24
        %v3936 = vpop.permute.xlu0 %3935
        %3937 = vrot.lane.b32.xlu0 %v3920, 24
        %v3938 = vpop.permute.xlu0 %3937
        %3939 = vrot.lane.b32.xlu0 %v3921, 24
        %v3940 = vpop.permute.xlu0 %3939
        %3941 = vrot.lane.b32.xlu0 %v3922, 24
        %v3942 = vpop.permute.xlu0 %3941
        %3943 = vrot.lane.b32.xlu0 %v3923, 24
        %v3944 = vpop.permute.xlu0 %3943
        %3945 = vrot.lane.b32.xlu0 %v3924, 24
        %v3946 = vpop.permute.xlu0 %3945
        %3947 = vrot.lane.b32.xlu0 %v3925, 24
        %v3948 = vpop.permute.xlu0 %3947
        %3949 = vrot.lane.b32.xlu0 %v3926, 24
        %v3950 = vpop.permute.xlu0 %3949
        %3951 = vrot.lane.b32.xlu0 %v3927, 24
        %v3952 = vpop.permute.xlu0 %3951
        %3953 = vrot.lane.b32.xlu0 %v3928, 24
        %v3954 = vpop.permute.xlu0 %3953
        %3955 = vrot.lane.b32.xlu0 %v3929, 24
        %v3956 = vpop.permute.xlu0 %3955
        %3957 = vrot.lane.b32.xlu0 %v3930, 24
        %v3958 = vpop.permute.xlu0 %3957
        %3959 = vrot.lane.b32.xlu0 %v3931, 24
        %v3960 = vpop.permute.xlu0 %3959
        %3961 = vrot.lane.b32.xlu0 %v3932, 24
        %v3962 = vpop.permute.xlu0 %3961
        %3963 = vrot.lane.b32.xlu0 %v3933, 24
        %v3964 = vpop.permute.xlu0 %3963
        %3965 = vrot.lane.b32.xlu0 %v3934, 24
        %v3966 = vpop.permute.xlu0 %3965
        %vm3983 = vcmask 257216
        %3984 = vst.msk [vmem:[%s220] sm:$0xf] %vm3983, %v3936
        %3985 = vst.msk [vmem:[%s220 + $0x4] sm:$0xf] %vm3983, %v3938
        %3986 = vst.msk [vmem:[%s220 + $0x8] sm:$0xf] %vm3983, %v3940
        %3987 = vst.msk [vmem:[%s220 + $0xc] sm:$0xf] %vm3983, %v3942
        %3988 = vst.msk [vmem:[%s220 + $0x10] sm:$0xf] %vm3983, %v3944
        %3989 = vst.msk [vmem:[%s220 + $0x14] sm:$0xf] %vm3983, %v3946
        %3990 = vst.msk [vmem:[%s220 + $0x18] sm:$0xf] %vm3983, %v3948
        %3991 = vst.msk [vmem:[%s220 + $0x1c] sm:$0xf] %vm3983, %v3950
        %3992 = vst.msk [vmem:[%s220 + $0x20] sm:$0xf] %vm3983, %v3952
        %3993 = vst.msk [vmem:[%s220 + $0x24] sm:$0xf] %vm3983, %v3954
        %3994 = vst.msk [vmem:[%s220 + $0x28] sm:$0xf] %vm3983, %v3956
        %3995 = vst.msk [vmem:[%s220 + $0x2c] sm:$0xf] %vm3983, %v3958
        %3996 = vst.msk [vmem:[%s220 + $0x30] sm:$0xf] %vm3983, %v3960
        %3997 = vst.msk [vmem:[%s220 + $0x34] sm:$0xf] %vm3983, %v3962
        %3998 = vst.msk [vmem:[%s220 + $0x38] sm:$0xf] %vm3983, %v3964
        %3999 = vst.msk [vmem:[%s220 + $0x3c] sm:$0xf] %vm3983, %v3966
        %4000 = vst [vmem:[%s206] sm:$0x1] %v3848
        %4001 = vst [vmem:[%s206 + $0x1] sm:$0x1] %v3886
        %s4002 = smul.u32 16, %s24
        %p4003 = scmp.lt.s32.totalorder %s23, 1
        %s4004 = scalar_select %p4003, %s23, 1
        %p4005 = scmp.lt.s32.totalorder %s4002, 31
        %s4006 = scalar_select %p4005, %s4002, 31
        %s4007 = smul.addr %s4004, 32
        %s4008 = sadd.s32 %s4006, %s4007
        %s4009 = smul.addr %s4008, 4
        %s4010 = scalar_lea.vmem %s2, %s4009
        %s4011 = sand.u32 %s116, 1
        %s4012 = scalar_lea.sflag [#allocation4], %s4011
        %s4013 = sand.u32 %s116, 1
        %s4014 = smul.addr %s4013, 2
        %s4015 = scalar_lea.vmem [#allocation5], %s4014
        // Predicated region
        $region33: #{tpu_custom_call.1} parent=27 // pred_check
          %p4016 = pneg %p98
        $region34: #{tpu_custom_call.1} parent=27 // pred_check_branch
          %4018 = sbr.rel (%p4016) target = $region36
        $region35: #{tpu_custom_call.1} parent=27 // pred_region
          %s4019 = smul.u32 16, %s24
        $region36: #{tpu_custom_call.1} parent=27 // pred_fallthru
          _
        // Predicated region
        $region37: #{tpu_custom_call.1} parent=27 // pred_check
          %p4020 = pneg %p126
        $region38: #{tpu_custom_call.1} parent=27 // pred_check_branch
          %4022 = sbr.rel (%p4020) target = $region40
        $region39: #{tpu_custom_call.1} parent=27 // pred_region
          %s4024 = ssub.s32 32, 32
          %4025 = vsyncadd %s4012, %s4024
          %s4026 = smul.addr %s23, 2
          %s4027 = sadd.s32 %s24, %s4026
          %s4028 = smul.addr %s4027, 32
          %s4029 = scalar_lea.hbm %s3, %s4028
          %s4031 = sshll.u32 %s4015, 4
          %s4032 = int_to_ptr.vmem [resolvable:$true] %s4031
          %4034 = dma.vmem_to_hbm [thread:$0]  %s4032, 32, %s4029, %s4012
        $region40: #{tpu_custom_call.1} parent=27 // pred_fallthru
          _
      $region28: #{tpu_custom_call.1} parent=5 // pred_fallthru
        _
      %p4035 = scmp.le.s32.totalorder 2, %s14
      // Predicated region
      $region41: #{tpu_custom_call.1} parent=5 // pred_check
        %p4036 = pneg %p4035
      $region42: #{tpu_custom_call.1} parent=5 // pred_check_branch
        %4038 = sbr.rel (%p4036) target = $region44
      $region43: #{tpu_custom_call.1} parent=5 // pred_region
        %s4039 = ssub.s32 %s14, 2
        // Predicated region
        $region45: #{tpu_custom_call.1} parent=43 // pred_check
          %p4040 = pneg %p104
        $region46: #{tpu_custom_call.1} parent=43 // pred_check_branch
          %4042 = sbr.rel (%p4040) target = $region48
        $region47: #{tpu_custom_call.1} parent=43 // pred_region
          %s4043 = smul.u32 16, %s26
          %p4044 = scmp.lt.s32.totalorder %s25, 1
          %s4045 = scalar_select %p4044, %s25, 1
          %p4046 = scmp.lt.s32.totalorder %s4043, 31
          %s4047 = scalar_select %p4046, %s4043, 31
          %s4048 = smul.addr %s4045, 32
          %s4049 = sadd.s32 %s4047, %s4048
          %s4050 = smul.addr %s4049, 4
          %s4051 = scalar_lea.vmem %s2, %s4050
        $region48: #{tpu_custom_call.1} parent=43 // pred_fallthru
          _
        // Predicated region
        $region49: #{tpu_custom_call.1} parent=43 // pred_check
          %p4052 = pneg %p132
        $region50: #{tpu_custom_call.1} parent=43 // pred_check_branch
          %4054 = sbr.rel (%p4052) target = $region52
        $region51: #{tpu_custom_call.1} parent=43 // pred_region
          %s4055 = sand.u32 %s117, 1
          %s4056 = scalar_lea.sflag [#allocation4], %s4055
          %s4057 = sand.u32 %s117, 1
          %s4058 = smul.addr %s4057, 2
          %s4059 = scalar_lea.vmem [#allocation5], %s4058
          %4060 = dma.done %s4056, 32
        $region52: #{tpu_custom_call.1} parent=43 // pred_fallthru
          _
      $region44: #{tpu_custom_call.1} parent=5 // pred_fallthru
        _
    $region6: #{tpu_custom_call.1} parent=1 // loop_footer
      %s18 = sadd.s32 1, %s14
    $region7: #{tpu_custom_call.1} parent=1 // loop_footer_branch
      %13 = sbr.rel target = $region3
    $region8: #{tpu_custom_call.1} parent=1 // loop_exit
      _
    %4061 = vsyncpa [#allocation3], 1
    %s4062 = scalar_lea.sflag [#allocation3], 1
    %4063 = vsyncpa %s4062, 1
    %4064 = vsyncpa [#allocation4], 1
    %s4065 = scalar_lea.sflag [#allocation4], 1
    %4066 = vsyncpa %s4065, 1

</llo_original>
